<compile_context>
chip_gen: v6e
topology: v6e:2x2x1
jax: 0.10.0
libtpu: 0.0.40
codegen_flags: <defaults>
</compile_context>

<pallas_src>
import functools

import jax
import jax.numpy as jnp
from jax import lax
from jax.experimental import pallas as pl
from jax.experimental.pallas import tpu as pltpu


def _leaky_relu(x, slope=0.01):
    return jnp.where(x > 0, x, slope * x)


def _sigmoid(x):
    # exact sigmoid via tanh: runs on the EUP slot, no VALU divide
    return 0.5 * jnp.tanh(0.5 * x) + 0.5


def _log_sigmoid(x):
    # numerically stable log(sigmoid(x)) = -softplus(-x); never -inf for finite x
    return jnp.where(
        x >= 0,
        -jnp.log(1.0 + jnp.exp(-x)),
        x - jnp.log(1.0 + jnp.exp(x)),
    )


def decoder_kernel(
    wih0_ref,     # (V+1, 4H) embedding folded into layer-0 input->gates weights
    whh0_ref,     # (H, 4H)   layer-0 hidden->gates weights
    wcat_ref,     # (L, 2H, 4H) fused [ih; hh] weights for layers >= 1 (slot 0 unused)
    b_ref,        # (L, 1, 4H) pre-summed bias (b_ih + b_hh)
    wfc_ref,      # (C, H)     fc (conditionals -> hidden), transposed
    bfc_ref,      # (1, H)
    wfc2_ref,     # (H, H)     fc2, transposed
    bfc2_ref,     # (1, H)
    wfc3_ref,     # (H, Opad)  fc3, transposed, zero-padded to 128 lanes
    bfc3_ref,     # (1, Opad)
    cond_ref,     # (B, C)     conditionals (batch block)
    h0_ref,       # (L, B, H)  initial hidden (batch block)
    c0_ref,       # (L, B, H)  initial cell   (batch block)
    out_ref,      # (T, B, Opad) log-prob outputs, time-major, lane-padded
    *,
    num_layers, max_length, hidden_size, output_size, vocab_size, sos,
):
    B = cond_ref.shape[0]
    H = hidden_size
    O = output_size
    V = vocab_size
    Opad = out_ref.shape[-1]

    # ---- hoisted loop-invariant loads & constants --------------------------
    # (If a bundle dump shows spill stores on v5e, re-load these from their
    #  refs inside the layer loop instead -- vld slots are plentiful.)
    wih0 = wih0_ref[...]                                   # (V+1, 4H)
    whh0 = whh0_ref[...]                                   # (H, 4H)
    wcat = {l: wcat_ref[l] for l in range(1, num_layers)}  # (2H, 4H) each
    b = [b_ref[l] for l in range(num_layers)]              # (1, 4H) each
    wfc2 = wfc2_ref[...]
    bfc2 = bfc2_ref[...]
    wfc3 = wfc3_ref[...]
    bfc3 = bfc3_ref[...]

    # conditional projection: LeakyReLU(fc(conditionals)) -- step-invariant
    cond_h = _leaky_relu(
        jnp.dot(cond_ref[...], wfc_ref[...], preferred_element_type=jnp.float32)
        + bfc_ref[...]
    )                                                      # (B, H)

    col_v1 = lax.broadcasted_iota(jnp.int32, (B, V + 1), 1)
    is_dur_in = col_v1 == V                                # duration column of input
    col_o = lax.broadcasted_iota(jnp.int32, (B, Opad), 1)
    is_act = col_o < (O - 1)                               # activity logit columns

    h = [h0_ref[l] for l in range(num_layers)]
    c = [c0_ref[l] for l in range(num_layers)]

    def lstm_cell(pre, c_prev):
        # gate order i, f, g, o (PyTorch). Nonlinearities on the full lane-dense
        # (B, 4H) tile: 2 EUP pushes instead of 4, no lane realign per slice.
        sig = _sigmoid(pre)
        th = jnp.tanh(pre)
        i_g = sig[:, 0 * H:1 * H]
        f_g = sig[:, 1 * H:2 * H]
        g_g = th[:, 2 * H:3 * H]
        o_g = sig[:, 3 * H:4 * H]
        c_new = f_g * c_prev + i_g * g_g
        h_new = o_g * jnp.tanh(c_new)
        return h_new, c_new

    # initial decoder input: activity index = sos, duration = 0
    act = jnp.full((B, 1), sos, dtype=jnp.int32)
    dur = jnp.zeros((B, 1), dtype=jnp.float32)

    for t in range(max_length):
        # CustomDurationEmbedding + layer-0 ih matmul fused on the host:
        #   pre0 = [onehot(act), dur] @ (emb_ext @ W_ih0) + h0 @ W_hh0 + b0
        x_in = jnp.where(is_dur_in, dur, (col_v1 == act).astype(jnp.float32))
        pre0 = (
            jnp.dot(x_in, wih0, preferred_element_type=jnp.float32)
            + jnp.dot(h[0], whh0, preferred_element_type=jnp.float32)
            + b[0]
        )                                                  # (B, 4H)
        h[0], c[0] = lstm_cell(pre0, c[0])
        x = h[0]

        # upper layers: single fused dot on lane-concat [x, h]
        for l in range(1, num_layers):
            xh = jnp.concatenate([x, h[l]], axis=-1)       # (B, 2H)
            pre = jnp.dot(xh, wcat[l], preferred_element_type=jnp.float32) + b[l]
            h[l], c[l] = lstm_cell(pre, c[l])
            x = h[l]

        # conditional_add: fc3(LeakyReLU(fc2(lstm_out + cond_h)))
        z = _leaky_relu(
            jnp.dot(x + cond_h, wfc2, preferred_element_type=jnp.float32) + bfc2
        )
        pred = jnp.dot(z, wfc3, preferred_element_type=jnp.float32) + bfc3  # (B, Opad)

        # store RAW logits; normalization is deferred to a bulk pass after the loop
        out_ref[t] = pred

        # pack(): top-1 (first-max) activity index + sigmoid(duration) -> next input
        masked = jnp.where(is_act, pred, -jnp.inf)
        m = jnp.max(masked, axis=-1, keepdims=True)
        winner = jnp.where(masked == m, col_o, Opad)
        act = jnp.min(winner, axis=-1, keepdims=True).astype(jnp.int32)
        dur_logit = jnp.sum(
            jnp.where(col_o == (O - 1), pred, 0.0), axis=-1, keepdims=True
        )
        dur = _sigmoid(dur_logit)

    # ---- bulk output normalization (off the recurrence critical chain) -----
    pred_all = out_ref[...]                                # (T, B, Opad)
    is_act3 = is_act[None, :, :]                           # (1, B, Opad)
    masked = jnp.where(is_act3, pred_all, -jnp.inf)
    m = jnp.max(masked, axis=-1, keepdims=True)
    lse = m + jnp.log(jnp.sum(jnp.exp(masked - m), axis=-1, keepdims=True))
    out_ref[...] = jnp.where(is_act3, pred_all - lse, _log_sigmoid(pred_all))


def init_params(key, input_size, hidden_size, output_size, conditionals_size,
                num_layers, o_pad=128):
    """Deterministic synthetic parameters, shaped like the PyTorch module,
    pre-packed into the kernel's fused / lane-dense layout."""
    H = hidden_size
    V = input_size
    O = output_size
    keys = jax.random.split(key, 11)

    def rn(k, shape, scale=0.1):
        return (scale * jax.random.normal(k, shape)).astype(jnp.float32)

    # CustomDurationEmbedding: nn.Embedding(input_size, hidden_size - 1)
    emb = rn(keys[0], (V, H - 1))
    emb_pad = jnp.concatenate([emb, jnp.zeros((V, 1), jnp.float32)], axis=1)  # (V, H)
    # extra unit row routes the duration scalar into column H-1
    dur_row = jnp.zeros((1, H), jnp.float32).at[0, H - 1].set(1.0)
    emb_ext = jnp.concatenate([emb_pad, dur_row], axis=0)                     # (V+1, H)

    wih = rn(keys[1], (num_layers, 4 * H, H))   # nn.LSTM weight_ih_l{k}
    whh = rn(keys[2], (num_layers, 4 * H, H))   # nn.LSTM weight_hh_l{k}
    bih = rn(keys[3], (num_layers, 4 * H))
    bhh = rn(keys[4], (num_layers, 4 * H))
    wfc = rn(keys[5], (H, conditionals_size))   # fc
    bfc = rn(keys[6], (H,))
    wfc2 = rn(keys[7], (H, H))                  # fc2
    bfc2 = rn(keys[8], (H,))
    wfc3 = rn(keys[9], (O, H))                  # fc3
    bfc3 = rn(keys[10], (O,))

    # gate-fused, transposed weights: (L, H, 4H), gates i,f,g,o along N
    wih_f = jnp.transpose(wih, (0, 2, 1))
    whh_f = jnp.transpose(whh, (0, 2, 1))
    b_fused = (bih + bhh).reshape(num_layers, 1, 4 * H)   # pre-summed bias

    # layer 0: fold the embedding into the input->gates weights (host-side)
    wih0_fused = emb_ext @ wih_f[0]                        # (V+1, 4H)
    whh0 = whh_f[0]                                        # (H, 4H)

    # layers >= 1: fuse ih/hh into a single (2H, 4H) weight for a lane-concat dot
    wcat = jnp.zeros((num_layers, 2 * H, 4 * H), jnp.float32)
    for l in range(1, num_layers):
        wcat = wcat.at[l].set(
            jnp.concatenate([wih_f[l], whh_f[l]], axis=0)
        )

    # pad fc3 output dim to a lane-dense 128 so per-step stores are unmasked
    wfc3_t = jnp.zeros((H, o_pad), jnp.float32).at[:, :O].set(wfc3.T)
    bfc3_p = jnp.zeros((1, o_pad), jnp.float32).at[0, :O].set(bfc3)

    return dict(
        # kernel-packed
        wih0_fused=wih0_fused, whh0=whh0, wcat=wcat, b_fused=b_fused,
        wfc_t=wfc.T, bfc=bfc[None, :],
        wfc2_t=wfc2.T, bfc2=bfc2[None, :],
        wfc3_t=wfc3_t, bfc3=bfc3_p,
        # original layout (for the pure-JAX reference)
        emb_ext=emb_ext, wih_f=wih_f, whh_f=whh_f,
        output_size=O,
    )


def run_decoder(params, cond, h0, c0, *, max_length, sos=0, block_batch=None):
    """block_batch=None -> one grid step over the whole padded batch (best on
    single-TC v5e/v6e and for small batches). On v7x pass
    block_batch = round_up(ceil(Bp/2), 8) to give each TensorCore one block."""
    L, B, H = h0.shape
    C = cond.shape[1]
    V = params["emb_ext"].shape[0] - 1
    Opad = params["wfc3_t"].shape[1]
    O = params["output_size"]

    # the argmax'd activity index re-feeds the embedding: need O-1 <= vocab
    assert O - 1 <= V, f"output activity logits ({O - 1}) exceed embedding vocab ({V})"

    # pad batch to the 8-sublane tile so every vector op / store is dense
    Bp = ((B + 7) // 8) * 8
    BB = Bp if block_batch is None else ((block_batch + 7) // 8) * 8
    BB = min(BB, Bp)
    Bp = ((Bp + BB - 1) // BB) * BB          # make the grid divide evenly
    if Bp != B:
        cond = jnp.pad(cond, ((0, Bp - B), (0, 0)))
        h0 = jnp.pad(h0, ((0, 0), (0, Bp - B), (0, 0)))
        c0 = jnp.pad(c0, ((0, 0), (0, Bp - B), (0, 0)))

    kernel = functools.partial(
        decoder_kernel,
        num_layers=L, max_length=max_length, hidden_size=H,
        output_size=O, vocab_size=V, sos=sos,
    )

    # weights: whole array resident in VMEM (few hundred KB total; no VMEM
    # tuning needed on any generation); batch-dependent tensors: blocked over
    # the batch grid so v7x megacore can split the batch if block_batch is set.
    whole = pl.BlockSpec(memory_space=pltpu.MemorySpace.VMEM)
    in_specs = [
        whole,                                            # wih0_fused
        whole,                                            # whh0
        whole,                                            # wcat
        whole,                                            # b_fused
        whole, whole,                                     # wfc_t, bfc
        whole, whole,                                     # wfc2_t, bfc2
        whole, whole,                                     # wfc3_t, bfc3
        pl.BlockSpec((BB, C), lambda b: (b, 0)),          # cond
        pl.BlockSpec((L, BB, H), lambda b: (0, b, 0)),    # h0
        pl.BlockSpec((L, BB, H), lambda b: (0, b, 0)),    # c0
    ]
    out_spec = pl.BlockSpec((max_length, BB, Opad), lambda b: (0, b, 0))

    out_tbo = pl.pallas_call(
        kernel,
        out_shape=jax.ShapeDtypeStruct((max_length, Bp, Opad), jnp.float32),
        grid=(Bp // BB,),
        in_specs=in_specs,
        out_specs=out_spec,
        compiler_params=pltpu.CompilerParams(
            dimension_semantics=("parallel",),
        ),
    )(
        params["wih0_fused"], params["whh0"], params["wcat"], params["b_fused"],
        params["wfc_t"], params["bfc"], params["wfc2_t"], params["bfc2"],
        params["wfc3_t"], params["bfc3"], cond, h0, c0,
    )

    # match PyTorch: torch.stack(outputs).permute(1, 0, 2) -> (B, T, O)
    return jnp.transpose(out_tbo[:, :B, :O], (1, 0, 2))


def reference_decoder(params, cond, h0, c0, *, max_length, sos=0):
    """Pure-JAX mirror of the PyTorch forward (target=None, topk sampling)."""
    L, B, H = h0.shape
    O = params["output_size"]
    emb_ext = params["emb_ext"]
    V = emb_ext.shape[0] - 1
    emb = emb_ext[:V]                                     # (V, H), last column zero

    cond_h = jax.nn.leaky_relu(cond @ params["wfc_t"] + params["bfc"], 0.01)
    h = [h0[l] for l in range(L)]
    c = [c0[l] for l in range(L)]
    act = jnp.full((B,), sos, jnp.int32)
    dur = jnp.zeros((B, 1), jnp.float32)
    outs = []
    for _ in range(max_length):
        x = emb[act]
        x = x.at[:, H - 1].set(dur[:, 0])
        for l in range(L):
            pre = (x @ params["wih_f"][l] + h[l] @ params["whh_f"][l]
                   + params["b_fused"][l])
            i_g = jax.nn.sigmoid(pre[:, :H])
            f_g = jax.nn.sigmoid(pre[:, H:2 * H])
            g_g = jnp.tanh(pre[:, 2 * H:3 * H])
            o_g = jax.nn.sigmoid(pre[:, 3 * H:])
            c[l] = f_g * c[l] + i_g * g_g
            h[l] = o_g * jnp.tanh(c[l])
            x = h[l]
        z = jax.nn.leaky_relu((x + cond_h) @ params["wfc2_t"] + params["bfc2"], 0.01)
        pred = z @ params["wfc3_t"][:, :O] + params["bfc3"][:, :O]
        acts_logits = pred[:, :O - 1]
        dur_logit = pred[:, O - 1:]
        outs.append(
            jnp.concatenate(
                [jax.nn.log_softmax(acts_logits, axis=-1),
                 jax.nn.log_sigmoid(dur_logit)],
                axis=-1,
            )
        )
        act = jnp.argmax(acts_logits, axis=-1).astype(jnp.int32)
        dur = jax.nn.sigmoid(dur_logit)
    return jnp.stack(outs, axis=1)  # (B, T, O)


if __name__ == "__main__":
    # small shapes consistent with the module's forward
    input_size = 6          # activity vocab for the embedding
    hidden_size = 32
    output_size = 7         # 6 activity logits + 1 duration
    conditionals_size = 16
    num_layers = 2
    max_length = 8
    batch = 4

    key = jax.random.PRNGKey(0)
    k_p, k_c, k_h, k_cc = jax.random.split(key, 4)
    params = init_params(k_p, input_size, hidden_size, output_size,
                         conditionals_size, num_layers)
    conditionals = (0.5 * jax.random.normal(k_c, (batch, conditionals_size))
                    ).astype(jnp.float32)
    h0 = (0.5 * jax.random.normal(k_h, (num_layers, batch, hidden_size))
          ).astype(jnp.float32)
    c0 = (0.5 * jax.random.normal(k_cc, (num_layers, batch, hidden_size))
          ).astype(jnp.float32)

    out = run_decoder(params, conditionals, h0, c0, max_length=max_length, sos=0)
    out = jax.block_until_ready(out)

    ref = reference_decoder(params, conditionals, h0, c0,
                            max_length=max_length, sos=0)

    assert out.shape == (batch, max_length, output_size), out.shape
    assert bool(jnp.all(jnp.isfinite(out)))
    max_err = float(jnp.max(jnp.abs(out - ref)))
    assert max_err < 1e-3, f"mismatch vs pure-JAX reference: {max_err}"
    print("KERNEL_OK")
</pallas_src>

<mosaic_0001>
module attributes {stable_mosaic.version = 11 : i64} {
  func.func @decoder_kernel(%arg0: i32, %arg1: memref<7x128xf32, #tpu.memory_space<vmem>>, %arg2: memref<32x128xf32, #tpu.memory_space<vmem>>, %arg3: memref<2x64x128xf32, #tpu.memory_space<vmem>>, %arg4: memref<2x1x128xf32, #tpu.memory_space<vmem>>, %arg5: memref<16x32xf32, #tpu.memory_space<vmem>>, %arg6: memref<1x32xf32, #tpu.memory_space<vmem>>, %arg7: memref<32x32xf32, #tpu.memory_space<vmem>>, %arg8: memref<1x32xf32, #tpu.memory_space<vmem>>, %arg9: memref<32x128xf32, #tpu.memory_space<vmem>>, %arg10: memref<1x128xf32, #tpu.memory_space<vmem>>, %arg11: memref<8x16xf32, #tpu.memory_space<vmem>>, %arg12: memref<2x8x32xf32, #tpu.memory_space<vmem>>, %arg13: memref<2x8x32xf32, #tpu.memory_space<vmem>>, %arg14: memref<8x8x128xf32, #tpu.memory_space<vmem>>) attributes {dimension_semantics = [#tpu.dimension_semantics<parallel>], iteration_bounds = array<i64: 1>, scalar_prefetch = 0 : i64, scratch_operands = 0 : i64, tpu.core_type = #tpu.core_type<tc>, window_params = [{pipeline_mode = #tpu.pipeline_mode<synchronous>, transform_indices = @transform_0, window_bounds = array<i64: 7, 128>}, {pipeline_mode = #tpu.pipeline_mode<synchronous>, transform_indices = @transform_1, window_bounds = array<i64: 32, 128>}, {pipeline_mode = #tpu.pipeline_mode<synchronous>, transform_indices = @transform_2, window_bounds = array<i64: 2, 64, 128>}, {pipeline_mode = #tpu.pipeline_mode<synchronous>, transform_indices = @transform_3, window_bounds = array<i64: 2, 1, 128>}, {pipeline_mode = #tpu.pipeline_mode<synchronous>, transform_indices = @transform_4, window_bounds = array<i64: 16, 32>}, {pipeline_mode = #tpu.pipeline_mode<synchronous>, transform_indices = @transform_5, window_bounds = array<i64: 1, 32>}, {pipeline_mode = #tpu.pipeline_mode<synchronous>, transform_indices = @transform_6, window_bounds = array<i64: 32, 32>}, {pipeline_mode = #tpu.pipeline_mode<synchronous>, transform_indices = @transform_7, window_bounds = array<i64: 1, 32>}, {pipeline_mode = #tpu.pipeline_mode<synchronous>, transform_indices = @transform_8, window_bounds = array<i64: 32, 128>}, {pipeline_mode = #tpu.pipeline_mode<synchronous>, transform_indices = @transform_9, window_bounds = array<i64: 1, 128>}, {transform_indices = @transform_10, window_bounds = array<i64: 8, 16>}, {transform_indices = @transform_11, window_bounds = array<i64: 2, 8, 32>}, {transform_indices = @transform_12, window_bounds = array<i64: 2, 8, 32>}, {transform_indices = @transform_13, window_bounds = array<i64: 8, 8, 128>}]} {
    %c0 = arith.constant 0 : index
    %c0_0 = arith.constant 0 : index
    %0 = vector.load %arg1[%c0, %c0_0] : memref<7x128xf32, #tpu.memory_space<vmem>>, vector<7x128xf32>
    %c0_1 = arith.constant 0 : index
    %c0_2 = arith.constant 0 : index
    %1 = vector.load %arg2[%c0_1, %c0_2] : memref<32x128xf32, #tpu.memory_space<vmem>>, vector<32x128xf32>
    %c1 = arith.constant 1 : index
    %c0_3 = arith.constant 0 : index
    %c0_4 = arith.constant 0 : index
    %2 = vector.load %arg3[%c1, %c0_3, %c0_4] : memref<2x64x128xf32, #tpu.memory_space<vmem>>, vector<1x64x128xf32>
    %3 = vector.shape_cast %2 : vector<1x64x128xf32> to vector<64x128xf32>
    %c0_5 = arith.constant 0 : index
    %c0_6 = arith.constant 0 : index
    %c0_7 = arith.constant 0 : index
    %4 = vector.load %arg4[%c0_5, %c0_6, %c0_7] : memref<2x1x128xf32, #tpu.memory_space<vmem>>, vector<1x1x128xf32>
    %5 = vector.shape_cast %4 : vector<1x1x128xf32> to vector<1x128xf32>
    %c1_8 = arith.constant 1 : index
    %c0_9 = arith.constant 0 : index
    %c0_10 = arith.constant 0 : index
    %6 = vector.load %arg4[%c1_8, %c0_9, %c0_10] : memref<2x1x128xf32, #tpu.memory_space<vmem>>, vector<1x1x128xf32>
    %7 = vector.shape_cast %6 : vector<1x1x128xf32> to vector<1x128xf32>
    %c0_11 = arith.constant 0 : index
    %c0_12 = arith.constant 0 : index
    %8 = vector.load %arg7[%c0_11, %c0_12] : memref<32x32xf32, #tpu.memory_space<vmem>>, vector<32x32xf32>
    %c0_13 = arith.constant 0 : index
    %c0_14 = arith.constant 0 : index
    %9 = vector.load %arg8[%c0_13, %c0_14] : memref<1x32xf32, #tpu.memory_space<vmem>>, vector<1x32xf32>
    %c0_15 = arith.constant 0 : index
    %c0_16 = arith.constant 0 : index
    %10 = vector.load %arg9[%c0_15, %c0_16] : memref<32x128xf32, #tpu.memory_space<vmem>>, vector<32x128xf32>
    %c0_17 = arith.constant 0 : index
    %c0_18 = arith.constant 0 : index
    %11 = vector.load %arg10[%c0_17, %c0_18] : memref<1x128xf32, #tpu.memory_space<vmem>>, vector<1x128xf32>
    %c0_19 = arith.constant 0 : index
    %c0_20 = arith.constant 0 : index
    %12 = vector.load %arg11[%c0_19, %c0_20] : memref<8x16xf32, #tpu.memory_space<vmem>>, vector<8x16xf32>
    %c0_21 = arith.constant 0 : index
    %c0_22 = arith.constant 0 : index
    %13 = vector.load %arg5[%c0_21, %c0_22] : memref<16x32xf32, #tpu.memory_space<vmem>>, vector<16x32xf32>
    %cst = arith.constant dense<0.000000e+00> : vector<8x32xf32>
    %14 = tpu.matmul %12, %13, %cst {dimension_numbers = #tpu.dot_dimension_numbers<[1], [0], [0], [1], [0, 0, 1, 1], [], []>} : vector<8x16xf32>, vector<16x32xf32>, vector<8x32xf32> -> vector<8x32xf32>
    %c0_23 = arith.constant 0 : index
    %c0_24 = arith.constant 0 : index
    %15 = vector.load %arg6[%c0_23, %c0_24] : memref<1x32xf32, #tpu.memory_space<vmem>>, vector<1x32xf32>
    %16 = vector.broadcast %15 : vector<1x32xf32> to vector<8x32xf32>
    %17 = arith.addf %14, %16 : vector<8x32xf32>
    %cst_25 = arith.constant 0.000000e+00 : f32
    %18 = vector.broadcast %cst_25 : f32 to vector<8x32xf32>
    %19 = arith.cmpf ogt, %17, %18 : vector<8x32xf32>
    %cst_26 = arith.constant 0.00999999977 : f32
    %20 = vector.broadcast %cst_26 : f32 to vector<8x32xf32>
    %21 = arith.mulf %20, %17 : vector<8x32xf32>
    %22 = arith.select %19, %17, %21 : vector<8x32xi1>, vector<8x32xf32>
    %23 = tpu.iota {dimensions = array<i32: 1>} : vector<8x7xi32>
    %c6_i32 = arith.constant 6 : i32
    %24 = vector.broadcast %c6_i32 : i32 to vector<8x7xi32>
    %25 = arith.cmpi eq, %23, %24 : vector<8x7xi32>
    %26 = tpu.iota {dimensions = array<i32: 1>} : vector<8x128xi32>
    %c6_i32_27 = arith.constant 6 : i32
    %27 = vector.broadcast %c6_i32_27 : i32 to vector<8x128xi32>
    %28 = arith.cmpi slt, %26, %27 : vector<8x128xi32>
    %c0_28 = arith.constant 0 : index
    %c0_29 = arith.constant 0 : index
    %c0_30 = arith.constant 0 : index
    %29 = vector.load %arg12[%c0_28, %c0_29, %c0_30] : memref<2x8x32xf32, #tpu.memory_space<vmem>>, vector<1x8x32xf32>
    %30 = vector.shape_cast %29 : vector<1x8x32xf32> to vector<8x32xf32>
    %c1_31 = arith.constant 1 : index
    %c0_32 = arith.constant 0 : index
    %c0_33 = arith.constant 0 : index
    %31 = vector.load %arg12[%c1_31, %c0_32, %c0_33] : memref<2x8x32xf32, #tpu.memory_space<vmem>>, vector<1x8x32xf32>
    %32 = vector.shape_cast %31 : vector<1x8x32xf32> to vector<8x32xf32>
    %c0_34 = arith.constant 0 : index
    %c0_35 = arith.constant 0 : index
    %c0_36 = arith.constant 0 : index
    %33 = vector.load %arg13[%c0_34, %c0_35, %c0_36] : memref<2x8x32xf32, #tpu.memory_space<vmem>>, vector<1x8x32xf32>
    %34 = vector.shape_cast %33 : vector<1x8x32xf32> to vector<8x32xf32>
    %c1_37 = arith.constant 1 : index
    %c0_38 = arith.constant 0 : index
    %c0_39 = arith.constant 0 : index
    %35 = vector.load %arg13[%c1_37, %c0_38, %c0_39] : memref<2x8x32xf32, #tpu.memory_space<vmem>>, vector<1x8x32xf32>
    %36 = vector.shape_cast %35 : vector<1x8x32xf32> to vector<8x32xf32>
    %c0_i32 = arith.constant 0 : i32
    %37 = vector.broadcast %c0_i32 : i32 to vector<8x1xi32>
    %cst_40 = arith.constant 0.000000e+00 : f32
    %38 = vector.broadcast %cst_40 : f32 to vector<8x1xf32>
    %39 = vector.broadcast %37 : vector<8x1xi32> to vector<8x7xi32>
    %40 = arith.cmpi eq, %23, %39 : vector<8x7xi32>
    %41 = arith.extui %40 : vector<8x7xi1> to vector<8x7xi32>
    %42 = arith.sitofp %41 : vector<8x7xi32> to vector<8x7xf32>
    %43 = vector.shape_cast %38 : vector<8x1xf32> to vector<8x1xf32>
    %44 = vector.broadcast %43 : vector<8x1xf32> to vector<8x7xf32>
    %45 = arith.select %25, %44, %42 : vector<8x7xi1>, vector<8x7xf32>
    %cst_41 = arith.constant dense<0.000000e+00> : vector<8x128xf32>
    %46 = tpu.matmul %45, %0, %cst_41 {dimension_numbers = #tpu.dot_dimension_numbers<[1], [0], [0], [1], [0, 0, 1, 1], [], []>} : vector<8x7xf32>, vector<7x128xf32>, vector<8x128xf32> -> vector<8x128xf32>
    %cst_42 = arith.constant dense<0.000000e+00> : vector<8x128xf32>
    %47 = tpu.matmul %30, %1, %cst_42 {dimension_numbers = #tpu.dot_dimension_numbers<[1], [0], [0], [1], [0, 0, 1, 1], [], []>} : vector<8x32xf32>, vector<32x128xf32>, vector<8x128xf32> -> vector<8x128xf32>
    %48 = arith.addf %46, %47 : vector<8x128xf32>
    %49 = vector.broadcast %5 : vector<1x128xf32> to vector<8x128xf32>
    %50 = arith.addf %48, %49 : vector<8x128xf32>
    %cst_43 = arith.constant 5.000000e-01 : f32
    %51 = vector.broadcast %cst_43 : f32 to vector<8x128xf32>
    %52 = arith.mulf %51, %50 : vector<8x128xf32>
    %53 = math.tanh %52 : vector<8x128xf32>
    %cst_44 = arith.constant 5.000000e-01 : f32
    %54 = vector.broadcast %cst_44 : f32 to vector<8x128xf32>
    %55 = arith.mulf %54, %53 : vector<8x128xf32>
    %cst_45 = arith.constant 5.000000e-01 : f32
    %56 = vector.broadcast %cst_45 : f32 to vector<8x128xf32>
    %57 = arith.addf %55, %56 : vector<8x128xf32>
    %58 = math.tanh %50 : vector<8x128xf32>
    %59 = vector.extract_strided_slice %57 {offsets = [0, 0], sizes = [8, 32], strides = [1, 1]} : vector<8x128xf32> to vector<8x32xf32>
    %60 = vector.extract_strided_slice %57 {offsets = [0, 32], sizes = [8, 32], strides = [1, 1]} : vector<8x128xf32> to vector<8x32xf32>
    %61 = vector.extract_strided_slice %58 {offsets = [0, 64], sizes = [8, 32], strides = [1, 1]} : vector<8x128xf32> to vector<8x32xf32>
    %62 = vector.extract_strided_slice %57 {offsets = [0, 96], sizes = [8, 32], strides = [1, 1]} : vector<8x128xf32> to vector<8x32xf32>
    %63 = arith.mulf %60, %34 : vector<8x32xf32>
    %64 = arith.mulf %59, %61 : vector<8x32xf32>
    %65 = arith.addf %63, %64 : vector<8x32xf32>
    %66 = math.tanh %65 : vector<8x32xf32>
    %67 = arith.mulf %62, %66 : vector<8x32xf32>
    %68 = tpu.concatenate %67, %32 in 1 : vector<8x32xf32>, vector<8x32xf32> -> vector<8x64xf32>
    %cst_46 = arith.constant dense<0.000000e+00> : vector<8x128xf32>
    %69 = tpu.matmul %68, %3, %cst_46 {dimension_numbers = #tpu.dot_dimension_numbers<[1], [0], [0], [1], [0, 0, 1, 1], [], []>} : vector<8x64xf32>, vector<64x128xf32>, vector<8x128xf32> -> vector<8x128xf32>
    %70 = vector.broadcast %7 : vector<1x128xf32> to vector<8x128xf32>
    %71 = arith.addf %69, %70 : vector<8x128xf32>
    %cst_47 = arith.constant 5.000000e-01 : f32
    %72 = vector.broadcast %cst_47 : f32 to vector<8x128xf32>
    %73 = arith.mulf %72, %71 : vector<8x128xf32>
    %74 = math.tanh %73 : vector<8x128xf32>
    %cst_48 = arith.constant 5.000000e-01 : f32
    %75 = vector.broadcast %cst_48 : f32 to vector<8x128xf32>
    %76 = arith.mulf %75, %74 : vector<8x128xf32>
    %cst_49 = arith.constant 5.000000e-01 : f32
    %77 = vector.broadcast %cst_49 : f32 to vector<8x128xf32>
    %78 = arith.addf %76, %77 : vector<8x128xf32>
    %79 = math.tanh %71 : vector<8x128xf32>
    %80 = vector.extract_strided_slice %78 {offsets = [0, 0], sizes = [8, 32], strides = [1, 1]} : vector<8x128xf32> to vector<8x32xf32>
    %81 = vector.extract_strided_slice %78 {offsets = [0, 32], sizes = [8, 32], strides = [1, 1]} : vector<8x128xf32> to vector<8x32xf32>
    %82 = vector.extract_strided_slice %79 {offsets = [0, 64], sizes = [8, 32], strides = [1, 1]} : vector<8x128xf32> to vector<8x32xf32>
    %83 = vector.extract_strided_slice %78 {offsets = [0, 96], sizes = [8, 32], strides = [1, 1]} : vector<8x128xf32> to vector<8x32xf32>
    %84 = arith.mulf %81, %36 : vector<8x32xf32>
    %85 = arith.mulf %80, %82 : vector<8x32xf32>
    %86 = arith.addf %84, %85 : vector<8x32xf32>
    %87 = math.tanh %86 : vector<8x32xf32>
    %88 = arith.mulf %83, %87 : vector<8x32xf32>
    %89 = arith.addf %88, %22 : vector<8x32xf32>
    %cst_50 = arith.constant dense<0.000000e+00> : vector<8x32xf32>
    %90 = tpu.matmul %89, %8, %cst_50 {dimension_numbers = #tpu.dot_dimension_numbers<[1], [0], [0], [1], [0, 0, 1, 1], [], []>} : vector<8x32xf32>, vector<32x32xf32>, vector<8x32xf32> -> vector<8x32xf32>
    %91 = vector.broadcast %9 : vector<1x32xf32> to vector<8x32xf32>
    %92 = arith.addf %90, %91 : vector<8x32xf32>
    %cst_51 = arith.constant 0.000000e+00 : f32
    %93 = vector.broadcast %cst_51 : f32 to vector<8x32xf32>
    %94 = arith.cmpf ogt, %92, %93 : vector<8x32xf32>
    %cst_52 = arith.constant 0.00999999977 : f32
    %95 = vector.broadcast %cst_52 : f32 to vector<8x32xf32>
    %96 = arith.mulf %95, %92 : vector<8x32xf32>
    %97 = arith.select %94, %92, %96 : vector<8x32xi1>, vector<8x32xf32>
    %cst_53 = arith.constant dense<0.000000e+00> : vector<8x128xf32>
    %98 = tpu.matmul %97, %10, %cst_53 {dimension_numbers = #tpu.dot_dimension_numbers<[1], [0], [0], [1], [0, 0, 1, 1], [], []>} : vector<8x32xf32>, vector<32x128xf32>, vector<8x128xf32> -> vector<8x128xf32>
    %99 = vector.broadcast %11 : vector<1x128xf32> to vector<8x128xf32>
    %100 = arith.addf %98, %99 : vector<8x128xf32>
    %c0_54 = arith.constant 0 : index
    %c0_55 = arith.constant 0 : index
    %c0_56 = arith.constant 0 : index
    %101 = vector.load %arg14[%c0_54, %c0_55, %c0_56] : memref<8x8x128xf32, #tpu.memory_space<vmem>>, vector<1x8x128xf32>
    %102 = vector.shape_cast %101 : vector<1x8x128xf32> to vector<8x128xf32>
    %103 = vector.shape_cast %100 : vector<8x128xf32> to vector<1x8x128xf32>
    tpu.vector_store %arg14[%c0_54, %c0_55, %c0_56], %103 {strides = array<i32>} : memref<8x8x128xf32, #tpu.memory_space<vmem>>, vector<1x8x128xf32>,
    %cst_57 = arith.constant 0xFF800000 : f32
    %104 = vector.broadcast %cst_57 : f32 to vector<8x128xf32>
    %105 = arith.select %28, %100, %104 : vector<8x128xi1>, vector<8x128xf32>
    %cst_58 = arith.constant dense<0xFF800000> : vector<8xf32>
    %106 = vector.multi_reduction <maximumf>, %105, %cst_58 [1] : vector<8x128xf32> to vector<8xf32>
    %107 = vector.shape_cast %106 : vector<8xf32> to vector<8x1xf32>
    %108 = vector.broadcast %107 : vector<8x1xf32> to vector<8x128xf32>
    %109 = arith.cmpf oeq, %105, %108 : vector<8x128xf32>
    %c128_i32 = arith.constant 128 : i32
    %110 = vector.broadcast %c128_i32 : i32 to vector<8x128xi32>
    %111 = arith.select %109, %26, %110 : vector<8x128xi1>, vector<8x128xi32>
    %cst_59 = arith.constant dense<2147483647> : vector<8xi32>
    %112 = vector.multi_reduction <minsi>, %111, %cst_59 [1] : vector<8x128xi32> to vector<8xi32>
    %113 = vector.shape_cast %112 : vector<8xi32> to vector<8x1xi32>
    %c6_i32_60 = arith.constant 6 : i32
    %114 = vector.broadcast %c6_i32_60 : i32 to vector<8x128xi32>
    %115 = arith.cmpi eq, %26, %114 : vector<8x128xi32>
    %cst_61 = arith.constant 0.000000e+00 : f32
    %116 = vector.broadcast %cst_61 : f32 to vector<8x128xf32>
    %117 = arith.select %115, %100, %116 : vector<8x128xi1>, vector<8x128xf32>
    %cst_62 = arith.constant dense<0.000000e+00> : vector<8xf32>
    %118 = vector.multi_reduction <add>, %117, %cst_62 [1] : vector<8x128xf32> to vector<8xf32>
    %119 = vector.shape_cast %118 : vector<8xf32> to vector<8x1xf32>
    %cst_63 = arith.constant 5.000000e-01 : f32
    %120 = vector.broadcast %cst_63 : f32 to vector<8x1xf32>
    %121 = arith.mulf %120, %119 : vector<8x1xf32>
    %122 = math.tanh %121 : vector<8x1xf32>
    %cst_64 = arith.constant 5.000000e-01 : f32
    %123 = vector.broadcast %cst_64 : f32 to vector<8x1xf32>
    %124 = arith.mulf %123, %122 : vector<8x1xf32>
    %cst_65 = arith.constant 5.000000e-01 : f32
    %125 = vector.broadcast %cst_65 : f32 to vector<8x1xf32>
    %126 = arith.addf %124, %125 : vector<8x1xf32>
    %127 = vector.broadcast %113 : vector<8x1xi32> to vector<8x7xi32>
    %128 = arith.cmpi eq, %23, %127 : vector<8x7xi32>
    %129 = arith.extui %128 : vector<8x7xi1> to vector<8x7xi32>
    %130 = arith.sitofp %129 : vector<8x7xi32> to vector<8x7xf32>
    %131 = vector.shape_cast %126 : vector<8x1xf32> to vector<8x1xf32>
    %132 = vector.broadcast %131 : vector<8x1xf32> to vector<8x7xf32>
    %133 = arith.select %25, %132, %130 : vector<8x7xi1>, vector<8x7xf32>
    %cst_66 = arith.constant dense<0.000000e+00> : vector<8x128xf32>
    %134 = tpu.matmul %133, %0, %cst_66 {dimension_numbers = #tpu.dot_dimension_numbers<[1], [0], [0], [1], [0, 0, 1, 1], [], []>} : vector<8x7xf32>, vector<7x128xf32>, vector<8x128xf32> -> vector<8x128xf32>
    %cst_67 = arith.constant dense<0.000000e+00> : vector<8x128xf32>
    %135 = tpu.matmul %67, %1, %cst_67 {dimension_numbers = #tpu.dot_dimension_numbers<[1], [0], [0], [1], [0, 0, 1, 1], [], []>} : vector<8x32xf32>, vector<32x128xf32>, vector<8x128xf32> -> vector<8x128xf32>
    %136 = arith.addf %134, %135 : vector<8x128xf32>
    %137 = vector.broadcast %5 : vector<1x128xf32> to vector<8x128xf32>
    %138 = arith.addf %136, %137 : vector<8x128xf32>
    %cst_68 = arith.constant 5.000000e-01 : f32
    %139 = vector.broadcast %cst_68 : f32 to vector<8x128xf32>
    %140 = arith.mulf %139, %138 : vector<8x128xf32>
    %141 = math.tanh %140 : vector<8x128xf32>
    %cst_69 = arith.constant 5.000000e-01 : f32
    %142 = vector.broadcast %cst_69 : f32 to vector<8x128xf32>
    %143 = arith.mulf %142, %141 : vector<8x128xf32>
    %cst_70 = arith.constant 5.000000e-01 : f32
    %144 = vector.broadcast %cst_70 : f32 to vector<8x128xf32>
    %145 = arith.addf %143, %144 : vector<8x128xf32>
    %146 = math.tanh %138 : vector<8x128xf32>
    %147 = vector.extract_strided_slice %145 {offsets = [0, 0], sizes = [8, 32], strides = [1, 1]} : vector<8x128xf32> to vector<8x32xf32>
    %148 = vector.extract_strided_slice %145 {offsets = [0, 32], sizes = [8, 32], strides = [1, 1]} : vector<8x128xf32> to vector<8x32xf32>
    %149 = vector.extract_strided_slice %146 {offsets = [0, 64], sizes = [8, 32], strides = [1, 1]} : vector<8x128xf32> to vector<8x32xf32>
    %150 = vector.extract_strided_slice %145 {offsets = [0, 96], sizes = [8, 32], strides = [1, 1]} : vector<8x128xf32> to vector<8x32xf32>
    %151 = arith.mulf %148, %65 : vector<8x32xf32>
    %152 = arith.mulf %147, %149 : vector<8x32xf32>
    %153 = arith.addf %151, %152 : vector<8x32xf32>
    %154 = math.tanh %153 : vector<8x32xf32>
    %155 = arith.mulf %150, %154 : vector<8x32xf32>
    %156 = tpu.concatenate %155, %88 in 1 : vector<8x32xf32>, vector<8x32xf32> -> vector<8x64xf32>
    %cst_71 = arith.constant dense<0.000000e+00> : vector<8x128xf32>
    %157 = tpu.matmul %156, %3, %cst_71 {dimension_numbers = #tpu.dot_dimension_numbers<[1], [0], [0], [1], [0, 0, 1, 1], [], []>} : vector<8x64xf32>, vector<64x128xf32>, vector<8x128xf32> -> vector<8x128xf32>
    %158 = vector.broadcast %7 : vector<1x128xf32> to vector<8x128xf32>
    %159 = arith.addf %157, %158 : vector<8x128xf32>
    %cst_72 = arith.constant 5.000000e-01 : f32
    %160 = vector.broadcast %cst_72 : f32 to vector<8x128xf32>
    %161 = arith.mulf %160, %159 : vector<8x128xf32>
    %162 = math.tanh %161 : vector<8x128xf32>
    %cst_73 = arith.constant 5.000000e-01 : f32
    %163 = vector.broadcast %cst_73 : f32 to vector<8x128xf32>
    %164 = arith.mulf %163, %162 : vector<8x128xf32>
    %cst_74 = arith.constant 5.000000e-01 : f32
    %165 = vector.broadcast %cst_74 : f32 to vector<8x128xf32>
    %166 = arith.addf %164, %165 : vector<8x128xf32>
    %167 = math.tanh %159 : vector<8x128xf32>
    %168 = vector.extract_strided_slice %166 {offsets = [0, 0], sizes = [8, 32], strides = [1, 1]} : vector<8x128xf32> to vector<8x32xf32>
    %169 = vector.extract_strided_slice %166 {offsets = [0, 32], sizes = [8, 32], strides = [1, 1]} : vector<8x128xf32> to vector<8x32xf32>
    %170 = vector.extract_strided_slice %167 {offsets = [0, 64], sizes = [8, 32], strides = [1, 1]} : vector<8x128xf32> to vector<8x32xf32>
    %171 = vector.extract_strided_slice %166 {offsets = [0, 96], sizes = [8, 32], strides = [1, 1]} : vector<8x128xf32> to vector<8x32xf32>
    %172 = arith.mulf %169, %86 : vector<8x32xf32>
    %173 = arith.mulf %168, %170 : vector<8x32xf32>
    %174 = arith.addf %172, %173 : vector<8x32xf32>
    %175 = math.tanh %174 : vector<8x32xf32>
    %176 = arith.mulf %171, %175 : vector<8x32xf32>
    %177 = arith.addf %176, %22 : vector<8x32xf32>
    %cst_75 = arith.constant dense<0.000000e+00> : vector<8x32xf32>
    %178 = tpu.matmul %177, %8, %cst_75 {dimension_numbers = #tpu.dot_dimension_numbers<[1], [0], [0], [1], [0, 0, 1, 1], [], []>} : vector<8x32xf32>, vector<32x32xf32>, vector<8x32xf32> -> vector<8x32xf32>
    %179 = vector.broadcast %9 : vector<1x32xf32> to vector<8x32xf32>
    %180 = arith.addf %178, %179 : vector<8x32xf32>
    %cst_76 = arith.constant 0.000000e+00 : f32
    %181 = vector.broadcast %cst_76 : f32 to vector<8x32xf32>
    %182 = arith.cmpf ogt, %180, %181 : vector<8x32xf32>
    %cst_77 = arith.constant 0.00999999977 : f32
    %183 = vector.broadcast %cst_77 : f32 to vector<8x32xf32>
    %184 = arith.mulf %183, %180 : vector<8x32xf32>
    %185 = arith.select %182, %180, %184 : vector<8x32xi1>, vector<8x32xf32>
    %cst_78 = arith.constant dense<0.000000e+00> : vector<8x128xf32>
    %186 = tpu.matmul %185, %10, %cst_78 {dimension_numbers = #tpu.dot_dimension_numbers<[1], [0], [0], [1], [0, 0, 1, 1], [], []>} : vector<8x32xf32>, vector<32x128xf32>, vector<8x128xf32> -> vector<8x128xf32>
    %187 = vector.broadcast %11 : vector<1x128xf32> to vector<8x128xf32>
    %188 = arith.addf %186, %187 : vector<8x128xf32>
    %c1_79 = arith.constant 1 : index
    %c0_80 = arith.constant 0 : index
    %c0_81 = arith.constant 0 : index
    %189 = vector.load %arg14[%c1_79, %c0_80, %c0_81] : memref<8x8x128xf32, #tpu.memory_space<vmem>>, vector<1x8x128xf32>
    %190 = vector.shape_cast %189 : vector<1x8x128xf32> to vector<8x128xf32>
    %191 = vector.shape_cast %188 : vector<8x128xf32> to vector<1x8x128xf32>
    tpu.vector_store %arg14[%c1_79, %c0_80, %c0_81], %191 {strides = array<i32>} : memref<8x8x128xf32, #tpu.memory_space<vmem>>, vector<1x8x128xf32>,
    %cst_82 = arith.constant 0xFF800000 : f32
    %192 = vector.broadcast %cst_82 : f32 to vector<8x128xf32>
    %193 = arith.select %28, %188, %192 : vector<8x128xi1>, vector<8x128xf32>
    %cst_83 = arith.constant dense<0xFF800000> : vector<8xf32>
    %194 = vector.multi_reduction <maximumf>, %193, %cst_83 [1] : vector<8x128xf32> to vector<8xf32>
    %195 = vector.shape_cast %194 : vector<8xf32> to vector<8x1xf32>
    %196 = vector.broadcast %195 : vector<8x1xf32> to vector<8x128xf32>
    %197 = arith.cmpf oeq, %193, %196 : vector<8x128xf32>
    %c128_i32_84 = arith.constant 128 : i32
    %198 = vector.broadcast %c128_i32_84 : i32 to vector<8x128xi32>
    %199 = arith.select %197, %26, %198 : vector<8x128xi1>, vector<8x128xi32>
    %cst_85 = arith.constant dense<2147483647> : vector<8xi32>
    %200 = vector.multi_reduction <minsi>, %199, %cst_85 [1] : vector<8x128xi32> to vector<8xi32>
    %201 = vector.shape_cast %200 : vector<8xi32> to vector<8x1xi32>
    %c6_i32_86 = arith.constant 6 : i32
    %202 = vector.broadcast %c6_i32_86 : i32 to vector<8x128xi32>
    %203 = arith.cmpi eq, %26, %202 : vector<8x128xi32>
    %cst_87 = arith.constant 0.000000e+00 : f32
    %204 = vector.broadcast %cst_87 : f32 to vector<8x128xf32>
    %205 = arith.select %203, %188, %204 : vector<8x128xi1>, vector<8x128xf32>
    %cst_88 = arith.constant dense<0.000000e+00> : vector<8xf32>
    %206 = vector.multi_reduction <add>, %205, %cst_88 [1] : vector<8x128xf32> to vector<8xf32>
    %207 = vector.shape_cast %206 : vector<8xf32> to vector<8x1xf32>
    %cst_89 = arith.constant 5.000000e-01 : f32
    %208 = vector.broadcast %cst_89 : f32 to vector<8x1xf32>
    %209 = arith.mulf %208, %207 : vector<8x1xf32>
    %210 = math.tanh %209 : vector<8x1xf32>
    %cst_90 = arith.constant 5.000000e-01 : f32
    %211 = vector.broadcast %cst_90 : f32 to vector<8x1xf32>
    %212 = arith.mulf %211, %210 : vector<8x1xf32>
    %cst_91 = arith.constant 5.000000e-01 : f32
    %213 = vector.broadcast %cst_91 : f32 to vector<8x1xf32>
    %214 = arith.addf %212, %213 : vector<8x1xf32>
    %215 = vector.broadcast %201 : vector<8x1xi32> to vector<8x7xi32>
    %216 = arith.cmpi eq, %23, %215 : vector<8x7xi32>
    %217 = arith.extui %216 : vector<8x7xi1> to vector<8x7xi32>
    %218 = arith.sitofp %217 : vector<8x7xi32> to vector<8x7xf32>
    %219 = vector.shape_cast %214 : vector<8x1xf32> to vector<8x1xf32>
    %220 = vector.broadcast %219 : vector<8x1xf32> to vector<8x7xf32>
    %221 = arith.select %25, %220, %218 : vector<8x7xi1>, vector<8x7xf32>
    %cst_92 = arith.constant dense<0.000000e+00> : vector<8x128xf32>
    %222 = tpu.matmul %221, %0, %cst_92 {dimension_numbers = #tpu.dot_dimension_numbers<[1], [0], [0], [1], [0, 0, 1, 1], [], []>} : vector<8x7xf32>, vector<7x128xf32>, vector<8x128xf32> -> vector<8x128xf32>
    %cst_93 = arith.constant dense<0.000000e+00> : vector<8x128xf32>
    %223 = tpu.matmul %155, %1, %cst_93 {dimension_numbers = #tpu.dot_dimension_numbers<[1], [0], [0], [1], [0, 0, 1, 1], [], []>} : vector<8x32xf32>, vector<32x128xf32>, vector<8x128xf32> -> vector<8x128xf32>
    %224 = arith.addf %222, %223 : vector<8x128xf32>
    %225 = vector.broadcast %5 : vector<1x128xf32> to vector<8x128xf32>
    %226 = arith.addf %224, %225 : vector<8x128xf32>
    %cst_94 = arith.constant 5.000000e-01 : f32
    %227 = vector.broadcast %cst_94 : f32 to vector<8x128xf32>
    %228 = arith.mulf %227, %226 : vector<8x128xf32>
    %229 = math.tanh %228 : vector<8x128xf32>
    %cst_95 = arith.constant 5.000000e-01 : f32
    %230 = vector.broadcast %cst_95 : f32 to vector<8x128xf32>
    %231 = arith.mulf %230, %229 : vector<8x128xf32>
    %cst_96 = arith.constant 5.000000e-01 : f32
    %232 = vector.broadcast %cst_96 : f32 to vector<8x128xf32>
    %233 = arith.addf %231, %232 : vector<8x128xf32>
    %234 = math.tanh %226 : vector<8x128xf32>
    %235 = vector.extract_strided_slice %233 {offsets = [0, 0], sizes = [8, 32], strides = [1, 1]} : vector<8x128xf32> to vector<8x32xf32>
    %236 = vector.extract_strided_slice %233 {offsets = [0, 32], sizes = [8, 32], strides = [1, 1]} : vector<8x128xf32> to vector<8x32xf32>
    %237 = vector.extract_strided_slice %234 {offsets = [0, 64], sizes = [8, 32], strides = [1, 1]} : vector<8x128xf32> to vector<8x32xf32>
    %238 = vector.extract_strided_slice %233 {offsets = [0, 96], sizes = [8, 32], strides = [1, 1]} : vector<8x128xf32> to vector<8x32xf32>
    %239 = arith.mulf %236, %153 : vector<8x32xf32>
    %240 = arith.mulf %235, %237 : vector<8x32xf32>
    %241 = arith.addf %239, %240 : vector<8x32xf32>
    %242 = math.tanh %241 : vector<8x32xf32>
    %243 = arith.mulf %238, %242 : vector<8x32xf32>
    %244 = tpu.concatenate %243, %176 in 1 : vector<8x32xf32>, vector<8x32xf32> -> vector<8x64xf32>
    %cst_97 = arith.constant dense<0.000000e+00> : vector<8x128xf32>
    %245 = tpu.matmul %244, %3, %cst_97 {dimension_numbers = #tpu.dot_dimension_numbers<[1], [0], [0], [1], [0, 0, 1, 1], [], []>} : vector<8x64xf32>, vector<64x128xf32>, vector<8x128xf32> -> vector<8x128xf32>
    %246 = vector.broadcast %7 : vector<1x128xf32> to vector<8x128xf32>
    %247 = arith.addf %245, %246 : vector<8x128xf32>
    %cst_98 = arith.constant 5.000000e-01 : f32
    %248 = vector.broadcast %cst_98 : f32 to vector<8x128xf32>
    %249 = arith.mulf %248, %247 : vector<8x128xf32>
    %250 = math.tanh %249 : vector<8x128xf32>
    %cst_99 = arith.constant 5.000000e-01 : f32
    %251 = vector.broadcast %cst_99 : f32 to vector<8x128xf32>
    %252 = arith.mulf %251, %250 : vector<8x128xf32>
    %cst_100 = arith.constant 5.000000e-01 : f32
    %253 = vector.broadcast %cst_100 : f32 to vector<8x128xf32>
    %254 = arith.addf %252, %253 : vector<8x128xf32>
    %255 = math.tanh %247 : vector<8x128xf32>
    %256 = vector.extract_strided_slice %254 {offsets = [0, 0], sizes = [8, 32], strides = [1, 1]} : vector<8x128xf32> to vector<8x32xf32>
    %257 = vector.extract_strided_slice %254 {offsets = [0, 32], sizes = [8, 32], strides = [1, 1]} : vector<8x128xf32> to vector<8x32xf32>
    %258 = vector.extract_strided_slice %255 {offsets = [0, 64], sizes = [8, 32], strides = [1, 1]} : vector<8x128xf32> to vector<8x32xf32>
    %259 = vector.extract_strided_slice %254 {offsets = [0, 96], sizes = [8, 32], strides = [1, 1]} : vector<8x128xf32> to vector<8x32xf32>
    %260 = arith.mulf %257, %174 : vector<8x32xf32>
    %261 = arith.mulf %256, %258 : vector<8x32xf32>
    %262 = arith.addf %260, %261 : vector<8x32xf32>
    %263 = math.tanh %262 : vector<8x32xf32>
    %264 = arith.mulf %259, %263 : vector<8x32xf32>
    %265 = arith.addf %264, %22 : vector<8x32xf32>
    %cst_101 = arith.constant dense<0.000000e+00> : vector<8x32xf32>
    %266 = tpu.matmul %265, %8, %cst_101 {dimension_numbers = #tpu.dot_dimension_numbers<[1], [0], [0], [1], [0, 0, 1, 1], [], []>} : vector<8x32xf32>, vector<32x32xf32>, vector<8x32xf32> -> vector<8x32xf32>
    %267 = vector.broadcast %9 : vector<1x32xf32> to vector<8x32xf32>
    %268 = arith.addf %266, %267 : vector<8x32xf32>
    %cst_102 = arith.constant 0.000000e+00 : f32
    %269 = vector.broadcast %cst_102 : f32 to vector<8x32xf32>
    %270 = arith.cmpf ogt, %268, %269 : vector<8x32xf32>
    %cst_103 = arith.constant 0.00999999977 : f32
    %271 = vector.broadcast %cst_103 : f32 to vector<8x32xf32>
    %272 = arith.mulf %271, %268 : vector<8x32xf32>
    %273 = arith.select %270, %268, %272 : vector<8x32xi1>, vector<8x32xf32>
    %cst_104 = arith.constant dense<0.000000e+00> : vector<8x128xf32>
    %274 = tpu.matmul %273, %10, %cst_104 {dimension_numbers = #tpu.dot_dimension_numbers<[1], [0], [0], [1], [0, 0, 1, 1], [], []>} : vector<8x32xf32>, vector<32x128xf32>, vector<8x128xf32> -> vector<8x128xf32>
    %275 = vector.broadcast %11 : vector<1x128xf32> to vector<8x128xf32>
    %276 = arith.addf %274, %275 : vector<8x128xf32>
    %c2 = arith.constant 2 : index
    %c0_105 = arith.constant 0 : index
    %c0_106 = arith.constant 0 : index
    %277 = vector.load %arg14[%c2, %c0_105, %c0_106] : memref<8x8x128xf32, #tpu.memory_space<vmem>>, vector<1x8x128xf32>
    %278 = vector.shape_cast %277 : vector<1x8x128xf32> to vector<8x128xf32>
    %279 = vector.shape_cast %276 : vector<8x128xf32> to vector<1x8x128xf32>
    tpu.vector_store %arg14[%c2, %c0_105, %c0_106], %279 {strides = array<i32>} : memref<8x8x128xf32, #tpu.memory_space<vmem>>, vector<1x8x128xf32>,
    %cst_107 = arith.constant 0xFF800000 : f32
    %280 = vector.broadcast %cst_107 : f32 to vector<8x128xf32>
    %281 = arith.select %28, %276, %280 : vector<8x128xi1>, vector<8x128xf32>
    %cst_108 = arith.constant dense<0xFF800000> : vector<8xf32>
    %282 = vector.multi_reduction <maximumf>, %281, %cst_108 [1] : vector<8x128xf32> to vector<8xf32>
    %283 = vector.shape_cast %282 : vector<8xf32> to vector<8x1xf32>
    %284 = vector.broadcast %283 : vector<8x1xf32> to vector<8x128xf32>
    %285 = arith.cmpf oeq, %281, %284 : vector<8x128xf32>
    %c128_i32_109 = arith.constant 128 : i32
    %286 = vector.broadcast %c128_i32_109 : i32 to vector<8x128xi32>
    %287 = arith.select %285, %26, %286 : vector<8x128xi1>, vector<8x128xi32>
    %cst_110 = arith.constant dense<2147483647> : vector<8xi32>
    %288 = vector.multi_reduction <minsi>, %287, %cst_110 [1] : vector<8x128xi32> to vector<8xi32>
    %289 = vector.shape_cast %288 : vector<8xi32> to vector<8x1xi32>
    %c6_i32_111 = arith.constant 6 : i32
    %290 = vector.broadcast %c6_i32_111 : i32 to vector<8x128xi32>
    %291 = arith.cmpi eq, %26, %290 : vector<8x128xi32>
    %cst_112 = arith.constant 0.000000e+00 : f32
    %292 = vector.broadcast %cst_112 : f32 to vector<8x128xf32>
    %293 = arith.select %291, %276, %292 : vector<8x128xi1>, vector<8x128xf32>
    %cst_113 = arith.constant dense<0.000000e+00> : vector<8xf32>
    %294 = vector.multi_reduction <add>, %293, %cst_113 [1] : vector<8x128xf32> to vector<8xf32>
    %295 = vector.shape_cast %294 : vector<8xf32> to vector<8x1xf32>
    %cst_114 = arith.constant 5.000000e-01 : f32
    %296 = vector.broadcast %cst_114 : f32 to vector<8x1xf32>
    %297 = arith.mulf %296, %295 : vector<8x1xf32>
    %298 = math.tanh %297 : vector<8x1xf32>
    %cst_115 = arith.constant 5.000000e-01 : f32
    %299 = vector.broadcast %cst_115 : f32 to vector<8x1xf32>
    %300 = arith.mulf %299, %298 : vector<8x1xf32>
    %cst_116 = arith.constant 5.000000e-01 : f32
    %301 = vector.broadcast %cst_116 : f32 to vector<8x1xf32>
    %302 = arith.addf %300, %301 : vector<8x1xf32>
    %303 = vector.broadcast %289 : vector<8x1xi32> to vector<8x7xi32>
    %304 = arith.cmpi eq, %23, %303 : vector<8x7xi32>
    %305 = arith.extui %304 : vector<8x7xi1> to vector<8x7xi32>
    %306 = arith.sitofp %305 : vector<8x7xi32> to vector<8x7xf32>
    %307 = vector.shape_cast %302 : vector<8x1xf32> to vector<8x1xf32>
    %308 = vector.broadcast %307 : vector<8x1xf32> to vector<8x7xf32>
    %309 = arith.select %25, %308, %306 : vector<8x7xi1>, vector<8x7xf32>
    %cst_117 = arith.constant dense<0.000000e+00> : vector<8x128xf32>
    %310 = tpu.matmul %309, %0, %cst_117 {dimension_numbers = #tpu.dot_dimension_numbers<[1], [0], [0], [1], [0, 0, 1, 1], [], []>} : vector<8x7xf32>, vector<7x128xf32>, vector<8x128xf32> -> vector<8x128xf32>
    %cst_118 = arith.constant dense<0.000000e+00> : vector<8x128xf32>
    %311 = tpu.matmul %243, %1, %cst_118 {dimension_numbers = #tpu.dot_dimension_numbers<[1], [0], [0], [1], [0, 0, 1, 1], [], []>} : vector<8x32xf32>, vector<32x128xf32>, vector<8x128xf32> -> vector<8x128xf32>
    %312 = arith.addf %310, %311 : vector<8x128xf32>
    %313 = vector.broadcast %5 : vector<1x128xf32> to vector<8x128xf32>
    %314 = arith.addf %312, %313 : vector<8x128xf32>
    %cst_119 = arith.constant 5.000000e-01 : f32
    %315 = vector.broadcast %cst_119 : f32 to vector<8x128xf32>
    %316 = arith.mulf %315, %314 : vector<8x128xf32>
    %317 = math.tanh %316 : vector<8x128xf32>
    %cst_120 = arith.constant 5.000000e-01 : f32
    %318 = vector.broadcast %cst_120 : f32 to vector<8x128xf32>
    %319 = arith.mulf %318, %317 : vector<8x128xf32>
    %cst_121 = arith.constant 5.000000e-01 : f32
    %320 = vector.broadcast %cst_121 : f32 to vector<8x128xf32>
    %321 = arith.addf %319, %320 : vector<8x128xf32>
    %322 = math.tanh %314 : vector<8x128xf32>
    %323 = vector.extract_strided_slice %321 {offsets = [0, 0], sizes = [8, 32], strides = [1, 1]} : vector<8x128xf32> to vector<8x32xf32>
    %324 = vector.extract_strided_slice %321 {offsets = [0, 32], sizes = [8, 32], strides = [1, 1]} : vector<8x128xf32> to vector<8x32xf32>
    %325 = vector.extract_strided_slice %322 {offsets = [0, 64], sizes = [8, 32], strides = [1, 1]} : vector<8x128xf32> to vector<8x32xf32>
    %326 = vector.extract_strided_slice %321 {offsets = [0, 96], sizes = [8, 32], strides = [1, 1]} : vector<8x128xf32> to vector<8x32xf32>
    %327 = arith.mulf %324, %241 : vector<8x32xf32>
    %328 = arith.mulf %323, %325 : vector<8x32xf32>
    %329 = arith.addf %327, %328 : vector<8x32xf32>
    %330 = math.tanh %329 : vector<8x32xf32>
    %331 = arith.mulf %326, %330 : vector<8x32xf32>
    %332 = tpu.concatenate %331, %264 in 1 : vector<8x32xf32>, vector<8x32xf32> -> vector<8x64xf32>
    %cst_122 = arith.constant dense<0.000000e+00> : vector<8x128xf32>
    %333 = tpu.matmul %332, %3, %cst_122 {dimension_numbers = #tpu.dot_dimension_numbers<[1], [0], [0], [1], [0, 0, 1, 1], [], []>} : vector<8x64xf32>, vector<64x128xf32>, vector<8x128xf32> -> vector<8x128xf32>
    %334 = vector.broadcast %7 : vector<1x128xf32> to vector<8x128xf32>
    %335 = arith.addf %333, %334 : vector<8x128xf32>
    %cst_123 = arith.constant 5.000000e-01 : f32
    %336 = vector.broadcast %cst_123 : f32 to vector<8x128xf32>
    %337 = arith.mulf %336, %335 : vector<8x128xf32>
    %338 = math.tanh %337 : vector<8x128xf32>
    %cst_124 = arith.constant 5.000000e-01 : f32
    %339 = vector.broadcast %cst_124 : f32 to vector<8x128xf32>
    %340 = arith.mulf %339, %338 : vector<8x128xf32>
    %cst_125 = arith.constant 5.000000e-01 : f32
    %341 = vector.broadcast %cst_125 : f32 to vector<8x128xf32>
    %342 = arith.addf %340, %341 : vector<8x128xf32>
    %343 = math.tanh %335 : vector<8x128xf32>
    %344 = vector.extract_strided_slice %342 {offsets = [0, 0], sizes = [8, 32], strides = [1, 1]} : vector<8x128xf32> to vector<8x32xf32>
    %345 = vector.extract_strided_slice %342 {offsets = [0, 32], sizes = [8, 32], strides = [1, 1]} : vector<8x128xf32> to vector<8x32xf32>
    %346 = vector.extract_strided_slice %343 {offsets = [0, 64], sizes = [8, 32], strides = [1, 1]} : vector<8x128xf32> to vector<8x32xf32>
    %347 = vector.extract_strided_slice %342 {offsets = [0, 96], sizes = [8, 32], strides = [1, 1]} : vector<8x128xf32> to vector<8x32xf32>
    %348 = arith.mulf %345, %262 : vector<8x32xf32>
    %349 = arith.mulf %344, %346 : vector<8x32xf32>
    %350 = arith.addf %348, %349 : vector<8x32xf32>
    %351 = math.tanh %350 : vector<8x32xf32>
    %352 = arith.mulf %347, %351 : vector<8x32xf32>
    %353 = arith.addf %352, %22 : vector<8x32xf32>
    %cst_126 = arith.constant dense<0.000000e+00> : vector<8x32xf32>
    %354 = tpu.matmul %353, %8, %cst_126 {dimension_numbers = #tpu.dot_dimension_numbers<[1], [0], [0], [1], [0, 0, 1, 1], [], []>} : vector<8x32xf32>, vector<32x32xf32>, vector<8x32xf32> -> vector<8x32xf32>
    %355 = vector.broadcast %9 : vector<1x32xf32> to vector<8x32xf32>
    %356 = arith.addf %354, %355 : vector<8x32xf32>
    %cst_127 = arith.constant 0.000000e+00 : f32
    %357 = vector.broadcast %cst_127 : f32 to vector<8x32xf32>
    %358 = arith.cmpf ogt, %356, %357 : vector<8x32xf32>
    %cst_128 = arith.constant 0.00999999977 : f32
    %359 = vector.broadcast %cst_128 : f32 to vector<8x32xf32>
    %360 = arith.mulf %359, %356 : vector<8x32xf32>
    %361 = arith.select %358, %356, %360 : vector<8x32xi1>, vector<8x32xf32>
    %cst_129 = arith.constant dense<0.000000e+00> : vector<8x128xf32>
    %362 = tpu.matmul %361, %10, %cst_129 {dimension_numbers = #tpu.dot_dimension_numbers<[1], [0], [0], [1], [0, 0, 1, 1], [], []>} : vector<8x32xf32>, vector<32x128xf32>, vector<8x128xf32> -> vector<8x128xf32>
    %363 = vector.broadcast %11 : vector<1x128xf32> to vector<8x128xf32>
    %364 = arith.addf %362, %363 : vector<8x128xf32>
    %c3 = arith.constant 3 : index
    %c0_130 = arith.constant 0 : index
    %c0_131 = arith.constant 0 : index
    %365 = vector.load %arg14[%c3, %c0_130, %c0_131] : memref<8x8x128xf32, #tpu.memory_space<vmem>>, vector<1x8x128xf32>
    %366 = vector.shape_cast %365 : vector<1x8x128xf32> to vector<8x128xf32>
    %367 = vector.shape_cast %364 : vector<8x128xf32> to vector<1x8x128xf32>
    tpu.vector_store %arg14[%c3, %c0_130, %c0_131], %367 {strides = array<i32>} : memref<8x8x128xf32, #tpu.memory_space<vmem>>, vector<1x8x128xf32>,
    %cst_132 = arith.constant 0xFF800000 : f32
    %368 = vector.broadcast %cst_132 : f32 to vector<8x128xf32>
    %369 = arith.select %28, %364, %368 : vector<8x128xi1>, vector<8x128xf32>
    %cst_133 = arith.constant dense<0xFF800000> : vector<8xf32>
    %370 = vector.multi_reduction <maximumf>, %369, %cst_133 [1] : vector<8x128xf32> to vector<8xf32>
    %371 = vector.shape_cast %370 : vector<8xf32> to vector<8x1xf32>
    %372 = vector.broadcast %371 : vector<8x1xf32> to vector<8x128xf32>
    %373 = arith.cmpf oeq, %369, %372 : vector<8x128xf32>
    %c128_i32_134 = arith.constant 128 : i32
    %374 = vector.broadcast %c128_i32_134 : i32 to vector<8x128xi32>
    %375 = arith.select %373, %26, %374 : vector<8x128xi1>, vector<8x128xi32>
    %cst_135 = arith.constant dense<2147483647> : vector<8xi32>
    %376 = vector.multi_reduction <minsi>, %375, %cst_135 [1] : vector<8x128xi32> to vector<8xi32>
    %377 = vector.shape_cast %376 : vector<8xi32> to vector<8x1xi32>
    %c6_i32_136 = arith.constant 6 : i32
    %378 = vector.broadcast %c6_i32_136 : i32 to vector<8x128xi32>
    %379 = arith.cmpi eq, %26, %378 : vector<8x128xi32>
    %cst_137 = arith.constant 0.000000e+00 : f32
    %380 = vector.broadcast %cst_137 : f32 to vector<8x128xf32>
    %381 = arith.select %379, %364, %380 : vector<8x128xi1>, vector<8x128xf32>
    %cst_138 = arith.constant dense<0.000000e+00> : vector<8xf32>
    %382 = vector.multi_reduction <add>, %381, %cst_138 [1] : vector<8x128xf32> to vector<8xf32>
    %383 = vector.shape_cast %382 : vector<8xf32> to vector<8x1xf32>
    %cst_139 = arith.constant 5.000000e-01 : f32
    %384 = vector.broadcast %cst_139 : f32 to vector<8x1xf32>
    %385 = arith.mulf %384, %383 : vector<8x1xf32>
    %386 = math.tanh %385 : vector<8x1xf32>
    %cst_140 = arith.constant 5.000000e-01 : f32
    %387 = vector.broadcast %cst_140 : f32 to vector<8x1xf32>
    %388 = arith.mulf %387, %386 : vector<8x1xf32>
    %cst_141 = arith.constant 5.000000e-01 : f32
    %389 = vector.broadcast %cst_141 : f32 to vector<8x1xf32>
    %390 = arith.addf %388, %389 : vector<8x1xf32>
    %391 = vector.broadcast %377 : vector<8x1xi32> to vector<8x7xi32>
    %392 = arith.cmpi eq, %23, %391 : vector<8x7xi32>
    %393 = arith.extui %392 : vector<8x7xi1> to vector<8x7xi32>
    %394 = arith.sitofp %393 : vector<8x7xi32> to vector<8x7xf32>
    %395 = vector.shape_cast %390 : vector<8x1xf32> to vector<8x1xf32>
    %396 = vector.broadcast %395 : vector<8x1xf32> to vector<8x7xf32>
    %397 = arith.select %25, %396, %394 : vector<8x7xi1>, vector<8x7xf32>
    %cst_142 = arith.constant dense<0.000000e+00> : vector<8x128xf32>
    %398 = tpu.matmul %397, %0, %cst_142 {dimension_numbers = #tpu.dot_dimension_numbers<[1], [0], [0], [1], [0, 0, 1, 1], [], []>} : vector<8x7xf32>, vector<7x128xf32>, vector<8x128xf32> -> vector<8x128xf32>
    %cst_143 = arith.constant dense<0.000000e+00> : vector<8x128xf32>
    %399 = tpu.matmul %331, %1, %cst_143 {dimension_numbers = #tpu.dot_dimension_numbers<[1], [0], [0], [1], [0, 0, 1, 1], [], []>} : vector<8x32xf32>, vector<32x128xf32>, vector<8x128xf32> -> vector<8x128xf32>
    %400 = arith.addf %398, %399 : vector<8x128xf32>
    %401 = vector.broadcast %5 : vector<1x128xf32> to vector<8x128xf32>
    %402 = arith.addf %400, %401 : vector<8x128xf32>
    %cst_144 = arith.constant 5.000000e-01 : f32
    %403 = vector.broadcast %cst_144 : f32 to vector<8x128xf32>
    %404 = arith.mulf %403, %402 : vector<8x128xf32>
    %405 = math.tanh %404 : vector<8x128xf32>
    %cst_145 = arith.constant 5.000000e-01 : f32
    %406 = vector.broadcast %cst_145 : f32 to vector<8x128xf32>
    %407 = arith.mulf %406, %405 : vector<8x128xf32>
    %cst_146 = arith.constant 5.000000e-01 : f32
    %408 = vector.broadcast %cst_146 : f32 to vector<8x128xf32>
    %409 = arith.addf %407, %408 : vector<8x128xf32>
    %410 = math.tanh %402 : vector<8x128xf32>
    %411 = vector.extract_strided_slice %409 {offsets = [0, 0], sizes = [8, 32], strides = [1, 1]} : vector<8x128xf32> to vector<8x32xf32>
    %412 = vector.extract_strided_slice %409 {offsets = [0, 32], sizes = [8, 32], strides = [1, 1]} : vector<8x128xf32> to vector<8x32xf32>
    %413 = vector.extract_strided_slice %410 {offsets = [0, 64], sizes = [8, 32], strides = [1, 1]} : vector<8x128xf32> to vector<8x32xf32>
    %414 = vector.extract_strided_slice %409 {offsets = [0, 96], sizes = [8, 32], strides = [1, 1]} : vector<8x128xf32> to vector<8x32xf32>
    %415 = arith.mulf %412, %329 : vector<8x32xf32>
    %416 = arith.mulf %411, %413 : vector<8x32xf32>
    %417 = arith.addf %415, %416 : vector<8x32xf32>
    %418 = math.tanh %417 : vector<8x32xf32>
    %419 = arith.mulf %414, %418 : vector<8x32xf32>
    %420 = tpu.concatenate %419, %352 in 1 : vector<8x32xf32>, vector<8x32xf32> -> vector<8x64xf32>
    %cst_147 = arith.constant dense<0.000000e+00> : vector<8x128xf32>
    %421 = tpu.matmul %420, %3, %cst_147 {dimension_numbers = #tpu.dot_dimension_numbers<[1], [0], [0], [1], [0, 0, 1, 1], [], []>} : vector<8x64xf32>, vector<64x128xf32>, vector<8x128xf32> -> vector<8x128xf32>
    %422 = vector.broadcast %7 : vector<1x128xf32> to vector<8x128xf32>
    %423 = arith.addf %421, %422 : vector<8x128xf32>
    %cst_148 = arith.constant 5.000000e-01 : f32
    %424 = vector.broadcast %cst_148 : f32 to vector<8x128xf32>
    %425 = arith.mulf %424, %423 : vector<8x128xf32>
    %426 = math.tanh %425 : vector<8x128xf32>
    %cst_149 = arith.constant 5.000000e-01 : f32
    %427 = vector.broadcast %cst_149 : f32 to vector<8x128xf32>
    %428 = arith.mulf %427, %426 : vector<8x128xf32>
    %cst_150 = arith.constant 5.000000e-01 : f32
    %429 = vector.broadcast %cst_150 : f32 to vector<8x128xf32>
    %430 = arith.addf %428, %429 : vector<8x128xf32>
    %431 = math.tanh %423 : vector<8x128xf32>
    %432 = vector.extract_strided_slice %430 {offsets = [0, 0], sizes = [8, 32], strides = [1, 1]} : vector<8x128xf32> to vector<8x32xf32>
    %433 = vector.extract_strided_slice %430 {offsets = [0, 32], sizes = [8, 32], strides = [1, 1]} : vector<8x128xf32> to vector<8x32xf32>
    %434 = vector.extract_strided_slice %431 {offsets = [0, 64], sizes = [8, 32], strides = [1, 1]} : vector<8x128xf32> to vector<8x32xf32>
    %435 = vector.extract_strided_slice %430 {offsets = [0, 96], sizes = [8, 32], strides = [1, 1]} : vector<8x128xf32> to vector<8x32xf32>
    %436 = arith.mulf %433, %350 : vector<8x32xf32>
    %437 = arith.mulf %432, %434 : vector<8x32xf32>
    %438 = arith.addf %436, %437 : vector<8x32xf32>
    %439 = math.tanh %438 : vector<8x32xf32>
    %440 = arith.mulf %435, %439 : vector<8x32xf32>
    %441 = arith.addf %440, %22 : vector<8x32xf32>
    %cst_151 = arith.constant dense<0.000000e+00> : vector<8x32xf32>
    %442 = tpu.matmul %441, %8, %cst_151 {dimension_numbers = #tpu.dot_dimension_numbers<[1], [0], [0], [1], [0, 0, 1, 1], [], []>} : vector<8x32xf32>, vector<32x32xf32>, vector<8x32xf32> -> vector<8x32xf32>
    %443 = vector.broadcast %9 : vector<1x32xf32> to vector<8x32xf32>
    %444 = arith.addf %442, %443 : vector<8x32xf32>
    %cst_152 = arith.constant 0.000000e+00 : f32
    %445 = vector.broadcast %cst_152 : f32 to vector<8x32xf32>
    %446 = arith.cmpf ogt, %444, %445 : vector<8x32xf32>
    %cst_153 = arith.constant 0.00999999977 : f32
    %447 = vector.broadcast %cst_153 : f32 to vector<8x32xf32>
    %448 = arith.mulf %447, %444 : vector<8x32xf32>
    %449 = arith.select %446, %444, %448 : vector<8x32xi1>, vector<8x32xf32>
    %cst_154 = arith.constant dense<0.000000e+00> : vector<8x128xf32>
    %450 = tpu.matmul %449, %10, %cst_154 {dimension_numbers = #tpu.dot_dimension_numbers<[1], [0], [0], [1], [0, 0, 1, 1], [], []>} : vector<8x32xf32>, vector<32x128xf32>, vector<8x128xf32> -> vector<8x128xf32>
    %451 = vector.broadcast %11 : vector<1x128xf32> to vector<8x128xf32>
    %452 = arith.addf %450, %451 : vector<8x128xf32>
    %c4 = arith.constant 4 : index
    %c0_155 = arith.constant 0 : index
    %c0_156 = arith.constant 0 : index
    %453 = vector.load %arg14[%c4, %c0_155, %c0_156] : memref<8x8x128xf32, #tpu.memory_space<vmem>>, vector<1x8x128xf32>
    %454 = vector.shape_cast %453 : vector<1x8x128xf32> to vector<8x128xf32>
    %455 = vector.shape_cast %452 : vector<8x128xf32> to vector<1x8x128xf32>
    tpu.vector_store %arg14[%c4, %c0_155, %c0_156], %455 {strides = array<i32>} : memref<8x8x128xf32, #tpu.memory_space<vmem>>, vector<1x8x128xf32>,
    %cst_157 = arith.constant 0xFF800000 : f32
    %456 = vector.broadcast %cst_157 : f32 to vector<8x128xf32>
    %457 = arith.select %28, %452, %456 : vector<8x128xi1>, vector<8x128xf32>
    %cst_158 = arith.constant dense<0xFF800000> : vector<8xf32>
    %458 = vector.multi_reduction <maximumf>, %457, %cst_158 [1] : vector<8x128xf32> to vector<8xf32>
    %459 = vector.shape_cast %458 : vector<8xf32> to vector<8x1xf32>
    %460 = vector.broadcast %459 : vector<8x1xf32> to vector<8x128xf32>
    %461 = arith.cmpf oeq, %457, %460 : vector<8x128xf32>
    %c128_i32_159 = arith.constant 128 : i32
    %462 = vector.broadcast %c128_i32_159 : i32 to vector<8x128xi32>
    %463 = arith.select %461, %26, %462 : vector<8x128xi1>, vector<8x128xi32>
    %cst_160 = arith.constant dense<2147483647> : vector<8xi32>
    %464 = vector.multi_reduction <minsi>, %463, %cst_160 [1] : vector<8x128xi32> to vector<8xi32>
    %465 = vector.shape_cast %464 : vector<8xi32> to vector<8x1xi32>
    %c6_i32_161 = arith.constant 6 : i32
    %466 = vector.broadcast %c6_i32_161 : i32 to vector<8x128xi32>
    %467 = arith.cmpi eq, %26, %466 : vector<8x128xi32>
    %cst_162 = arith.constant 0.000000e+00 : f32
    %468 = vector.broadcast %cst_162 : f32 to vector<8x128xf32>
    %469 = arith.select %467, %452, %468 : vector<8x128xi1>, vector<8x128xf32>
    %cst_163 = arith.constant dense<0.000000e+00> : vector<8xf32>
    %470 = vector.multi_reduction <add>, %469, %cst_163 [1] : vector<8x128xf32> to vector<8xf32>
    %471 = vector.shape_cast %470 : vector<8xf32> to vector<8x1xf32>
    %cst_164 = arith.constant 5.000000e-01 : f32
    %472 = vector.broadcast %cst_164 : f32 to vector<8x1xf32>
    %473 = arith.mulf %472, %471 : vector<8x1xf32>
    %474 = math.tanh %473 : vector<8x1xf32>
    %cst_165 = arith.constant 5.000000e-01 : f32
    %475 = vector.broadcast %cst_165 : f32 to vector<8x1xf32>
    %476 = arith.mulf %475, %474 : vector<8x1xf32>
    %cst_166 = arith.constant 5.000000e-01 : f32
    %477 = vector.broadcast %cst_166 : f32 to vector<8x1xf32>
    %478 = arith.addf %476, %477 : vector<8x1xf32>
    %479 = vector.broadcast %465 : vector<8x1xi32> to vector<8x7xi32>
    %480 = arith.cmpi eq, %23, %479 : vector<8x7xi32>
    %481 = arith.extui %480 : vector<8x7xi1> to vector<8x7xi32>
    %482 = arith.sitofp %481 : vector<8x7xi32> to vector<8x7xf32>
    %483 = vector.shape_cast %478 : vector<8x1xf32> to vector<8x1xf32>
    %484 = vector.broadcast %483 : vector<8x1xf32> to vector<8x7xf32>
    %485 = arith.select %25, %484, %482 : vector<8x7xi1>, vector<8x7xf32>
    %cst_167 = arith.constant dense<0.000000e+00> : vector<8x128xf32>
    %486 = tpu.matmul %485, %0, %cst_167 {dimension_numbers = #tpu.dot_dimension_numbers<[1], [0], [0], [1], [0, 0, 1, 1], [], []>} : vector<8x7xf32>, vector<7x128xf32>, vector<8x128xf32> -> vector<8x128xf32>
    %cst_168 = arith.constant dense<0.000000e+00> : vector<8x128xf32>
    %487 = tpu.matmul %419, %1, %cst_168 {dimension_numbers = #tpu.dot_dimension_numbers<[1], [0], [0], [1], [0, 0, 1, 1], [], []>} : vector<8x32xf32>, vector<32x128xf32>, vector<8x128xf32> -> vector<8x128xf32>
    %488 = arith.addf %486, %487 : vector<8x128xf32>
    %489 = vector.broadcast %5 : vector<1x128xf32> to vector<8x128xf32>
    %490 = arith.addf %488, %489 : vector<8x128xf32>
    %cst_169 = arith.constant 5.000000e-01 : f32
    %491 = vector.broadcast %cst_169 : f32 to vector<8x128xf32>
    %492 = arith.mulf %491, %490 : vector<8x128xf32>
    %493 = math.tanh %492 : vector<8x128xf32>
    %cst_170 = arith.constant 5.000000e-01 : f32
    %494 = vector.broadcast %cst_170 : f32 to vector<8x128xf32>
    %495 = arith.mulf %494, %493 : vector<8x128xf32>
    %cst_171 = arith.constant 5.000000e-01 : f32
    %496 = vector.broadcast %cst_171 : f32 to vector<8x128xf32>
    %497 = arith.addf %495, %496 : vector<8x128xf32>
    %498 = math.tanh %490 : vector<8x128xf32>
    %499 = vector.extract_strided_slice %497 {offsets = [0, 0], sizes = [8, 32], strides = [1, 1]} : vector<8x128xf32> to vector<8x32xf32>
    %500 = vector.extract_strided_slice %497 {offsets = [0, 32], sizes = [8, 32], strides = [1, 1]} : vector<8x128xf32> to vector<8x32xf32>
    %501 = vector.extract_strided_slice %498 {offsets = [0, 64], sizes = [8, 32], strides = [1, 1]} : vector<8x128xf32> to vector<8x32xf32>
    %502 = vector.extract_strided_slice %497 {offsets = [0, 96], sizes = [8, 32], strides = [1, 1]} : vector<8x128xf32> to vector<8x32xf32>
    %503 = arith.mulf %500, %417 : vector<8x32xf32>
    %504 = arith.mulf %499, %501 : vector<8x32xf32>
    %505 = arith.addf %503, %504 : vector<8x32xf32>
    %506 = math.tanh %505 : vector<8x32xf32>
    %507 = arith.mulf %502, %506 : vector<8x32xf32>
    %508 = tpu.concatenate %507, %440 in 1 : vector<8x32xf32>, vector<8x32xf32> -> vector<8x64xf32>
    %cst_172 = arith.constant dense<0.000000e+00> : vector<8x128xf32>
    %509 = tpu.matmul %508, %3, %cst_172 {dimension_numbers = #tpu.dot_dimension_numbers<[1], [0], [0], [1], [0, 0, 1, 1], [], []>} : vector<8x64xf32>, vector<64x128xf32>, vector<8x128xf32> -> vector<8x128xf32>
    %510 = vector.broadcast %7 : vector<1x128xf32> to vector<8x128xf32>
    %511 = arith.addf %509, %510 : vector<8x128xf32>
    %cst_173 = arith.constant 5.000000e-01 : f32
    %512 = vector.broadcast %cst_173 : f32 to vector<8x128xf32>
    %513 = arith.mulf %512, %511 : vector<8x128xf32>
    %514 = math.tanh %513 : vector<8x128xf32>
    %cst_174 = arith.constant 5.000000e-01 : f32
    %515 = vector.broadcast %cst_174 : f32 to vector<8x128xf32>
    %516 = arith.mulf %515, %514 : vector<8x128xf32>
    %cst_175 = arith.constant 5.000000e-01 : f32
    %517 = vector.broadcast %cst_175 : f32 to vector<8x128xf32>
    %518 = arith.addf %516, %517 : vector<8x128xf32>
    %519 = math.tanh %511 : vector<8x128xf32>
    %520 = vector.extract_strided_slice %518 {offsets = [0, 0], sizes = [8, 32], strides = [1, 1]} : vector<8x128xf32> to vector<8x32xf32>
    %521 = vector.extract_strided_slice %518 {offsets = [0, 32], sizes = [8, 32], strides = [1, 1]} : vector<8x128xf32> to vector<8x32xf32>
    %522 = vector.extract_strided_slice %519 {offsets = [0, 64], sizes = [8, 32], strides = [1, 1]} : vector<8x128xf32> to vector<8x32xf32>
    %523 = vector.extract_strided_slice %518 {offsets = [0, 96], sizes = [8, 32], strides = [1, 1]} : vector<8x128xf32> to vector<8x32xf32>
    %524 = arith.mulf %521, %438 : vector<8x32xf32>
    %525 = arith.mulf %520, %522 : vector<8x32xf32>
    %526 = arith.addf %524, %525 : vector<8x32xf32>
    %527 = math.tanh %526 : vector<8x32xf32>
    %528 = arith.mulf %523, %527 : vector<8x32xf32>
    %529 = arith.addf %528, %22 : vector<8x32xf32>
    %cst_176 = arith.constant dense<0.000000e+00> : vector<8x32xf32>
    %530 = tpu.matmul %529, %8, %cst_176 {dimension_numbers = #tpu.dot_dimension_numbers<[1], [0], [0], [1], [0, 0, 1, 1], [], []>} : vector<8x32xf32>, vector<32x32xf32>, vector<8x32xf32> -> vector<8x32xf32>
    %531 = vector.broadcast %9 : vector<1x32xf32> to vector<8x32xf32>
    %532 = arith.addf %530, %531 : vector<8x32xf32>
    %cst_177 = arith.constant 0.000000e+00 : f32
    %533 = vector.broadcast %cst_177 : f32 to vector<8x32xf32>
    %534 = arith.cmpf ogt, %532, %533 : vector<8x32xf32>
    %cst_178 = arith.constant 0.00999999977 : f32
    %535 = vector.broadcast %cst_178 : f32 to vector<8x32xf32>
    %536 = arith.mulf %535, %532 : vector<8x32xf32>
    %537 = arith.select %534, %532, %536 : vector<8x32xi1>, vector<8x32xf32>
    %cst_179 = arith.constant dense<0.000000e+00> : vector<8x128xf32>
    %538 = tpu.matmul %537, %10, %cst_179 {dimension_numbers = #tpu.dot_dimension_numbers<[1], [0], [0], [1], [0, 0, 1, 1], [], []>} : vector<8x32xf32>, vector<32x128xf32>, vector<8x128xf32> -> vector<8x128xf32>
    %539 = vector.broadcast %11 : vector<1x128xf32> to vector<8x128xf32>
    %540 = arith.addf %538, %539 : vector<8x128xf32>
    %c5 = arith.constant 5 : index
    %c0_180 = arith.constant 0 : index
    %c0_181 = arith.constant 0 : index
    %541 = vector.load %arg14[%c5, %c0_180, %c0_181] : memref<8x8x128xf32, #tpu.memory_space<vmem>>, vector<1x8x128xf32>
    %542 = vector.shape_cast %541 : vector<1x8x128xf32> to vector<8x128xf32>
    %543 = vector.shape_cast %540 : vector<8x128xf32> to vector<1x8x128xf32>
    tpu.vector_store %arg14[%c5, %c0_180, %c0_181], %543 {strides = array<i32>} : memref<8x8x128xf32, #tpu.memory_space<vmem>>, vector<1x8x128xf32>,
    %cst_182 = arith.constant 0xFF800000 : f32
    %544 = vector.broadcast %cst_182 : f32 to vector<8x128xf32>
    %545 = arith.select %28, %540, %544 : vector<8x128xi1>, vector<8x128xf32>
    %cst_183 = arith.constant dense<0xFF800000> : vector<8xf32>
    %546 = vector.multi_reduction <maximumf>, %545, %cst_183 [1] : vector<8x128xf32> to vector<8xf32>
    %547 = vector.shape_cast %546 : vector<8xf32> to vector<8x1xf32>
    %548 = vector.broadcast %547 : vector<8x1xf32> to vector<8x128xf32>
    %549 = arith.cmpf oeq, %545, %548 : vector<8x128xf32>
    %c128_i32_184 = arith.constant 128 : i32
    %550 = vector.broadcast %c128_i32_184 : i32 to vector<8x128xi32>
    %551 = arith.select %549, %26, %550 : vector<8x128xi1>, vector<8x128xi32>
    %cst_185 = arith.constant dense<2147483647> : vector<8xi32>
    %552 = vector.multi_reduction <minsi>, %551, %cst_185 [1] : vector<8x128xi32> to vector<8xi32>
    %553 = vector.shape_cast %552 : vector<8xi32> to vector<8x1xi32>
    %c6_i32_186 = arith.constant 6 : i32
    %554 = vector.broadcast %c6_i32_186 : i32 to vector<8x128xi32>
    %555 = arith.cmpi eq, %26, %554 : vector<8x128xi32>
    %cst_187 = arith.constant 0.000000e+00 : f32
    %556 = vector.broadcast %cst_187 : f32 to vector<8x128xf32>
    %557 = arith.select %555, %540, %556 : vector<8x128xi1>, vector<8x128xf32>
    %cst_188 = arith.constant dense<0.000000e+00> : vector<8xf32>
    %558 = vector.multi_reduction <add>, %557, %cst_188 [1] : vector<8x128xf32> to vector<8xf32>
    %559 = vector.shape_cast %558 : vector<8xf32> to vector<8x1xf32>
    %cst_189 = arith.constant 5.000000e-01 : f32
    %560 = vector.broadcast %cst_189 : f32 to vector<8x1xf32>
    %561 = arith.mulf %560, %559 : vector<8x1xf32>
    %562 = math.tanh %561 : vector<8x1xf32>
    %cst_190 = arith.constant 5.000000e-01 : f32
    %563 = vector.broadcast %cst_190 : f32 to vector<8x1xf32>
    %564 = arith.mulf %563, %562 : vector<8x1xf32>
    %cst_191 = arith.constant 5.000000e-01 : f32
    %565 = vector.broadcast %cst_191 : f32 to vector<8x1xf32>
    %566 = arith.addf %564, %565 : vector<8x1xf32>
    %567 = vector.broadcast %553 : vector<8x1xi32> to vector<8x7xi32>
    %568 = arith.cmpi eq, %23, %567 : vector<8x7xi32>
    %569 = arith.extui %568 : vector<8x7xi1> to vector<8x7xi32>
    %570 = arith.sitofp %569 : vector<8x7xi32> to vector<8x7xf32>
    %571 = vector.shape_cast %566 : vector<8x1xf32> to vector<8x1xf32>
    %572 = vector.broadcast %571 : vector<8x1xf32> to vector<8x7xf32>
    %573 = arith.select %25, %572, %570 : vector<8x7xi1>, vector<8x7xf32>
    %cst_192 = arith.constant dense<0.000000e+00> : vector<8x128xf32>
    %574 = tpu.matmul %573, %0, %cst_192 {dimension_numbers = #tpu.dot_dimension_numbers<[1], [0], [0], [1], [0, 0, 1, 1], [], []>} : vector<8x7xf32>, vector<7x128xf32>, vector<8x128xf32> -> vector<8x128xf32>
    %cst_193 = arith.constant dense<0.000000e+00> : vector<8x128xf32>
    %575 = tpu.matmul %507, %1, %cst_193 {dimension_numbers = #tpu.dot_dimension_numbers<[1], [0], [0], [1], [0, 0, 1, 1], [], []>} : vector<8x32xf32>, vector<32x128xf32>, vector<8x128xf32> -> vector<8x128xf32>
    %576 = arith.addf %574, %575 : vector<8x128xf32>
    %577 = vector.broadcast %5 : vector<1x128xf32> to vector<8x128xf32>
    %578 = arith.addf %576, %577 : vector<8x128xf32>
    %cst_194 = arith.constant 5.000000e-01 : f32
    %579 = vector.broadcast %cst_194 : f32 to vector<8x128xf32>
    %580 = arith.mulf %579, %578 : vector<8x128xf32>
    %581 = math.tanh %580 : vector<8x128xf32>
    %cst_195 = arith.constant 5.000000e-01 : f32
    %582 = vector.broadcast %cst_195 : f32 to vector<8x128xf32>
    %583 = arith.mulf %582, %581 : vector<8x128xf32>
    %cst_196 = arith.constant 5.000000e-01 : f32
    %584 = vector.broadcast %cst_196 : f32 to vector<8x128xf32>
    %585 = arith.addf %583, %584 : vector<8x128xf32>
    %586 = math.tanh %578 : vector<8x128xf32>
    %587 = vector.extract_strided_slice %585 {offsets = [0, 0], sizes = [8, 32], strides = [1, 1]} : vector<8x128xf32> to vector<8x32xf32>
    %588 = vector.extract_strided_slice %585 {offsets = [0, 32], sizes = [8, 32], strides = [1, 1]} : vector<8x128xf32> to vector<8x32xf32>
    %589 = vector.extract_strided_slice %586 {offsets = [0, 64], sizes = [8, 32], strides = [1, 1]} : vector<8x128xf32> to vector<8x32xf32>
    %590 = vector.extract_strided_slice %585 {offsets = [0, 96], sizes = [8, 32], strides = [1, 1]} : vector<8x128xf32> to vector<8x32xf32>
    %591 = arith.mulf %588, %505 : vector<8x32xf32>
    %592 = arith.mulf %587, %589 : vector<8x32xf32>
    %593 = arith.addf %591, %592 : vector<8x32xf32>
    %594 = math.tanh %593 : vector<8x32xf32>
    %595 = arith.mulf %590, %594 : vector<8x32xf32>
    %596 = tpu.concatenate %595, %528 in 1 : vector<8x32xf32>, vector<8x32xf32> -> vector<8x64xf32>
    %cst_197 = arith.constant dense<0.000000e+00> : vector<8x128xf32>
    %597 = tpu.matmul %596, %3, %cst_197 {dimension_numbers = #tpu.dot_dimension_numbers<[1], [0], [0], [1], [0, 0, 1, 1], [], []>} : vector<8x64xf32>, vector<64x128xf32>, vector<8x128xf32> -> vector<8x128xf32>
    %598 = vector.broadcast %7 : vector<1x128xf32> to vector<8x128xf32>
    %599 = arith.addf %597, %598 : vector<8x128xf32>
    %cst_198 = arith.constant 5.000000e-01 : f32
    %600 = vector.broadcast %cst_198 : f32 to vector<8x128xf32>
    %601 = arith.mulf %600, %599 : vector<8x128xf32>
    %602 = math.tanh %601 : vector<8x128xf32>
    %cst_199 = arith.constant 5.000000e-01 : f32
    %603 = vector.broadcast %cst_199 : f32 to vector<8x128xf32>
    %604 = arith.mulf %603, %602 : vector<8x128xf32>
    %cst_200 = arith.constant 5.000000e-01 : f32
    %605 = vector.broadcast %cst_200 : f32 to vector<8x128xf32>
    %606 = arith.addf %604, %605 : vector<8x128xf32>
    %607 = math.tanh %599 : vector<8x128xf32>
    %608 = vector.extract_strided_slice %606 {offsets = [0, 0], sizes = [8, 32], strides = [1, 1]} : vector<8x128xf32> to vector<8x32xf32>
    %609 = vector.extract_strided_slice %606 {offsets = [0, 32], sizes = [8, 32], strides = [1, 1]} : vector<8x128xf32> to vector<8x32xf32>
    %610 = vector.extract_strided_slice %607 {offsets = [0, 64], sizes = [8, 32], strides = [1, 1]} : vector<8x128xf32> to vector<8x32xf32>
    %611 = vector.extract_strided_slice %606 {offsets = [0, 96], sizes = [8, 32], strides = [1, 1]} : vector<8x128xf32> to vector<8x32xf32>
    %612 = arith.mulf %609, %526 : vector<8x32xf32>
    %613 = arith.mulf %608, %610 : vector<8x32xf32>
    %614 = arith.addf %612, %613 : vector<8x32xf32>
    %615 = math.tanh %614 : vector<8x32xf32>
    %616 = arith.mulf %611, %615 : vector<8x32xf32>
    %617 = arith.addf %616, %22 : vector<8x32xf32>
    %cst_201 = arith.constant dense<0.000000e+00> : vector<8x32xf32>
    %618 = tpu.matmul %617, %8, %cst_201 {dimension_numbers = #tpu.dot_dimension_numbers<[1], [0], [0], [1], [0, 0, 1, 1], [], []>} : vector<8x32xf32>, vector<32x32xf32>, vector<8x32xf32> -> vector<8x32xf32>
    %619 = vector.broadcast %9 : vector<1x32xf32> to vector<8x32xf32>
    %620 = arith.addf %618, %619 : vector<8x32xf32>
    %cst_202 = arith.constant 0.000000e+00 : f32
    %621 = vector.broadcast %cst_202 : f32 to vector<8x32xf32>
    %622 = arith.cmpf ogt, %620, %621 : vector<8x32xf32>
    %cst_203 = arith.constant 0.00999999977 : f32
    %623 = vector.broadcast %cst_203 : f32 to vector<8x32xf32>
    %624 = arith.mulf %623, %620 : vector<8x32xf32>
    %625 = arith.select %622, %620, %624 : vector<8x32xi1>, vector<8x32xf32>
    %cst_204 = arith.constant dense<0.000000e+00> : vector<8x128xf32>
    %626 = tpu.matmul %625, %10, %cst_204 {dimension_numbers = #tpu.dot_dimension_numbers<[1], [0], [0], [1], [0, 0, 1, 1], [], []>} : vector<8x32xf32>, vector<32x128xf32>, vector<8x128xf32> -> vector<8x128xf32>
    %627 = vector.broadcast %11 : vector<1x128xf32> to vector<8x128xf32>
    %628 = arith.addf %626, %627 : vector<8x128xf32>
    %c6 = arith.constant 6 : index
    %c0_205 = arith.constant 0 : index
    %c0_206 = arith.constant 0 : index
    %629 = vector.load %arg14[%c6, %c0_205, %c0_206] : memref<8x8x128xf32, #tpu.memory_space<vmem>>, vector<1x8x128xf32>
    %630 = vector.shape_cast %629 : vector<1x8x128xf32> to vector<8x128xf32>
    %631 = vector.shape_cast %628 : vector<8x128xf32> to vector<1x8x128xf32>
    tpu.vector_store %arg14[%c6, %c0_205, %c0_206], %631 {strides = array<i32>} : memref<8x8x128xf32, #tpu.memory_space<vmem>>, vector<1x8x128xf32>,
    %cst_207 = arith.constant 0xFF800000 : f32
    %632 = vector.broadcast %cst_207 : f32 to vector<8x128xf32>
    %633 = arith.select %28, %628, %632 : vector<8x128xi1>, vector<8x128xf32>
    %cst_208 = arith.constant dense<0xFF800000> : vector<8xf32>
    %634 = vector.multi_reduction <maximumf>, %633, %cst_208 [1] : vector<8x128xf32> to vector<8xf32>
    %635 = vector.shape_cast %634 : vector<8xf32> to vector<8x1xf32>
    %636 = vector.broadcast %635 : vector<8x1xf32> to vector<8x128xf32>
    %637 = arith.cmpf oeq, %633, %636 : vector<8x128xf32>
    %c128_i32_209 = arith.constant 128 : i32
    %638 = vector.broadcast %c128_i32_209 : i32 to vector<8x128xi32>
    %639 = arith.select %637, %26, %638 : vector<8x128xi1>, vector<8x128xi32>
    %cst_210 = arith.constant dense<2147483647> : vector<8xi32>
    %640 = vector.multi_reduction <minsi>, %639, %cst_210 [1] : vector<8x128xi32> to vector<8xi32>
    %641 = vector.shape_cast %640 : vector<8xi32> to vector<8x1xi32>
    %c6_i32_211 = arith.constant 6 : i32
    %642 = vector.broadcast %c6_i32_211 : i32 to vector<8x128xi32>
    %643 = arith.cmpi eq, %26, %642 : vector<8x128xi32>
    %cst_212 = arith.constant 0.000000e+00 : f32
    %644 = vector.broadcast %cst_212 : f32 to vector<8x128xf32>
    %645 = arith.select %643, %628, %644 : vector<8x128xi1>, vector<8x128xf32>
    %cst_213 = arith.constant dense<0.000000e+00> : vector<8xf32>
    %646 = vector.multi_reduction <add>, %645, %cst_213 [1] : vector<8x128xf32> to vector<8xf32>
    %647 = vector.shape_cast %646 : vector<8xf32> to vector<8x1xf32>
    %cst_214 = arith.constant 5.000000e-01 : f32
    %648 = vector.broadcast %cst_214 : f32 to vector<8x1xf32>
    %649 = arith.mulf %648, %647 : vector<8x1xf32>
    %650 = math.tanh %649 : vector<8x1xf32>
    %cst_215 = arith.constant 5.000000e-01 : f32
    %651 = vector.broadcast %cst_215 : f32 to vector<8x1xf32>
    %652 = arith.mulf %651, %650 : vector<8x1xf32>
    %cst_216 = arith.constant 5.000000e-01 : f32
    %653 = vector.broadcast %cst_216 : f32 to vector<8x1xf32>
    %654 = arith.addf %652, %653 : vector<8x1xf32>
    %655 = vector.broadcast %641 : vector<8x1xi32> to vector<8x7xi32>
    %656 = arith.cmpi eq, %23, %655 : vector<8x7xi32>
    %657 = arith.extui %656 : vector<8x7xi1> to vector<8x7xi32>
    %658 = arith.sitofp %657 : vector<8x7xi32> to vector<8x7xf32>
    %659 = vector.shape_cast %654 : vector<8x1xf32> to vector<8x1xf32>
    %660 = vector.broadcast %659 : vector<8x1xf32> to vector<8x7xf32>
    %661 = arith.select %25, %660, %658 : vector<8x7xi1>, vector<8x7xf32>
    %cst_217 = arith.constant dense<0.000000e+00> : vector<8x128xf32>
    %662 = tpu.matmul %661, %0, %cst_217 {dimension_numbers = #tpu.dot_dimension_numbers<[1], [0], [0], [1], [0, 0, 1, 1], [], []>} : vector<8x7xf32>, vector<7x128xf32>, vector<8x128xf32> -> vector<8x128xf32>
    %cst_218 = arith.constant dense<0.000000e+00> : vector<8x128xf32>
    %663 = tpu.matmul %595, %1, %cst_218 {dimension_numbers = #tpu.dot_dimension_numbers<[1], [0], [0], [1], [0, 0, 1, 1], [], []>} : vector<8x32xf32>, vector<32x128xf32>, vector<8x128xf32> -> vector<8x128xf32>
    %664 = arith.addf %662, %663 : vector<8x128xf32>
    %665 = vector.broadcast %5 : vector<1x128xf32> to vector<8x128xf32>
    %666 = arith.addf %664, %665 : vector<8x128xf32>
    %cst_219 = arith.constant 5.000000e-01 : f32
    %667 = vector.broadcast %cst_219 : f32 to vector<8x128xf32>
    %668 = arith.mulf %667, %666 : vector<8x128xf32>
    %669 = math.tanh %668 : vector<8x128xf32>
    %cst_220 = arith.constant 5.000000e-01 : f32
    %670 = vector.broadcast %cst_220 : f32 to vector<8x128xf32>
    %671 = arith.mulf %670, %669 : vector<8x128xf32>
    %cst_221 = arith.constant 5.000000e-01 : f32
    %672 = vector.broadcast %cst_221 : f32 to vector<8x128xf32>
    %673 = arith.addf %671, %672 : vector<8x128xf32>
    %674 = math.tanh %666 : vector<8x128xf32>
    %675 = vector.extract_strided_slice %673 {offsets = [0, 0], sizes = [8, 32], strides = [1, 1]} : vector<8x128xf32> to vector<8x32xf32>
    %676 = vector.extract_strided_slice %673 {offsets = [0, 32], sizes = [8, 32], strides = [1, 1]} : vector<8x128xf32> to vector<8x32xf32>
    %677 = vector.extract_strided_slice %674 {offsets = [0, 64], sizes = [8, 32], strides = [1, 1]} : vector<8x128xf32> to vector<8x32xf32>
    %678 = vector.extract_strided_slice %673 {offsets = [0, 96], sizes = [8, 32], strides = [1, 1]} : vector<8x128xf32> to vector<8x32xf32>
    %679 = arith.mulf %676, %593 : vector<8x32xf32>
    %680 = arith.mulf %675, %677 : vector<8x32xf32>
    %681 = arith.addf %679, %680 : vector<8x32xf32>
    %682 = math.tanh %681 : vector<8x32xf32>
    %683 = arith.mulf %678, %682 : vector<8x32xf32>
    %684 = tpu.concatenate %683, %616 in 1 : vector<8x32xf32>, vector<8x32xf32> -> vector<8x64xf32>
    %cst_222 = arith.constant dense<0.000000e+00> : vector<8x128xf32>
    %685 = tpu.matmul %684, %3, %cst_222 {dimension_numbers = #tpu.dot_dimension_numbers<[1], [0], [0], [1], [0, 0, 1, 1], [], []>} : vector<8x64xf32>, vector<64x128xf32>, vector<8x128xf32> -> vector<8x128xf32>
    %686 = vector.broadcast %7 : vector<1x128xf32> to vector<8x128xf32>
    %687 = arith.addf %685, %686 : vector<8x128xf32>
    %cst_223 = arith.constant 5.000000e-01 : f32
    %688 = vector.broadcast %cst_223 : f32 to vector<8x128xf32>
    %689 = arith.mulf %688, %687 : vector<8x128xf32>
    %690 = math.tanh %689 : vector<8x128xf32>
    %cst_224 = arith.constant 5.000000e-01 : f32
    %691 = vector.broadcast %cst_224 : f32 to vector<8x128xf32>
    %692 = arith.mulf %691, %690 : vector<8x128xf32>
    %cst_225 = arith.constant 5.000000e-01 : f32
    %693 = vector.broadcast %cst_225 : f32 to vector<8x128xf32>
    %694 = arith.addf %692, %693 : vector<8x128xf32>
    %695 = math.tanh %687 : vector<8x128xf32>
    %696 = vector.extract_strided_slice %694 {offsets = [0, 0], sizes = [8, 32], strides = [1, 1]} : vector<8x128xf32> to vector<8x32xf32>
    %697 = vector.extract_strided_slice %694 {offsets = [0, 32], sizes = [8, 32], strides = [1, 1]} : vector<8x128xf32> to vector<8x32xf32>
    %698 = vector.extract_strided_slice %695 {offsets = [0, 64], sizes = [8, 32], strides = [1, 1]} : vector<8x128xf32> to vector<8x32xf32>
    %699 = vector.extract_strided_slice %694 {offsets = [0, 96], sizes = [8, 32], strides = [1, 1]} : vector<8x128xf32> to vector<8x32xf32>
    %700 = arith.mulf %697, %614 : vector<8x32xf32>
    %701 = arith.mulf %696, %698 : vector<8x32xf32>
    %702 = arith.addf %700, %701 : vector<8x32xf32>
    %703 = math.tanh %702 : vector<8x32xf32>
    %704 = arith.mulf %699, %703 : vector<8x32xf32>
    %705 = arith.addf %704, %22 : vector<8x32xf32>
    %cst_226 = arith.constant dense<0.000000e+00> : vector<8x32xf32>
    %706 = tpu.matmul %705, %8, %cst_226 {dimension_numbers = #tpu.dot_dimension_numbers<[1], [0], [0], [1], [0, 0, 1, 1], [], []>} : vector<8x32xf32>, vector<32x32xf32>, vector<8x32xf32> -> vector<8x32xf32>
    %707 = vector.broadcast %9 : vector<1x32xf32> to vector<8x32xf32>
    %708 = arith.addf %706, %707 : vector<8x32xf32>
    %cst_227 = arith.constant 0.000000e+00 : f32
    %709 = vector.broadcast %cst_227 : f32 to vector<8x32xf32>
    %710 = arith.cmpf ogt, %708, %709 : vector<8x32xf32>
    %cst_228 = arith.constant 0.00999999977 : f32
    %711 = vector.broadcast %cst_228 : f32 to vector<8x32xf32>
    %712 = arith.mulf %711, %708 : vector<8x32xf32>
    %713 = arith.select %710, %708, %712 : vector<8x32xi1>, vector<8x32xf32>
    %cst_229 = arith.constant dense<0.000000e+00> : vector<8x128xf32>
    %714 = tpu.matmul %713, %10, %cst_229 {dimension_numbers = #tpu.dot_dimension_numbers<[1], [0], [0], [1], [0, 0, 1, 1], [], []>} : vector<8x32xf32>, vector<32x128xf32>, vector<8x128xf32> -> vector<8x128xf32>
    %715 = vector.broadcast %11 : vector<1x128xf32> to vector<8x128xf32>
    %716 = arith.addf %714, %715 : vector<8x128xf32>
    %c7 = arith.constant 7 : index
    %c0_230 = arith.constant 0 : index
    %c0_231 = arith.constant 0 : index
    %717 = vector.load %arg14[%c7, %c0_230, %c0_231] : memref<8x8x128xf32, #tpu.memory_space<vmem>>, vector<1x8x128xf32>
    %718 = vector.shape_cast %717 : vector<1x8x128xf32> to vector<8x128xf32>
    %719 = vector.shape_cast %716 : vector<8x128xf32> to vector<1x8x128xf32>
    tpu.vector_store %arg14[%c7, %c0_230, %c0_231], %719 {strides = array<i32>} : memref<8x8x128xf32, #tpu.memory_space<vmem>>, vector<1x8x128xf32>,
    %c0_232 = arith.constant 0 : index
    %c0_233 = arith.constant 0 : index
    %c0_234 = arith.constant 0 : index
    %720 = vector.load %arg14[%c0_232, %c0_233, %c0_234] : memref<8x8x128xf32, #tpu.memory_space<vmem>>, vector<8x8x128xf32>
    %721 = vector.shape_cast %28 : vector<8x128xi1> to vector<1x8x128xi1>
    %cst_235 = arith.constant 0xFF800000 : f32
    %722 = vector.shape_cast %721 : vector<1x8x128xi1> to vector<1x8x128xi1>
    %723 = vector.broadcast %722 : vector<1x8x128xi1> to vector<8x8x128xi1>
    %724 = vector.broadcast %cst_235 : f32 to vector<8x8x128xf32>
    %725 = arith.select %723, %720, %724 : vector<8x8x128xi1>, vector<8x8x128xf32>
    %cst_236 = arith.constant dense<0xFF800000> : vector<8x8xf32>
    %726 = vector.multi_reduction <maximumf>, %725, %cst_236 [2] : vector<8x8x128xf32> to vector<8x8xf32>
    %727 = vector.shape_cast %726 : vector<8x8xf32> to vector<8x8x1xf32>
    %728 = vector.broadcast %727 : vector<8x8x1xf32> to vector<8x8x128xf32>
    %729 = arith.subf %725, %728 : vector<8x8x128xf32>
    %730 = math.exp %729 : vector<8x8x128xf32>
    %cst_237 = arith.constant dense<0.000000e+00> : vector<8x8xf32>
    %731 = vector.multi_reduction <add>, %730, %cst_237 [2] : vector<8x8x128xf32> to vector<8x8xf32>
    %732 = vector.shape_cast %731 : vector<8x8xf32> to vector<8x8x1xf32>
    %733 = math.log %732 : vector<8x8x1xf32>
    %734 = arith.addf %727, %733 : vector<8x8x1xf32>
    %735 = vector.broadcast %734 : vector<8x8x1xf32> to vector<8x8x128xf32>
    %736 = arith.subf %720, %735 : vector<8x8x128xf32>
    %cst_238 = arith.constant 0.000000e+00 : f32
    %737 = vector.broadcast %cst_238 : f32 to vector<8x8x128xf32>
    %738 = arith.cmpf oge, %720, %737 : vector<8x8x128xf32>
    %cst_239 = arith.constant 0.000000e+00 : f32
    %739 = vector.broadcast %cst_239 : f32 to vector<8x8x128xf32>
    %740 = arith.subf %739, %720 : vector<8x8x128xf32>
    %741 = math.exp %740 : vector<8x8x128xf32>
    %cst_240 = arith.constant 1.000000e+00 : f32
    %742 = vector.broadcast %cst_240 : f32 to vector<8x8x128xf32>
    %743 = arith.addf %742, %741 : vector<8x8x128xf32>
    %744 = math.log %743 : vector<8x8x128xf32>
    %cst_241 = arith.constant 0.000000e+00 : f32
    %745 = vector.broadcast %cst_241 : f32 to vector<8x8x128xf32>
    %746 = arith.subf %745, %744 : vector<8x8x128xf32>
    %747 = math.exp %720 : vector<8x8x128xf32>
    %cst_242 = arith.constant 1.000000e+00 : f32
    %748 = vector.broadcast %cst_242 : f32 to vector<8x8x128xf32>
    %749 = arith.addf %748, %747 : vector<8x8x128xf32>
    %750 = math.log %749 : vector<8x8x128xf32>
    %751 = arith.subf %720, %750 : vector<8x8x128xf32>
    %752 = arith.select %738, %746, %751 : vector<8x8x128xi1>, vector<8x8x128xf32>
    %753 = vector.shape_cast %721 : vector<1x8x128xi1> to vector<1x8x128xi1>
    %754 = vector.broadcast %753 : vector<1x8x128xi1> to vector<8x8x128xi1>
    %755 = arith.select %754, %736, %752 : vector<8x8x128xi1>, vector<8x8x128xf32>
    %c0_243 = arith.constant 0 : index
    %c0_244 = arith.constant 0 : index
    %c0_245 = arith.constant 0 : index
    %756 = vector.load %arg14[%c0_243, %c0_244, %c0_245] : memref<8x8x128xf32, #tpu.memory_space<vmem>>, vector<8x8x128xf32>
    tpu.vector_store %arg14[%c0_243, %c0_244, %c0_245], %755 {strides = array<i32>} : memref<8x8x128xf32, #tpu.memory_space<vmem>>, vector<8x8x128xf32>,
    return
  }
  func.func @transform_0(%arg0: i32) -> (i32, i32) {
    %c0_i32 = arith.constant 0 : i32
    %c0_i32_0 = arith.constant 0 : i32
    %c0_i32_1 = arith.constant 0 : i32
    return %c0_i32, %c0_i32_0 : i32, i32
  }
  func.func @transform_1(%arg0: i32) -> (i32, i32) {
    %c0_i32 = arith.constant 0 : i32
    %c0_i32_0 = arith.constant 0 : i32
    %c0_i32_1 = arith.constant 0 : i32
    return %c0_i32, %c0_i32_0 : i32, i32
  }
  func.func @transform_2(%arg0: i32) -> (i32, i32, i32) {
    %c0_i32 = arith.constant 0 : i32
    %c0_i32_0 = arith.constant 0 : i32
    %c0_i32_1 = arith.constant 0 : i32
    %c0_i32_2 = arith.constant 0 : i32
    return %c0_i32, %c0_i32_0, %c0_i32_1 : i32, i32, i32
  }
  func.func @transform_3(%arg0: i32) -> (i32, i32, i32) {
    %c0_i32 = arith.constant 0 : i32
    %c0_i32_0 = arith.constant 0 : i32
    %c0_i32_1 = arith.constant 0 : i32
    %c0_i32_2 = arith.constant 0 : i32
    return %c0_i32, %c0_i32_0, %c0_i32_1 : i32, i32, i32
  }
  func.func @transform_4(%arg0: i32) -> (i32, i32) {
    %c0_i32 = arith.constant 0 : i32
    %c0_i32_0 = arith.constant 0 : i32
    %c0_i32_1 = arith.constant 0 : i32
    return %c0_i32, %c0_i32_0 : i32, i32
  }
  func.func @transform_5(%arg0: i32) -> (i32, i32) {
    %c0_i32 = arith.constant 0 : i32
    %c0_i32_0 = arith.constant 0 : i32
    %c0_i32_1 = arith.constant 0 : i32
    return %c0_i32, %c0_i32_0 : i32, i32
  }
  func.func @transform_6(%arg0: i32) -> (i32, i32) {
    %c0_i32 = arith.constant 0 : i32
    %c0_i32_0 = arith.constant 0 : i32
    %c0_i32_1 = arith.constant 0 : i32
    return %c0_i32, %c0_i32_0 : i32, i32
  }
  func.func @transform_7(%arg0: i32) -> (i32, i32) {
    %c0_i32 = arith.constant 0 : i32
    %c0_i32_0 = arith.constant 0 : i32
    %c0_i32_1 = arith.constant 0 : i32
    return %c0_i32, %c0_i32_0 : i32, i32
  }
  func.func @transform_8(%arg0: i32) -> (i32, i32) {
    %c0_i32 = arith.constant 0 : i32
    %c0_i32_0 = arith.constant 0 : i32
    %c0_i32_1 = arith.constant 0 : i32
    return %c0_i32, %c0_i32_0 : i32, i32
  }
  func.func @transform_9(%arg0: i32) -> (i32, i32) {
    %c0_i32 = arith.constant 0 : i32
    %c0_i32_0 = arith.constant 0 : i32
    %c0_i32_1 = arith.constant 0 : i32
    return %c0_i32, %c0_i32_0 : i32, i32
  }
  func.func @transform_10(%arg0: i32) -> (i32, i32) {
    %c0_i32 = arith.constant 0 : i32
    %c0_i32_0 = arith.constant 0 : i32
    return %arg0, %c0_i32 : i32, i32
  }
  func.func @transform_11(%arg0: i32) -> (i32, i32, i32) {
    %c0_i32 = arith.constant 0 : i32
    %c0_i32_0 = arith.constant 0 : i32
    %c0_i32_1 = arith.constant 0 : i32
    return %c0_i32, %arg0, %c0_i32_0 : i32, i32, i32
  }
  func.func @transform_12(%arg0: i32) -> (i32, i32, i32) {
    %c0_i32 = arith.constant 0 : i32
    %c0_i32_0 = arith.constant 0 : i32
    %c0_i32_1 = arith.constant 0 : i32
    return %c0_i32, %arg0, %c0_i32_0 : i32, i32, i32
  }
  func.func @transform_13(%arg0: i32) -> (i32, i32, i32) {
    %c0_i32 = arith.constant 0 : i32
    %c0_i32_0 = arith.constant 0 : i32
    %c0_i32_1 = arith.constant 0 : i32
    return %c0_i32, %arg0, %c0_i32_0 : i32, i32, i32
  }
}

</mosaic_0001>

<llo_original>
// kernel: tpu_custom_call.1
$region0: #{tpu_custom_call.1}
  #allocation0 [shape = 'u32[]', space=smem, size = 0x4, offset = 0x4, fixed_abs, tag = 'smem constant byte address 0x4 - core index']
  #allocation1 [shape = 'u32[144,128]{1,0:T(1,128)}', space=vmem, size = 0x12000, scoped, tag = 'internal scratch']
  %s0 = inlined_call_operand.hbm [shape: f32[7,128], index: 0, kind: input, shape index: {}]
  %s1 = inlined_call_operand.hbm [shape: f32[32,128], index: 1, kind: input, shape index: {}]
  %s2 = inlined_call_operand.hbm [shape: f32[2,64,128], index: 2, kind: input, shape index: {}]
  %s3 = inlined_call_operand.vmem [shape: f32[2,1,128], index: 3, kind: input, shape index: {}]
  %s4 = inlined_call_operand.hbm [shape: f32[16,32], index: 4, kind: input, shape index: {}]
  %s5 = inlined_call_operand.vmem [shape: f32[1,32], index: 5, kind: input, shape index: {}]
  %s6 = inlined_call_operand.hbm [shape: f32[32,32], index: 6, kind: input, shape index: {}]
  %s7 = inlined_call_operand.vmem [shape: f32[1,32], index: 7, kind: input, shape index: {}]
  %s8 = inlined_call_operand.hbm [shape: f32[32,128], index: 8, kind: input, shape index: {}]
  %s9 = inlined_call_operand.hbm [shape: f32[1,128], index: 9, kind: input, shape index: {}]
  %s10 = inlined_call_operand.hbm [shape: f32[8,16], index: 10, kind: input, shape index: {}]
  %s11 = inlined_call_operand.vmem [shape: f32[2,8,32], index: 11, kind: input, shape index: {}]
  %s12 = inlined_call_operand.hbm [shape: f32[2,8,32], index: 12, kind: input, shape index: {}]
  %s13 = inlined_call_operand.hbm [shape: f32[8,8,128], index: 13, kind: output, shape index: {}]
  %s14 = sld [smem:[#allocation0]]
  $region98: #{tpu_custom_call.1} parent=0
    _
  %s16 = ssub.s32 1, %s14
  %s17 = scalar_select 0, %s16, %s14
  $region1: #{tpu_custom_call.1} parent=0
    #allocation2 [shape = 'u8[4096]{0}', space=vmem, size = 0x1000, scoped, tag = 'input window, operand 0, single buffered']
    #allocation3 [shape = 's32[1]{0}', space=sflag, size = 0x4, scoped, tag = 'scoped memory for tpu_custom_call.1']
    #allocation4 [shape = 's32[1]{0}', space=sflag, size = 0x4, scoped, tag = 'scoped memory for tpu_custom_call.1']
    #allocation5 [shape = 'u8[16384]{0}', space=vmem, size = 0x4000, scoped, tag = 'input window, operand 1, single buffered']
    #allocation6 [shape = 's32[1]{0}', space=sflag, size = 0x4, scoped, tag = 'scoped memory for tpu_custom_call.1']
    #allocation7 [shape = 'u8[65536]{0}', space=vmem, size = 0x10000, scoped, tag = 'input window, operand 2, single buffered']
    #allocation8 [shape = 'u8[8192]{0}', space=vmem, size = 0x2000, scoped, tag = 'input window, operand 4, single buffered']
    #allocation9 [shape = 's32[1]{0}', space=sflag, size = 0x4, scoped, tag = 'scoped memory for tpu_custom_call.1']
    #allocation10 [shape = 'u8[16384]{0}', space=vmem, size = 0x4000, scoped, tag = 'input window, operand 6, single buffered']
    #allocation11 [shape = 'u8[16384]{0}', space=vmem, size = 0x4000, scoped, tag = 'input window, operand 8, single buffered']
    #allocation12 [shape = 's32[1]{0}', space=sflag, size = 0x4, scoped, tag = 'scoped memory for tpu_custom_call.1']
    #allocation13 [shape = 'u8[512]{0}', space=vmem, size = 0x400, scoped, tag = 'input window, operand 9, single buffered']
    #allocation14 [shape = 'u8[4096]{0}', space=vmem, size = 0x1000, scoped, tag = 'input window, operand 10, single buffered']
    #allocation15 [shape = 's32[1]{0}', space=sflag, size = 0x4, scoped, tag = 'scoped memory for tpu_custom_call.1']
    #allocation16 [shape = 'u8[8192]{0}', space=vmem, size = 0x2000, scoped, tag = 'input window, operand 12, single buffered']
    #allocation17 [shape = 'u8[32768]{0}', space=vmem, size = 0x8000, scoped, tag = 'output window, operand 0, single buffered']
    %18 = vsyncpa [#allocation3], 0
    %19 = vsyncpa [#allocation6], 0
    %20 = vsyncpa [#allocation9], 0
    %21 = vsyncpa [#allocation12], 0
    %22 = vsyncpa [#allocation15], 0
    %23 = vsyncpa [#allocation4], 0
    // Predicated region
    $region2: #{tpu_custom_call.1} parent=1 // pred_check
      _
    $region3: #{tpu_custom_call.1} parent=1 // pred_check_branch
      %25 = sbr.rel (0) target = $region5
    $region4: #{tpu_custom_call.1} parent=1 // pred_region
      %s27 = ssub.s32 128, 128
      %28 = vsyncadd [#allocation3], %s27
      %s30 = sshll.u32 [#allocation2], 4
      %s31 = int_to_ptr.vmem [resolvable:$true] %s30
      %33 = dma.hbm_to_vmem [thread:$0]  %s0, 128, %s31, [#allocation3]
    $region5: #{tpu_custom_call.1} parent=1 // pred_fallthru
      _
    // Predicated region
    $region6: #{tpu_custom_call.1} parent=1 // pred_check
      _
    $region7: #{tpu_custom_call.1} parent=1 // pred_check_branch
      %35 = sbr.rel (0) target = $region9
    $region8: #{tpu_custom_call.1} parent=1 // pred_region
      %s37 = ssub.s32 512, 512
      %38 = vsyncadd [#allocation6], %s37
      %s39 = sshll.u32 [#allocation5], 4
      %s40 = int_to_ptr.vmem [resolvable:$true] %s39
      %45 = dma.hbm_to_vmem [thread:$0]  %s1, 512, %s40, [#allocation6], 128, 128, 8
    $region9: #{tpu_custom_call.1} parent=1 // pred_fallthru
      _
    // Predicated region
    $region10: #{tpu_custom_call.1} parent=1 // pred_check
      _
    $region11: #{tpu_custom_call.1} parent=1 // pred_check_branch
      %47 = sbr.rel (0) target = $region13
    $region12: #{tpu_custom_call.1} parent=1 // pred_region
      %s49 = ssub.s32 2048, 2048
      %50 = vsyncadd [#allocation6], %s49
      %s51 = sshll.u32 [#allocation7], 4
      %s52 = int_to_ptr.vmem [resolvable:$true] %s51
      %57 = dma.hbm_to_vmem [thread:$0]  %s2, 2048, %s52, [#allocation6], 128, 128, 8
    $region13: #{tpu_custom_call.1} parent=1 // pred_fallthru
      _
    // Predicated region
    $region14: #{tpu_custom_call.1} parent=1 // pred_check
      _
    $region15: #{tpu_custom_call.1} parent=1 // pred_check_branch
      %59 = sbr.rel (0) target = $region17
    $region16: #{tpu_custom_call.1} parent=1 // pred_region
      _
    $region17: #{tpu_custom_call.1} parent=1 // pred_fallthru
      _
    // Predicated region
    $region18: #{tpu_custom_call.1} parent=1 // pred_check
      _
    $region19: #{tpu_custom_call.1} parent=1 // pred_check_branch
      %61 = sbr.rel (0) target = $region21
    $region20: #{tpu_custom_call.1} parent=1 // pred_region
      %s63 = ssub.s32 256, 256
      %64 = vsyncadd [#allocation9], %s63
      %s65 = sshll.u32 [#allocation8], 4
      %s66 = int_to_ptr.vmem [resolvable:$true] %s65
      %71 = dma.hbm_to_vmem [thread:$0]  %s4, 256, %s66, [#allocation9], 128, 128, 8
    $region21: #{tpu_custom_call.1} parent=1 // pred_fallthru
      _
    // Predicated region
    $region22: #{tpu_custom_call.1} parent=1 // pred_check
      _
    $region23: #{tpu_custom_call.1} parent=1 // pred_check_branch
      %73 = sbr.rel (0) target = $region25
    $region24: #{tpu_custom_call.1} parent=1 // pred_region
      _
    $region25: #{tpu_custom_call.1} parent=1 // pred_fallthru
      _
    // Predicated region
    $region26: #{tpu_custom_call.1} parent=1 // pred_check
      _
    $region27: #{tpu_custom_call.1} parent=1 // pred_check_branch
      %75 = sbr.rel (0) target = $region29
    $region28: #{tpu_custom_call.1} parent=1 // pred_region
      %s77 = ssub.s32 512, 512
      %78 = vsyncadd [#allocation9], %s77
      %s79 = sshll.u32 [#allocation10], 4
      %s80 = int_to_ptr.vmem [resolvable:$true] %s79
      %85 = dma.hbm_to_vmem [thread:$0]  %s6, 512, %s80, [#allocation9], 128, 128, 8
    $region29: #{tpu_custom_call.1} parent=1 // pred_fallthru
      _
    // Predicated region
    $region30: #{tpu_custom_call.1} parent=1 // pred_check
      _
    $region31: #{tpu_custom_call.1} parent=1 // pred_check_branch
      %87 = sbr.rel (0) target = $region33
    $region32: #{tpu_custom_call.1} parent=1 // pred_region
      _
    $region33: #{tpu_custom_call.1} parent=1 // pred_fallthru
      _
    // Predicated region
    $region34: #{tpu_custom_call.1} parent=1 // pred_check
      _
    $region35: #{tpu_custom_call.1} parent=1 // pred_check_branch
      %89 = sbr.rel (0) target = $region37
    $region36: #{tpu_custom_call.1} parent=1 // pred_region
      %s91 = ssub.s32 512, 512
      %92 = vsyncadd [#allocation12], %s91
      %s93 = sshll.u32 [#allocation11], 4
      %s94 = int_to_ptr.vmem [resolvable:$true] %s93
      %99 = dma.hbm_to_vmem [thread:$0]  %s8, 512, %s94, [#allocation12], 128, 128, 8
    $region37: #{tpu_custom_call.1} parent=1 // pred_fallthru
      _
    // Predicated region
    $region38: #{tpu_custom_call.1} parent=1 // pred_check
      _
    $region39: #{tpu_custom_call.1} parent=1 // pred_check_branch
      %101 = sbr.rel (0) target = $region41
    $region40: #{tpu_custom_call.1} parent=1 // pred_region
      %s103 = ssub.s32 16, 16
      %104 = vsyncadd [#allocation12], %s103
      %s106 = sshll.u32 [#allocation13], 4
      %s107 = int_to_ptr.vmem [resolvable:$true] %s106
      %109 = dma.hbm_to_vmem [thread:$0]  %s9, 16, %s107, [#allocation12]
    $region41: #{tpu_custom_call.1} parent=1 // pred_fallthru
      _
    // Predicated region
    $region42: #{tpu_custom_call.1} parent=1 // pred_check
      _
    $region43: #{tpu_custom_call.1} parent=1 // pred_check_branch
      %111 = sbr.rel (0) target = $region45
    $region44: #{tpu_custom_call.1} parent=1 // pred_region
      %s113 = ssub.s32 128, 128
      %114 = vsyncadd [#allocation15], %s113
      %s116 = sshll.u32 [#allocation14], 4
      %s117 = int_to_ptr.vmem [resolvable:$true] %s116
      %119 = dma.hbm_to_vmem [thread:$0]  %s10, 128, %s117, [#allocation15]
    $region45: #{tpu_custom_call.1} parent=1 // pred_fallthru
      _
    // Predicated region
    $region46: #{tpu_custom_call.1} parent=1 // pred_check
      _
    $region47: #{tpu_custom_call.1} parent=1 // pred_check_branch
      %121 = sbr.rel (0) target = $region49
    $region48: #{tpu_custom_call.1} parent=1 // pred_region
      _
    $region49: #{tpu_custom_call.1} parent=1 // pred_fallthru
      _
    // Predicated region
    $region50: #{tpu_custom_call.1} parent=1 // pred_check
      _
    $region51: #{tpu_custom_call.1} parent=1 // pred_check_branch
      %123 = sbr.rel (0) target = $region53
    $region52: #{tpu_custom_call.1} parent=1 // pred_region
      %s125 = ssub.s32 256, 256
      %126 = vsyncadd [#allocation15], %s125
      %s127 = sshll.u32 [#allocation16], 4
      %s128 = int_to_ptr.vmem [resolvable:$true] %s127
      %133 = dma.hbm_to_vmem [thread:$0]  %s12, 256, %s128, [#allocation15], 128, 128, 8
    $region53: #{tpu_custom_call.1} parent=1 // pred_fallthru
      _
    // Predicated region
    $region54: #{tpu_custom_call.1} parent=1 // pred_check
      _
    $region55: #{tpu_custom_call.1} parent=1 // pred_check_branch
      %135 = sbr.rel (0) target = $region57
    $region56: #{tpu_custom_call.1} parent=1 // pred_region
      %136 = dma.done [#allocation3], 128
    $region57: #{tpu_custom_call.1} parent=1 // pred_fallthru
      _
    // Predicated region
    $region58: #{tpu_custom_call.1} parent=1 // pred_check
      _
    $region59: #{tpu_custom_call.1} parent=1 // pred_check_branch
      %138 = sbr.rel (0) target = $region61
    $region60: #{tpu_custom_call.1} parent=1 // pred_region
      %139 = dma.done [#allocation6], 512
    $region61: #{tpu_custom_call.1} parent=1 // pred_fallthru
      _
    // Predicated region
    $region62: #{tpu_custom_call.1} parent=1 // pred_check
      _
    $region63: #{tpu_custom_call.1} parent=1 // pred_check_branch
      %141 = sbr.rel (0) target = $region65
    $region64: #{tpu_custom_call.1} parent=1 // pred_region
      %142 = dma.done [#allocation6], 2048
    $region65: #{tpu_custom_call.1} parent=1 // pred_fallthru
      _
    // Predicated region
    $region66: #{tpu_custom_call.1} parent=1 // pred_check
      _
    $region67: #{tpu_custom_call.1} parent=1 // pred_check_branch
      %144 = sbr.rel (0) target = $region69
    $region68: #{tpu_custom_call.1} parent=1 // pred_region
      %145 = dma.done [#allocation9], 256
    $region69: #{tpu_custom_call.1} parent=1 // pred_fallthru
      _
    // Predicated region
    $region70: #{tpu_custom_call.1} parent=1 // pred_check
      _
    $region71: #{tpu_custom_call.1} parent=1 // pred_check_branch
      %147 = sbr.rel (0) target = $region73
    $region72: #{tpu_custom_call.1} parent=1 // pred_region
      %148 = dma.done [#allocation9], 512
    $region73: #{tpu_custom_call.1} parent=1 // pred_fallthru
      _
    // Predicated region
    $region74: #{tpu_custom_call.1} parent=1 // pred_check
      _
    $region75: #{tpu_custom_call.1} parent=1 // pred_check_branch
      %150 = sbr.rel (0) target = $region77
    $region76: #{tpu_custom_call.1} parent=1 // pred_region
      %151 = dma.done [#allocation12], 512
    $region77: #{tpu_custom_call.1} parent=1 // pred_fallthru
      _
    // Predicated region
    $region78: #{tpu_custom_call.1} parent=1 // pred_check
      _
    $region79: #{tpu_custom_call.1} parent=1 // pred_check_branch
      %153 = sbr.rel (0) target = $region81
    $region80: #{tpu_custom_call.1} parent=1 // pred_region
      %154 = dma.done [#allocation12], 16
    $region81: #{tpu_custom_call.1} parent=1 // pred_fallthru
      _
    // Predicated region
    $region82: #{tpu_custom_call.1} parent=1 // pred_check
      _
    $region83: #{tpu_custom_call.1} parent=1 // pred_check_branch
      %156 = sbr.rel (0) target = $region85
    $region84: #{tpu_custom_call.1} parent=1 // pred_region
      %157 = dma.done [#allocation15], 128
    $region85: #{tpu_custom_call.1} parent=1 // pred_fallthru
      _
    // Predicated region
    $region86: #{tpu_custom_call.1} parent=1 // pred_check
      _
    $region87: #{tpu_custom_call.1} parent=1 // pred_check_branch
      %159 = sbr.rel (0) target = $region89
    $region88: #{tpu_custom_call.1} parent=1 // pred_region
      %160 = dma.done [#allocation15], 256
    $region89: #{tpu_custom_call.1} parent=1 // pred_fallthru
      _
    %v161 = vld [vmem:[#allocation2] sm:$0x7f]
    %v162 = vld [vmem:[#allocation5] sm:$0xff]
    %v163 = vld [vmem:[#allocation5 + $0x8] sm:$0xff]
    %v164 = vld [vmem:[#allocation5 + $0x10] sm:$0xff]
    %v165 = vld [vmem:[#allocation5 + $0x18] sm:$0xff]
    %s166 = scalar_lea.vmem [#allocation7], 64
    %v167 = vld [vmem:[%s166] sm:$0xff]
    %v168 = vld [vmem:[%s166 + $0x8] sm:$0xff]
    %v169 = vld [vmem:[%s166 + $0x10] sm:$0xff]
    %v170 = vld [vmem:[%s166 + $0x18] sm:$0xff]
    %v171 = vld [vmem:[%s166 + $0x20] sm:$0xff]
    %v172 = vld [vmem:[%s166 + $0x28] sm:$0xff]
    %v173 = vld [vmem:[%s166 + $0x30] sm:$0xff]
    %v174 = vld [vmem:[%s166 + $0x38] sm:$0xff]
    %v175 = vld [vmem:[%s3] sm:$0x1]
    %s176 = scalar_lea.vmem %s3, 1
    %v177 = vld [vmem:[%s176] sm:$0x1]
    %v178 = vld [vmem:[#allocation10] sm:$0xff]
    %v179 = vld [vmem:[#allocation10 + $0x8] sm:$0xff]
    %v180 = vld [vmem:[#allocation10 + $0x10] sm:$0xff]
    %v181 = vld [vmem:[#allocation10 + $0x18] sm:$0xff]
    %v182 = vld [vmem:[%s7] sm:$0x1]
    %v183 = vld [vmem:[#allocation11] sm:$0xff]
    %v184 = vld [vmem:[#allocation11 + $0x8] sm:$0xff]
    %v185 = vld [vmem:[#allocation11 + $0x10] sm:$0xff]
    %v186 = vld [vmem:[#allocation11 + $0x18] sm:$0xff]
    %v187 = vld [vmem:[#allocation13] sm:$0x1]
    %v188 = vld [vmem:[#allocation14] sm:$0xff]
    %v189 = vld [vmem:[#allocation8] sm:$0xff]
    %v190 = vld [vmem:[#allocation8 + $0x8] sm:$0xff]
    %v191 = vld [vmem:[%s5] sm:$0x1]
    %v193 = vlaneseq
    %v194 = vshrl.u32 %v193, 7
    %v195 = vsub.s32 0, %v194
    %v196 = vrot.slane %v191, %v195
    %vm198 = vcmask 130048
    %v200 = vsel %vm198, %v188, 0
    %202 = vmatprep.subr.mxu0 0.0
    %203 = vmatpush1.msra.mxu0 0.0
    %204 = vmatprep.subr.mxu0 0.0
    %205 = vmatpush1.msra.mxu0 0.0
    %206 = vmatprep.subr.mxu0 0.0
    %207 = vmatpush1.msra.mxu0 0.0
    %208 = vmatprep.subr.mxu0 0.0
    %209 = vmatpush1.msra.mxu0 0.0
    %210 = vmatprep.subr.mxu0 0.0
    %211 = vmatpush1.msra.mxu0 0.0
    %212 = vmatprep.subr.mxu0 0.0
    %213 = vmatpush1.msra.mxu0 0.0
    %214 = vmatprep.subr.mxu0 0.0
    %215 = vmatpush1.msra.mxu0 0.0
    %216 = vmatprep.subr.mxu0 0.0
    %217 = vmatpush1.msra.mxu0 0.0
    %218 = vmatprep.subr.mxu0 0.0
    %219 = vmatpush1.msra.mxu0 0.0
    %220 = vmatprep.subr.mxu0 0.0
    %221 = vmatpush1.msra.mxu0 0.0
    %222 = vmatprep.subr.mxu0 0.0
    %223 = vmatpush1.msra.mxu0 0.0
    %224 = vmatprep.subr.mxu0 0.0
    %225 = vmatpush1.msra.mxu0 0.0
    %226 = vmatprep.subr.mxu0 0.0
    %227 = vmatpush1.msra.mxu0 0.0
    %228 = vmatprep.subr.mxu0 0.0
    %229 = vmatpush1.msra.mxu0 0.0
    %230 = vmatprep.subr.mxu0 0.0
    %231 = vmatpush1.msra.mxu0 %v190
    %232 = vmatprep.subr.mxu0 0.0
    %233 = vmatpush1.msra.mxu0 %v189
    %234 = vmatprep.subr.mxu0 0.0
    %235 = vmatpush2.msra.mxu0 0.0
    %236 = vmatprep.subr.mxu0 0.0
    %237 = vmatpush2.msra.mxu0 0.0
    %238 = vmatprep.subr.mxu0 0.0
    %239 = vmatpush2.msra.mxu0 0.0
    %240 = vmatprep.subr.mxu0 0.0
    %241 = vmatpush2.msra.mxu0 0.0
    %242 = vmatprep.subr.mxu0 0.0
    %243 = vmatpush2.msra.mxu0 0.0
    %244 = vmatprep.subr.mxu0 0.0
    %245 = vmatpush2.msra.mxu0 0.0
    %246 = vmatprep.subr.mxu0 0.0
    %247 = vmatpush2.msra.mxu0 0.0
    %248 = vmatprep.subr.mxu0 0.0
    %249 = vmatpush2.msra.mxu0 0.0
    %250 = vmatprep.subr.mxu0 0.0
    %251 = vmatpush2.msra.mxu0 0.0
    %252 = vmatprep.subr.mxu0 0.0
    %253 = vmatpush2.msra.mxu0 0.0
    %254 = vmatprep.subr.mxu0 0.0
    %255 = vmatpush2.msra.mxu0 0.0
    %256 = vmatprep.subr.mxu0 0.0
    %257 = vmatpush2.msra.mxu0 0.0
    %258 = vmatprep.subr.mxu0 0.0
    %259 = vmatpush2.msra.mxu0 0.0
    %260 = vmatprep.subr.mxu0 0.0
    %261 = vmatpush2.msra.mxu0 0.0
    %262 = vmatprep.subr.mxu0 0.0
    %263 = vmatpush2.msra.mxu0 0.0
    %264 = vmatprep.subr.mxu0 0.0
    %265 = vmatpush2.msra.mxu0 0.0
    %266 = vmatprep.mubr.f32.mxu0 0.0
    %267 = vmatmul.mubr.f32.gmra.mxu0 %v200
    %v268 = vpop.f32.mrf.mxu0
    %v269 = vadd.f32 %v196, %v268
    %v270 = vpop.f32.mrf.mxu0
    %271 = vdwg.mxu0
    %vm272 = vcmp.gt.f32.partialorder %v269, 0.0
    %v273 = vmul.f32 %v269, 0.01
    %v274 = vsel %vm272, %v269, %v273
    %v275 = vlaneseq
    %v276 = vand.u32 %v275, 127
    %vm277 = vcmp.eq.s32.totalorder %v276, 6
    %vm278 = vcmp.lt.s32.totalorder %v276, 6
    %v279 = vld [vmem:[%s11] sm:$0xff]
    %s280 = scalar_lea.vmem %s11, 8
    %v281 = vld [vmem:[%s280] sm:$0xff]
    %v282 = vld [vmem:[#allocation16] sm:$0xff]
    %s283 = scalar_lea.vmem [#allocation16], 8
    %v284 = vld [vmem:[%s283] sm:$0xff]
    %vm285 = vcmp.eq.s32.totalorder %v276, 0
    %v286 = vsel %vm285, 1, 0
    %v287 = vcvt.s32.f32 %v286
    %v288 = vsel %vm277, 0.0, %v287
    %vm289 = vcmask 261120
    %v291 = vsel %vm289, %v279, 0
    %293 = vmatprep.subr.mxu0 0.0
    %294 = vmatpush1.msra.mxu0 0.0
    %295 = vmatprep.subr.mxu0 0.0
    %296 = vmatpush1.msra.mxu0 0.0
    %297 = vmatprep.subr.mxu0 0.0
    %298 = vmatpush1.msra.mxu0 0.0
    %299 = vmatprep.subr.mxu0 0.0
    %300 = vmatpush1.msra.mxu0 0.0
    %301 = vmatprep.subr.mxu0 0.0
    %302 = vmatpush1.msra.mxu0 0.0
    %303 = vmatprep.subr.mxu0 0.0
    %304 = vmatpush1.msra.mxu0 0.0
    %305 = vmatprep.subr.mxu0 0.0
    %306 = vmatpush1.msra.mxu0 0.0
    %307 = vmatprep.subr.mxu0 0.0
    %308 = vmatpush1.msra.mxu0 0.0
    %309 = vmatprep.subr.mxu0 0.0
    %310 = vmatpush1.msra.mxu0 0.0
    %311 = vmatprep.subr.mxu0 0.0
    %312 = vmatpush1.msra.mxu0 0.0
    %313 = vmatprep.subr.mxu0 0.0
    %314 = vmatpush1.msra.mxu0 0.0
    %315 = vmatprep.subr.mxu0 0.0
    %316 = vmatpush1.msra.mxu0 0.0
    %317 = vmatprep.subr.mxu0 0.0
    %318 = vmatpush1.msra.mxu0 %v165
    %319 = vmatprep.subr.mxu0 0.0
    %320 = vmatpush1.msra.mxu0 %v164
    %321 = vmatprep.subr.mxu0 0.0
    %322 = vmatpush1.msra.mxu0 %v163
    %323 = vmatprep.subr.mxu0 0.0
    %324 = vmatpush1.msra.mxu0 %v162
    %325 = vmatprep.subr.mxu0 0.0
    %326 = vmatpush2.msra.mxu0 0.0
    %327 = vmatprep.subr.mxu0 0.0
    %328 = vmatpush2.msra.mxu0 0.0
    %329 = vmatprep.subr.mxu0 0.0
    %330 = vmatpush2.msra.mxu0 0.0
    %331 = vmatprep.subr.mxu0 0.0
    %332 = vmatpush2.msra.mxu0 0.0
    %333 = vmatprep.subr.mxu0 0.0
    %334 = vmatpush2.msra.mxu0 0.0
    %335 = vmatprep.subr.mxu0 0.0
    %336 = vmatpush2.msra.mxu0 0.0
    %337 = vmatprep.subr.mxu0 0.0
    %338 = vmatpush2.msra.mxu0 0.0
    %339 = vmatprep.subr.mxu0 0.0
    %340 = vmatpush2.msra.mxu0 0.0
    %341 = vmatprep.subr.mxu0 0.0
    %342 = vmatpush2.msra.mxu0 0.0
    %343 = vmatprep.subr.mxu0 0.0
    %344 = vmatpush2.msra.mxu0 0.0
    %345 = vmatprep.subr.mxu0 0.0
    %346 = vmatpush2.msra.mxu0 0.0
    %347 = vmatprep.subr.mxu0 0.0
    %348 = vmatpush2.msra.mxu0 0.0
    %349 = vmatprep.subr.mxu0 0.0
    %350 = vmatpush2.msra.mxu0 0.0
    %351 = vmatprep.subr.mxu0 0.0
    %352 = vmatpush2.msra.mxu0 0.0
    %353 = vmatprep.subr.mxu0 0.0
    %354 = vmatpush2.msra.mxu0 0.0
    %355 = vmatprep.subr.mxu0 0.0
    %356 = vmatpush2.msra.mxu0 0.0
    %357 = vmatprep.mubr.f32.mxu0 0.0
    %358 = vmatmul.mubr.f32.gmra.mxu0 %v291
    %v359 = vpop.f32.mrf.mxu0
    %v360 = vadd.f32 0.0, %v359
    %v361 = vpop.f32.mrf.mxu0
    %362 = vdwg.mxu0
    %vm363 = vcmask 56320
    %v365 = vsel %vm363, %v288, 0
    %vm367 = vcmask 1046528
    %v369 = vsel %vm367, %v161, 0
    %371 = vmatprep.subr.mxu0 0.0
    %372 = vmatpush1.msra.mxu0 0.0
    %373 = vmatprep.subr.mxu0 0.0
    %374 = vmatpush1.msra.mxu0 0.0
    %375 = vmatprep.subr.mxu0 0.0
    %376 = vmatpush1.msra.mxu0 0.0
    %377 = vmatprep.subr.mxu0 0.0
    %378 = vmatpush1.msra.mxu0 0.0
    %379 = vmatprep.subr.mxu0 0.0
    %380 = vmatpush1.msra.mxu0 0.0
    %381 = vmatprep.subr.mxu0 0.0
    %382 = vmatpush1.msra.mxu0 0.0
    %383 = vmatprep.subr.mxu0 0.0
    %384 = vmatpush1.msra.mxu0 0.0
    %385 = vmatprep.subr.mxu0 0.0
    %386 = vmatpush1.msra.mxu0 0.0
    %387 = vmatprep.subr.mxu0 0.0
    %388 = vmatpush1.msra.mxu0 0.0
    %389 = vmatprep.subr.mxu0 0.0
    %390 = vmatpush1.msra.mxu0 0.0
    %391 = vmatprep.subr.mxu0 0.0
    %392 = vmatpush1.msra.mxu0 0.0
    %393 = vmatprep.subr.mxu0 0.0
    %394 = vmatpush1.msra.mxu0 0.0
    %395 = vmatprep.subr.mxu0 0.0
    %396 = vmatpush1.msra.mxu0 0.0
    %397 = vmatprep.subr.mxu0 0.0
    %398 = vmatpush1.msra.mxu0 0.0
    %399 = vmatprep.subr.mxu0 0.0
    %400 = vmatpush1.msra.mxu0 0.0
    %401 = vmatprep.subr.mxu0 0.0
    %402 = vmatpush1.msra.mxu0 %v369
    %403 = vmatprep.subr.mxu0 0.0
    %404 = vmatpush2.msra.mxu0 0.0
    %405 = vmatprep.subr.mxu0 0.0
    %406 = vmatpush2.msra.mxu0 0.0
    %407 = vmatprep.subr.mxu0 0.0
    %408 = vmatpush2.msra.mxu0 0.0
    %409 = vmatprep.subr.mxu0 0.0
    %410 = vmatpush2.msra.mxu0 0.0
    %411 = vmatprep.subr.mxu0 0.0
    %412 = vmatpush2.msra.mxu0 0.0
    %413 = vmatprep.subr.mxu0 0.0
    %414 = vmatpush2.msra.mxu0 0.0
    %415 = vmatprep.subr.mxu0 0.0
    %416 = vmatpush2.msra.mxu0 0.0
    %417 = vmatprep.subr.mxu0 0.0
    %418 = vmatpush2.msra.mxu0 0.0
    %419 = vmatprep.subr.mxu0 0.0
    %420 = vmatpush2.msra.mxu0 0.0
    %421 = vmatprep.subr.mxu0 0.0
    %422 = vmatpush2.msra.mxu0 0.0
    %423 = vmatprep.subr.mxu0 0.0
    %424 = vmatpush2.msra.mxu0 0.0
    %425 = vmatprep.subr.mxu0 0.0
    %426 = vmatpush2.msra.mxu0 0.0
    %427 = vmatprep.subr.mxu0 0.0
    %428 = vmatpush2.msra.mxu0 0.0
    %429 = vmatprep.subr.mxu0 0.0
    %430 = vmatpush2.msra.mxu0 0.0
    %431 = vmatprep.subr.mxu0 0.0
    %432 = vmatpush2.msra.mxu0 0.0
    %433 = vmatprep.subr.mxu0 0.0
    %434 = vmatpush2.msra.mxu0 0.0
    %435 = vmatprep.mubr.f32.mxu0 0.0
    %436 = vmatmul.mubr.f32.gmra.mxu0 %v365
    %v437 = vpop.f32.mrf.mxu0
    %v438 = vadd.f32 %v360, %v437
    %v439 = vpop.f32.mrf.mxu0
    %440 = vdwg.mxu0
    %v442 = vlaneseq
    %v443 = vshrl.u32 %v442, 7
    %v444 = vsub.s32 0, %v443
    %v445 = vrot.slane %v175, %v444
    %v447 = vadd.f32 %v438, %v445
    %v448 = vmul.f32 %v447, 0.5
    %v449 = vtanh.pop %v448
    %v450 = vmul.f32 %v449, 0.5
    %v451 = vadd.f32 %v450, 0.5
    %v452 = vtanh.pop %v447
    %454 = vrot.lane.b32.xlu0 %v282, 32
    %v455 = vpop.permute.xlu0 %454
    %v457 = vmul.f32 %v451, %v455
    %459 = vrot.lane.b32.xlu0 %v452, 64
    %v460 = vpop.permute.xlu0 %459
    %v462 = vmul.f32 %v451, %v460
    %464 = vrot.lane.b32.xlu0 %v462, 32
    %v465 = vpop.permute.xlu0 %464
    %v467 = vadd.f32 %v457, %v465
    %v468 = vtanh.pop %v467
    %470 = vrot.lane.b32.xlu0 %v468, 64
    %v471 = vpop.permute.xlu0 %470
    %v473 = vmul.f32 %v451, %v471
    %475 = vrot.lane.b32.xlu0 %v473, 32
    %v476 = vpop.permute.xlu0 %475
    %479 = vrot.lane.b32.xlu0 %v281, 32
    %v480 = vpop.permute.xlu0 %479
    %v482 = vsel %vm289, %v476, %v480
    %v484 = vlaneseq
    %v485 = vshrl.u32 %v484, 7
    %v486 = vsub.s32 0, %v485
    %v487 = vrot.slane %v177, %v486
    %vm489 = vcmask 523264
    %v491 = vsel %vm489, %v482, 0
    %493 = vmatprep.subr.mxu0 0.0
    %494 = vmatpush1.msra.mxu0 0.0
    %495 = vmatprep.subr.mxu0 0.0
    %496 = vmatpush1.msra.mxu0 0.0
    %497 = vmatprep.subr.mxu0 0.0
    %498 = vmatpush1.msra.mxu0 0.0
    %499 = vmatprep.subr.mxu0 0.0
    %500 = vmatpush1.msra.mxu0 0.0
    %501 = vmatprep.subr.mxu0 0.0
    %502 = vmatpush1.msra.mxu0 0.0
    %503 = vmatprep.subr.mxu0 0.0
    %504 = vmatpush1.msra.mxu0 0.0
    %505 = vmatprep.subr.mxu0 0.0
    %506 = vmatpush1.msra.mxu0 0.0
    %507 = vmatprep.subr.mxu0 0.0
    %508 = vmatpush1.msra.mxu0 0.0
    %509 = vmatprep.subr.mxu0 0.0
    %510 = vmatpush1.msra.mxu0 %v174
    %511 = vmatprep.subr.mxu0 0.0
    %512 = vmatpush1.msra.mxu0 %v173
    %513 = vmatprep.subr.mxu0 0.0
    %514 = vmatpush1.msra.mxu0 %v172
    %515 = vmatprep.subr.mxu0 0.0
    %516 = vmatpush1.msra.mxu0 %v171
    %517 = vmatprep.subr.mxu0 0.0
    %518 = vmatpush1.msra.mxu0 %v170
    %519 = vmatprep.subr.mxu0 0.0
    %520 = vmatpush1.msra.mxu0 %v169
    %521 = vmatprep.subr.mxu0 0.0
    %522 = vmatpush1.msra.mxu0 %v168
    %523 = vmatprep.subr.mxu0 0.0
    %524 = vmatpush1.msra.mxu0 %v167
    %525 = vmatprep.subr.mxu0 0.0
    %526 = vmatpush2.msra.mxu0 0.0
    %527 = vmatprep.subr.mxu0 0.0
    %528 = vmatpush2.msra.mxu0 0.0
    %529 = vmatprep.subr.mxu0 0.0
    %530 = vmatpush2.msra.mxu0 0.0
    %531 = vmatprep.subr.mxu0 0.0
    %532 = vmatpush2.msra.mxu0 0.0
    %533 = vmatprep.subr.mxu0 0.0
    %534 = vmatpush2.msra.mxu0 0.0
    %535 = vmatprep.subr.mxu0 0.0
    %536 = vmatpush2.msra.mxu0 0.0
    %537 = vmatprep.subr.mxu0 0.0
    %538 = vmatpush2.msra.mxu0 0.0
    %539 = vmatprep.subr.mxu0 0.0
    %540 = vmatpush2.msra.mxu0 0.0
    %541 = vmatprep.subr.mxu0 0.0
    %542 = vmatpush2.msra.mxu0 0.0
    %543 = vmatprep.subr.mxu0 0.0
    %544 = vmatpush2.msra.mxu0 0.0
    %545 = vmatprep.subr.mxu0 0.0
    %546 = vmatpush2.msra.mxu0 0.0
    %547 = vmatprep.subr.mxu0 0.0
    %548 = vmatpush2.msra.mxu0 0.0
    %549 = vmatprep.subr.mxu0 0.0
    %550 = vmatpush2.msra.mxu0 0.0
    %551 = vmatprep.subr.mxu0 0.0
    %552 = vmatpush2.msra.mxu0 0.0
    %553 = vmatprep.subr.mxu0 0.0
    %554 = vmatpush2.msra.mxu0 0.0
    %555 = vmatprep.subr.mxu0 0.0
    %556 = vmatpush2.msra.mxu0 0.0
    %557 = vmatprep.mubr.f32.mxu0 0.0
    %558 = vmatmul.mubr.f32.gmra.mxu0 %v491
    %v559 = vpop.f32.mrf.mxu0
    %v560 = vadd.f32 %v487, %v559
    %v561 = vpop.f32.mrf.mxu0
    %562 = vdwg.mxu0
    %v563 = vmul.f32 %v560, 0.5
    %v564 = vtanh.pop %v563
    %v565 = vmul.f32 %v564, 0.5
    %v566 = vadd.f32 %v565, 0.5
    %v567 = vtanh.pop %v560
    %569 = vrot.lane.b32.xlu0 %v284, 32
    %v570 = vpop.permute.xlu0 %569
    %v572 = vmul.f32 %v566, %v570
    %574 = vrot.lane.b32.xlu0 %v567, 64
    %v575 = vpop.permute.xlu0 %574
    %v577 = vmul.f32 %v566, %v575
    %579 = vrot.lane.b32.xlu0 %v577, 32
    %v580 = vpop.permute.xlu0 %579
    %v582 = vadd.f32 %v572, %v580
    %v583 = vtanh.pop %v582
    %585 = vrot.lane.b32.xlu0 %v583, 64
    %v586 = vpop.permute.xlu0 %585
    %v588 = vmul.f32 %v566, %v586
    %590 = vrot.lane.b32.xlu0 %v274, 96
    %v591 = vpop.permute.xlu0 %590
    %v593 = vadd.f32 %v588, %v591
    %v595 = vlaneseq
    %v596 = vshrl.u32 %v595, 7
    %v597 = vsub.s32 0, %v596
    %v598 = vrot.slane %v182, %v597
    %601 = vrot.lane.b32.xlu0 %v593, 32
    %v602 = vpop.permute.xlu0 %601
    %v603 = vsel %vm289, %v602, 0
    %605 = vmatprep.subr.mxu0 0.0
    %606 = vmatpush1.msra.mxu0 0.0
    %607 = vmatprep.subr.mxu0 0.0
    %608 = vmatpush1.msra.mxu0 0.0
    %609 = vmatprep.subr.mxu0 0.0
    %610 = vmatpush1.msra.mxu0 0.0
    %611 = vmatprep.subr.mxu0 0.0
    %612 = vmatpush1.msra.mxu0 0.0
    %613 = vmatprep.subr.mxu0 0.0
    %614 = vmatpush1.msra.mxu0 0.0
    %615 = vmatprep.subr.mxu0 0.0
    %616 = vmatpush1.msra.mxu0 0.0
    %617 = vmatprep.subr.mxu0 0.0
    %618 = vmatpush1.msra.mxu0 0.0
    %619 = vmatprep.subr.mxu0 0.0
    %620 = vmatpush1.msra.mxu0 0.0
    %621 = vmatprep.subr.mxu0 0.0
    %622 = vmatpush1.msra.mxu0 0.0
    %623 = vmatprep.subr.mxu0 0.0
    %624 = vmatpush1.msra.mxu0 0.0
    %625 = vmatprep.subr.mxu0 0.0
    %626 = vmatpush1.msra.mxu0 0.0
    %627 = vmatprep.subr.mxu0 0.0
    %628 = vmatpush1.msra.mxu0 0.0
    %629 = vmatprep.subr.mxu0 0.0
    %630 = vmatpush1.msra.mxu0 %v181
    %631 = vmatprep.subr.mxu0 0.0
    %632 = vmatpush1.msra.mxu0 %v180
    %633 = vmatprep.subr.mxu0 0.0
    %634 = vmatpush1.msra.mxu0 %v179
    %635 = vmatprep.subr.mxu0 0.0
    %636 = vmatpush1.msra.mxu0 %v178
    %637 = vmatprep.subr.mxu0 0.0
    %638 = vmatpush2.msra.mxu0 0.0
    %639 = vmatprep.subr.mxu0 0.0
    %640 = vmatpush2.msra.mxu0 0.0
    %641 = vmatprep.subr.mxu0 0.0
    %642 = vmatpush2.msra.mxu0 0.0
    %643 = vmatprep.subr.mxu0 0.0
    %644 = vmatpush2.msra.mxu0 0.0
    %645 = vmatprep.subr.mxu0 0.0
    %646 = vmatpush2.msra.mxu0 0.0
    %647 = vmatprep.subr.mxu0 0.0
    %648 = vmatpush2.msra.mxu0 0.0
    %649 = vmatprep.subr.mxu0 0.0
    %650 = vmatpush2.msra.mxu0 0.0
    %651 = vmatprep.subr.mxu0 0.0
    %652 = vmatpush2.msra.mxu0 0.0
    %653 = vmatprep.subr.mxu0 0.0
    %654 = vmatpush2.msra.mxu0 0.0
    %655 = vmatprep.subr.mxu0 0.0
    %656 = vmatpush2.msra.mxu0 0.0
    %657 = vmatprep.subr.mxu0 0.0
    %658 = vmatpush2.msra.mxu0 0.0
    %659 = vmatprep.subr.mxu0 0.0
    %660 = vmatpush2.msra.mxu0 0.0
    %661 = vmatprep.subr.mxu0 0.0
    %662 = vmatpush2.msra.mxu0 0.0
    %663 = vmatprep.subr.mxu0 0.0
    %664 = vmatpush2.msra.mxu0 0.0
    %665 = vmatprep.subr.mxu0 0.0
    %666 = vmatpush2.msra.mxu0 0.0
    %667 = vmatprep.subr.mxu0 0.0
    %668 = vmatpush2.msra.mxu0 0.0
    %669 = vmatprep.mubr.f32.mxu0 0.0
    %670 = vmatmul.mubr.f32.gmra.mxu0 %v603
    %v671 = vpop.f32.mrf.mxu0
    %v672 = vadd.f32 %v598, %v671
    %v673 = vpop.f32.mrf.mxu0
    %674 = vdwg.mxu0
    %vm675 = vcmp.gt.f32.partialorder %v672, 0.0
    %v676 = vmul.f32 %v672, 0.01
    %v677 = vsel %vm675, %v672, %v676
    %v679 = vlaneseq
    %v680 = vshrl.u32 %v679, 7
    %v681 = vsub.s32 0, %v680
    %v682 = vrot.slane %v187, %v681
    %v685 = vsel %vm289, %v677, 0
    %687 = vmatprep.subr.mxu0 0.0
    %688 = vmatpush1.msra.mxu0 0.0
    %689 = vmatprep.subr.mxu0 0.0
    %690 = vmatpush1.msra.mxu0 0.0
    %691 = vmatprep.subr.mxu0 0.0
    %692 = vmatpush1.msra.mxu0 0.0
    %693 = vmatprep.subr.mxu0 0.0
    %694 = vmatpush1.msra.mxu0 0.0
    %695 = vmatprep.subr.mxu0 0.0
    %696 = vmatpush1.msra.mxu0 0.0
    %697 = vmatprep.subr.mxu0 0.0
    %698 = vmatpush1.msra.mxu0 0.0
    %699 = vmatprep.subr.mxu0 0.0
    %700 = vmatpush1.msra.mxu0 0.0
    %701 = vmatprep.subr.mxu0 0.0
    %702 = vmatpush1.msra.mxu0 0.0
    %703 = vmatprep.subr.mxu0 0.0
    %704 = vmatpush1.msra.mxu0 0.0
    %705 = vmatprep.subr.mxu0 0.0
    %706 = vmatpush1.msra.mxu0 0.0
    %707 = vmatprep.subr.mxu0 0.0
    %708 = vmatpush1.msra.mxu0 0.0
    %709 = vmatprep.subr.mxu0 0.0
    %710 = vmatpush1.msra.mxu0 0.0
    %711 = vmatprep.subr.mxu0 0.0
    %712 = vmatpush1.msra.mxu0 %v186
    %713 = vmatprep.subr.mxu0 0.0
    %714 = vmatpush1.msra.mxu0 %v185
    %715 = vmatprep.subr.mxu0 0.0
    %716 = vmatpush1.msra.mxu0 %v184
    %717 = vmatprep.subr.mxu0 0.0
    %718 = vmatpush1.msra.mxu0 %v183
    %719 = vmatprep.subr.mxu0 0.0
    %720 = vmatpush2.msra.mxu0 0.0
    %721 = vmatprep.subr.mxu0 0.0
    %722 = vmatpush2.msra.mxu0 0.0
    %723 = vmatprep.subr.mxu0 0.0
    %724 = vmatpush2.msra.mxu0 0.0
    %725 = vmatprep.subr.mxu0 0.0
    %726 = vmatpush2.msra.mxu0 0.0
    %727 = vmatprep.subr.mxu0 0.0
    %728 = vmatpush2.msra.mxu0 0.0
    %729 = vmatprep.subr.mxu0 0.0
    %730 = vmatpush2.msra.mxu0 0.0
    %731 = vmatprep.subr.mxu0 0.0
    %732 = vmatpush2.msra.mxu0 0.0
    %733 = vmatprep.subr.mxu0 0.0
    %734 = vmatpush2.msra.mxu0 0.0
    %735 = vmatprep.subr.mxu0 0.0
    %736 = vmatpush2.msra.mxu0 0.0
    %737 = vmatprep.subr.mxu0 0.0
    %738 = vmatpush2.msra.mxu0 0.0
    %739 = vmatprep.subr.mxu0 0.0
    %740 = vmatpush2.msra.mxu0 0.0
    %741 = vmatprep.subr.mxu0 0.0
    %742 = vmatpush2.msra.mxu0 0.0
    %743 = vmatprep.subr.mxu0 0.0
    %744 = vmatpush2.msra.mxu0 0.0
    %745 = vmatprep.subr.mxu0 0.0
    %746 = vmatpush2.msra.mxu0 0.0
    %747 = vmatprep.subr.mxu0 0.0
    %748 = vmatpush2.msra.mxu0 0.0
    %749 = vmatprep.subr.mxu0 0.0
    %750 = vmatpush2.msra.mxu0 0.0
    %751 = vmatprep.mubr.f32.mxu0 0.0
    %752 = vmatmul.mubr.f32.gmra.mxu0 %v685
    %v753 = vpop.f32.mrf.mxu0
    %v754 = vadd.f32 %v682, %v753
    %v755 = vpop.f32.mrf.mxu0
    %756 = vdwg.mxu0
    %757 = vst [vmem:[#allocation17] sm:$0xff] %v754
    %v758 = vsel %vm278, %v754, -inf
    %759 = vmax.xlane.f32.xlu0 %v758
    %v760 = vpop.xlane.xlu0 %759
    %vm761 = vcmp.eq.f32.partialorder %v758, %v760
    %v762 = vsel %vm761, %v276, 128
    %v763 = vand.u32 %v762, 65535
    %v764 = vshra.s32 %v762, 16
    %v765 = vcvt.s32.f32 %v763
    %v766 = vcvt.s32.f32 %v764
    %767 = vmin.xlane.f32.xlu0 %v766
    %v768 = vpop.xlane.xlu0 %767
    %vm769 = vcmp.eq.f32.partialorder %v766, %v768
    %v770 = vsel %vm769, %v765, inf
    %771 = vmin.xlane.f32.xlu0 %v770
    %v772 = vpop.xlane.xlu0 %771
    %v773 = vcvt.f32.s32 %v772
    %v774 = vcvt.f32.s32 %v768
    %v775 = vshll.u32 %v774, 16
    %v776 = vadd.s32 %v775, %v773
    %v777 = vsel %vm277, %v754, 0.0
    %778 = vadd.xlane.f32.xlu0 %v777
    %v779 = vpop.xlane.xlu0 %778
    %v780 = vmul.f32 %v779, 0.5
    %v781 = vtanh.pop %v780
    %v782 = vmul.f32 %v781, 0.5
    %v783 = vadd.f32 %v782, 0.5
    %vm784 = vcmp.eq.s32.totalorder %v276, %v776
    %v785 = vsel %vm784, 1, 0
    %v786 = vcvt.s32.f32 %v785
    %v787 = vsel %vm277, %v783, %v786
    %v788 = vsel %vm289, %v476, 0
    %790 = vmatprep.subr.mxu0 0.0
    %791 = vmatpush1.msra.mxu0 0.0
    %792 = vmatprep.subr.mxu0 0.0
    %793 = vmatpush1.msra.mxu0 0.0
    %794 = vmatprep.subr.mxu0 0.0
    %795 = vmatpush1.msra.mxu0 0.0
    %796 = vmatprep.subr.mxu0 0.0
    %797 = vmatpush1.msra.mxu0 0.0
    %798 = vmatprep.subr.mxu0 0.0
    %799 = vmatpush1.msra.mxu0 0.0
    %800 = vmatprep.subr.mxu0 0.0
    %801 = vmatpush1.msra.mxu0 0.0
    %802 = vmatprep.subr.mxu0 0.0
    %803 = vmatpush1.msra.mxu0 0.0
    %804 = vmatprep.subr.mxu0 0.0
    %805 = vmatpush1.msra.mxu0 0.0
    %806 = vmatprep.subr.mxu0 0.0
    %807 = vmatpush1.msra.mxu0 0.0
    %808 = vmatprep.subr.mxu0 0.0
    %809 = vmatpush1.msra.mxu0 0.0
    %810 = vmatprep.subr.mxu0 0.0
    %811 = vmatpush1.msra.mxu0 0.0
    %812 = vmatprep.subr.mxu0 0.0
    %813 = vmatpush1.msra.mxu0 0.0
    %814 = vmatprep.subr.mxu0 0.0
    %815 = vmatpush1.msra.mxu0 %v165
    %816 = vmatprep.subr.mxu0 0.0
    %817 = vmatpush1.msra.mxu0 %v164
    %818 = vmatprep.subr.mxu0 0.0
    %819 = vmatpush1.msra.mxu0 %v163
    %820 = vmatprep.subr.mxu0 0.0
    %821 = vmatpush1.msra.mxu0 %v162
    %822 = vmatprep.subr.mxu0 0.0
    %823 = vmatpush2.msra.mxu0 0.0
    %824 = vmatprep.subr.mxu0 0.0
    %825 = vmatpush2.msra.mxu0 0.0
    %826 = vmatprep.subr.mxu0 0.0
    %827 = vmatpush2.msra.mxu0 0.0
    %828 = vmatprep.subr.mxu0 0.0
    %829 = vmatpush2.msra.mxu0 0.0
    %830 = vmatprep.subr.mxu0 0.0
    %831 = vmatpush2.msra.mxu0 0.0
    %832 = vmatprep.subr.mxu0 0.0
    %833 = vmatpush2.msra.mxu0 0.0
    %834 = vmatprep.subr.mxu0 0.0
    %835 = vmatpush2.msra.mxu0 0.0
    %836 = vmatprep.subr.mxu0 0.0
    %837 = vmatpush2.msra.mxu0 0.0
    %838 = vmatprep.subr.mxu0 0.0
    %839 = vmatpush2.msra.mxu0 0.0
    %840 = vmatprep.subr.mxu0 0.0
    %841 = vmatpush2.msra.mxu0 0.0
    %842 = vmatprep.subr.mxu0 0.0
    %843 = vmatpush2.msra.mxu0 0.0
    %844 = vmatprep.subr.mxu0 0.0
    %845 = vmatpush2.msra.mxu0 0.0
    %846 = vmatprep.subr.mxu0 0.0
    %847 = vmatpush2.msra.mxu0 0.0
    %848 = vmatprep.subr.mxu0 0.0
    %849 = vmatpush2.msra.mxu0 0.0
    %850 = vmatprep.subr.mxu0 0.0
    %851 = vmatpush2.msra.mxu0 0.0
    %852 = vmatprep.subr.mxu0 0.0
    %853 = vmatpush2.msra.mxu0 0.0
    %854 = vmatprep.mubr.f32.mxu0 0.0
    %855 = vmatmul.mubr.f32.gmra.mxu0 %v788
    %v856 = vpop.f32.mrf.mxu0
    %v857 = vadd.f32 0.0, %v856
    %v858 = vpop.f32.mrf.mxu0
    %859 = vdwg.mxu0
    %v861 = vsel %vm363, %v787, 0
    %863 = vmatprep.subr.mxu0 0.0
    %864 = vmatpush1.msra.mxu0 0.0
    %865 = vmatprep.subr.mxu0 0.0
    %866 = vmatpush1.msra.mxu0 0.0
    %867 = vmatprep.subr.mxu0 0.0
    %868 = vmatpush1.msra.mxu0 0.0
    %869 = vmatprep.subr.mxu0 0.0
    %870 = vmatpush1.msra.mxu0 0.0
    %871 = vmatprep.subr.mxu0 0.0
    %872 = vmatpush1.msra.mxu0 0.0
    %873 = vmatprep.subr.mxu0 0.0
    %874 = vmatpush1.msra.mxu0 0.0
    %875 = vmatprep.subr.mxu0 0.0
    %876 = vmatpush1.msra.mxu0 0.0
    %877 = vmatprep.subr.mxu0 0.0
    %878 = vmatpush1.msra.mxu0 0.0
    %879 = vmatprep.subr.mxu0 0.0
    %880 = vmatpush1.msra.mxu0 0.0
    %881 = vmatprep.subr.mxu0 0.0
    %882 = vmatpush1.msra.mxu0 0.0
    %883 = vmatprep.subr.mxu0 0.0
    %884 = vmatpush1.msra.mxu0 0.0
    %885 = vmatprep.subr.mxu0 0.0
    %886 = vmatpush1.msra.mxu0 0.0
    %887 = vmatprep.subr.mxu0 0.0
    %888 = vmatpush1.msra.mxu0 0.0
    %889 = vmatprep.subr.mxu0 0.0
    %890 = vmatpush1.msra.mxu0 0.0
    %891 = vmatprep.subr.mxu0 0.0
    %892 = vmatpush1.msra.mxu0 0.0
    %893 = vmatprep.subr.mxu0 0.0
    %894 = vmatpush1.msra.mxu0 %v369
    %895 = vmatprep.subr.mxu0 0.0
    %896 = vmatpush2.msra.mxu0 0.0
    %897 = vmatprep.subr.mxu0 0.0
    %898 = vmatpush2.msra.mxu0 0.0
    %899 = vmatprep.subr.mxu0 0.0
    %900 = vmatpush2.msra.mxu0 0.0
    %901 = vmatprep.subr.mxu0 0.0
    %902 = vmatpush2.msra.mxu0 0.0
    %903 = vmatprep.subr.mxu0 0.0
    %904 = vmatpush2.msra.mxu0 0.0
    %905 = vmatprep.subr.mxu0 0.0
    %906 = vmatpush2.msra.mxu0 0.0
    %907 = vmatprep.subr.mxu0 0.0
    %908 = vmatpush2.msra.mxu0 0.0
    %909 = vmatprep.subr.mxu0 0.0
    %910 = vmatpush2.msra.mxu0 0.0
    %911 = vmatprep.subr.mxu0 0.0
    %912 = vmatpush2.msra.mxu0 0.0
    %913 = vmatprep.subr.mxu0 0.0
    %914 = vmatpush2.msra.mxu0 0.0
    %915 = vmatprep.subr.mxu0 0.0
    %916 = vmatpush2.msra.mxu0 0.0
    %917 = vmatprep.subr.mxu0 0.0
    %918 = vmatpush2.msra.mxu0 0.0
    %919 = vmatprep.subr.mxu0 0.0
    %920 = vmatpush2.msra.mxu0 0.0
    %921 = vmatprep.subr.mxu0 0.0
    %922 = vmatpush2.msra.mxu0 0.0
    %923 = vmatprep.subr.mxu0 0.0
    %924 = vmatpush2.msra.mxu0 0.0
    %925 = vmatprep.subr.mxu0 0.0
    %926 = vmatpush2.msra.mxu0 0.0
    %927 = vmatprep.mubr.f32.mxu0 0.0
    %928 = vmatmul.mubr.f32.gmra.mxu0 %v861
    %v929 = vpop.f32.mrf.mxu0
    %v930 = vadd.f32 %v857, %v929
    %v931 = vpop.f32.mrf.mxu0
    %932 = vdwg.mxu0
    %v933 = vadd.f32 %v930, %v445
    %v934 = vmul.f32 %v933, 0.5
    %v935 = vtanh.pop %v934
    %v936 = vmul.f32 %v935, 0.5
    %v937 = vadd.f32 %v936, 0.5
    %v938 = vtanh.pop %v933
    %v939 = vmul.f32 %v937, %v467
    %941 = vrot.lane.b32.xlu0 %v938, 64
    %v942 = vpop.permute.xlu0 %941
    %v944 = vmul.f32 %v937, %v942
    %946 = vrot.lane.b32.xlu0 %v944, 32
    %v947 = vpop.permute.xlu0 %946
    %v949 = vadd.f32 %v939, %v947
    %v950 = vtanh.pop %v949
    %952 = vrot.lane.b32.xlu0 %v950, 64
    %v953 = vpop.permute.xlu0 %952
    %v955 = vmul.f32 %v937, %v953
    %957 = vrot.lane.b32.xlu0 %v955, 32
    %v958 = vpop.permute.xlu0 %957
    %961 = vrot.lane.b32.xlu0 %v588, 64
    %v962 = vpop.permute.xlu0 %961
    %v964 = vsel %vm289, %v958, %v962
    %v966 = vsel %vm489, %v964, 0
    %968 = vmatprep.subr.mxu0 0.0
    %969 = vmatpush1.msra.mxu0 0.0
    %970 = vmatprep.subr.mxu0 0.0
    %971 = vmatpush1.msra.mxu0 0.0
    %972 = vmatprep.subr.mxu0 0.0
    %973 = vmatpush1.msra.mxu0 0.0
    %974 = vmatprep.subr.mxu0 0.0
    %975 = vmatpush1.msra.mxu0 0.0
    %976 = vmatprep.subr.mxu0 0.0
    %977 = vmatpush1.msra.mxu0 0.0
    %978 = vmatprep.subr.mxu0 0.0
    %979 = vmatpush1.msra.mxu0 0.0
    %980 = vmatprep.subr.mxu0 0.0
    %981 = vmatpush1.msra.mxu0 0.0
    %982 = vmatprep.subr.mxu0 0.0
    %983 = vmatpush1.msra.mxu0 0.0
    %984 = vmatprep.subr.mxu0 0.0
    %985 = vmatpush1.msra.mxu0 %v174
    %986 = vmatprep.subr.mxu0 0.0
    %987 = vmatpush1.msra.mxu0 %v173
    %988 = vmatprep.subr.mxu0 0.0
    %989 = vmatpush1.msra.mxu0 %v172
    %990 = vmatprep.subr.mxu0 0.0
    %991 = vmatpush1.msra.mxu0 %v171
    %992 = vmatprep.subr.mxu0 0.0
    %993 = vmatpush1.msra.mxu0 %v170
    %994 = vmatprep.subr.mxu0 0.0
    %995 = vmatpush1.msra.mxu0 %v169
    %996 = vmatprep.subr.mxu0 0.0
    %997 = vmatpush1.msra.mxu0 %v168
    %998 = vmatprep.subr.mxu0 0.0
    %999 = vmatpush1.msra.mxu0 %v167
    %1000 = vmatprep.subr.mxu0 0.0
    %1001 = vmatpush2.msra.mxu0 0.0
    %1002 = vmatprep.subr.mxu0 0.0
    %1003 = vmatpush2.msra.mxu0 0.0
    %1004 = vmatprep.subr.mxu0 0.0
    %1005 = vmatpush2.msra.mxu0 0.0
    %1006 = vmatprep.subr.mxu0 0.0
    %1007 = vmatpush2.msra.mxu0 0.0
    %1008 = vmatprep.subr.mxu0 0.0
    %1009 = vmatpush2.msra.mxu0 0.0
    %1010 = vmatprep.subr.mxu0 0.0
    %1011 = vmatpush2.msra.mxu0 0.0
    %1012 = vmatprep.subr.mxu0 0.0
    %1013 = vmatpush2.msra.mxu0 0.0
    %1014 = vmatprep.subr.mxu0 0.0
    %1015 = vmatpush2.msra.mxu0 0.0
    %1016 = vmatprep.subr.mxu0 0.0
    %1017 = vmatpush2.msra.mxu0 0.0
    %1018 = vmatprep.subr.mxu0 0.0
    %1019 = vmatpush2.msra.mxu0 0.0
    %1020 = vmatprep.subr.mxu0 0.0
    %1021 = vmatpush2.msra.mxu0 0.0
    %1022 = vmatprep.subr.mxu0 0.0
    %1023 = vmatpush2.msra.mxu0 0.0
    %1024 = vmatprep.subr.mxu0 0.0
    %1025 = vmatpush2.msra.mxu0 0.0
    %1026 = vmatprep.subr.mxu0 0.0
    %1027 = vmatpush2.msra.mxu0 0.0
    %1028 = vmatprep.subr.mxu0 0.0
    %1029 = vmatpush2.msra.mxu0 0.0
    %1030 = vmatprep.subr.mxu0 0.0
    %1031 = vmatpush2.msra.mxu0 0.0
    %1032 = vmatprep.mubr.f32.mxu0 0.0
    %1033 = vmatmul.mubr.f32.gmra.mxu0 %v966
    %v1034 = vpop.f32.mrf.mxu0
    %v1035 = vadd.f32 %v487, %v1034
    %v1036 = vpop.f32.mrf.mxu0
    %1037 = vdwg.mxu0
    %v1038 = vmul.f32 %v1035, 0.5
    %v1039 = vtanh.pop %v1038
    %v1040 = vmul.f32 %v1039, 0.5
    %v1041 = vadd.f32 %v1040, 0.5
    %v1042 = vtanh.pop %v1035
    %v1043 = vmul.f32 %v1041, %v582
    %1045 = vrot.lane.b32.xlu0 %v1042, 64
    %v1046 = vpop.permute.xlu0 %1045
    %v1048 = vmul.f32 %v1041, %v1046
    %1050 = vrot.lane.b32.xlu0 %v1048, 32
    %v1051 = vpop.permute.xlu0 %1050
    %v1053 = vadd.f32 %v1043, %v1051
    %v1054 = vtanh.pop %v1053
    %1056 = vrot.lane.b32.xlu0 %v1054, 64
    %v1057 = vpop.permute.xlu0 %1056
    %v1059 = vmul.f32 %v1041, %v1057
    %v1060 = vadd.f32 %v1059, %v591
    %1062 = vrot.lane.b32.xlu0 %v1060, 32
    %v1063 = vpop.permute.xlu0 %1062
    %v1064 = vsel %vm289, %v1063, 0
    %1066 = vmatprep.subr.mxu0 0.0
    %1067 = vmatpush1.msra.mxu0 0.0
    %1068 = vmatprep.subr.mxu0 0.0
    %1069 = vmatpush1.msra.mxu0 0.0
    %1070 = vmatprep.subr.mxu0 0.0
    %1071 = vmatpush1.msra.mxu0 0.0
    %1072 = vmatprep.subr.mxu0 0.0
    %1073 = vmatpush1.msra.mxu0 0.0
    %1074 = vmatprep.subr.mxu0 0.0
    %1075 = vmatpush1.msra.mxu0 0.0
    %1076 = vmatprep.subr.mxu0 0.0
    %1077 = vmatpush1.msra.mxu0 0.0
    %1078 = vmatprep.subr.mxu0 0.0
    %1079 = vmatpush1.msra.mxu0 0.0
    %1080 = vmatprep.subr.mxu0 0.0
    %1081 = vmatpush1.msra.mxu0 0.0
    %1082 = vmatprep.subr.mxu0 0.0
    %1083 = vmatpush1.msra.mxu0 0.0
    %1084 = vmatprep.subr.mxu0 0.0
    %1085 = vmatpush1.msra.mxu0 0.0
    %1086 = vmatprep.subr.mxu0 0.0
    %1087 = vmatpush1.msra.mxu0 0.0
    %1088 = vmatprep.subr.mxu0 0.0
    %1089 = vmatpush1.msra.mxu0 0.0
    %1090 = vmatprep.subr.mxu0 0.0
    %1091 = vmatpush1.msra.mxu0 %v181
    %1092 = vmatprep.subr.mxu0 0.0
    %1093 = vmatpush1.msra.mxu0 %v180
    %1094 = vmatprep.subr.mxu0 0.0
    %1095 = vmatpush1.msra.mxu0 %v179
    %1096 = vmatprep.subr.mxu0 0.0
    %1097 = vmatpush1.msra.mxu0 %v178
    %1098 = vmatprep.subr.mxu0 0.0
    %1099 = vmatpush2.msra.mxu0 0.0
    %1100 = vmatprep.subr.mxu0 0.0
    %1101 = vmatpush2.msra.mxu0 0.0
    %1102 = vmatprep.subr.mxu0 0.0
    %1103 = vmatpush2.msra.mxu0 0.0
    %1104 = vmatprep.subr.mxu0 0.0
    %1105 = vmatpush2.msra.mxu0 0.0
    %1106 = vmatprep.subr.mxu0 0.0
    %1107 = vmatpush2.msra.mxu0 0.0
    %1108 = vmatprep.subr.mxu0 0.0
    %1109 = vmatpush2.msra.mxu0 0.0
    %1110 = vmatprep.subr.mxu0 0.0
    %1111 = vmatpush2.msra.mxu0 0.0
    %1112 = vmatprep.subr.mxu0 0.0
    %1113 = vmatpush2.msra.mxu0 0.0
    %1114 = vmatprep.subr.mxu0 0.0
    %1115 = vmatpush2.msra.mxu0 0.0
    %1116 = vmatprep.subr.mxu0 0.0
    %1117 = vmatpush2.msra.mxu0 0.0
    %1118 = vmatprep.subr.mxu0 0.0
    %1119 = vmatpush2.msra.mxu0 0.0
    %1120 = vmatprep.subr.mxu0 0.0
    %1121 = vmatpush2.msra.mxu0 0.0
    %1122 = vmatprep.subr.mxu0 0.0
    %1123 = vmatpush2.msra.mxu0 0.0
    %1124 = vmatprep.subr.mxu0 0.0
    %1125 = vmatpush2.msra.mxu0 0.0
    %1126 = vmatprep.subr.mxu0 0.0
    %1127 = vmatpush2.msra.mxu0 0.0
    %1128 = vmatprep.subr.mxu0 0.0
    %1129 = vmatpush2.msra.mxu0 0.0
    %1130 = vmatprep.mubr.f32.mxu0 0.0
    %1131 = vmatmul.mubr.f32.gmra.mxu0 %v1064
    %v1132 = vpop.f32.mrf.mxu0
    %v1133 = vadd.f32 %v598, %v1132
    %v1134 = vpop.f32.mrf.mxu0
    %1135 = vdwg.mxu0
    %vm1136 = vcmp.gt.f32.partialorder %v1133, 0.0
    %v1137 = vmul.f32 %v1133, 0.01
    %v1138 = vsel %vm1136, %v1133, %v1137
    %v1140 = vsel %vm289, %v1138, 0
    %1142 = vmatprep.subr.mxu0 0.0
    %1143 = vmatpush1.msra.mxu0 0.0
    %1144 = vmatprep.subr.mxu0 0.0
    %1145 = vmatpush1.msra.mxu0 0.0
    %1146 = vmatprep.subr.mxu0 0.0
    %1147 = vmatpush1.msra.mxu0 0.0
    %1148 = vmatprep.subr.mxu0 0.0
    %1149 = vmatpush1.msra.mxu0 0.0
    %1150 = vmatprep.subr.mxu0 0.0
    %1151 = vmatpush1.msra.mxu0 0.0
    %1152 = vmatprep.subr.mxu0 0.0
    %1153 = vmatpush1.msra.mxu0 0.0
    %1154 = vmatprep.subr.mxu0 0.0
    %1155 = vmatpush1.msra.mxu0 0.0
    %1156 = vmatprep.subr.mxu0 0.0
    %1157 = vmatpush1.msra.mxu0 0.0
    %1158 = vmatprep.subr.mxu0 0.0
    %1159 = vmatpush1.msra.mxu0 0.0
    %1160 = vmatprep.subr.mxu0 0.0
    %1161 = vmatpush1.msra.mxu0 0.0
    %1162 = vmatprep.subr.mxu0 0.0
    %1163 = vmatpush1.msra.mxu0 0.0
    %1164 = vmatprep.subr.mxu0 0.0
    %1165 = vmatpush1.msra.mxu0 0.0
    %1166 = vmatprep.subr.mxu0 0.0
    %1167 = vmatpush1.msra.mxu0 %v186
    %1168 = vmatprep.subr.mxu0 0.0
    %1169 = vmatpush1.msra.mxu0 %v185
    %1170 = vmatprep.subr.mxu0 0.0
    %1171 = vmatpush1.msra.mxu0 %v184
    %1172 = vmatprep.subr.mxu0 0.0
    %1173 = vmatpush1.msra.mxu0 %v183
    %1174 = vmatprep.subr.mxu0 0.0
    %1175 = vmatpush2.msra.mxu0 0.0
    %1176 = vmatprep.subr.mxu0 0.0
    %1177 = vmatpush2.msra.mxu0 0.0
    %1178 = vmatprep.subr.mxu0 0.0
    %1179 = vmatpush2.msra.mxu0 0.0
    %1180 = vmatprep.subr.mxu0 0.0
    %1181 = vmatpush2.msra.mxu0 0.0
    %1182 = vmatprep.subr.mxu0 0.0
    %1183 = vmatpush2.msra.mxu0 0.0
    %1184 = vmatprep.subr.mxu0 0.0
    %1185 = vmatpush2.msra.mxu0 0.0
    %1186 = vmatprep.subr.mxu0 0.0
    %1187 = vmatpush2.msra.mxu0 0.0
    %1188 = vmatprep.subr.mxu0 0.0
    %1189 = vmatpush2.msra.mxu0 0.0
    %1190 = vmatprep.subr.mxu0 0.0
    %1191 = vmatpush2.msra.mxu0 0.0
    %1192 = vmatprep.subr.mxu0 0.0
    %1193 = vmatpush2.msra.mxu0 0.0
    %1194 = vmatprep.subr.mxu0 0.0
    %1195 = vmatpush2.msra.mxu0 0.0
    %1196 = vmatprep.subr.mxu0 0.0
    %1197 = vmatpush2.msra.mxu0 0.0
    %1198 = vmatprep.subr.mxu0 0.0
    %1199 = vmatpush2.msra.mxu0 0.0
    %1200 = vmatprep.subr.mxu0 0.0
    %1201 = vmatpush2.msra.mxu0 0.0
    %1202 = vmatprep.subr.mxu0 0.0
    %1203 = vmatpush2.msra.mxu0 0.0
    %1204 = vmatprep.subr.mxu0 0.0
    %1205 = vmatpush2.msra.mxu0 0.0
    %1206 = vmatprep.mubr.f32.mxu0 0.0
    %1207 = vmatmul.mubr.f32.gmra.mxu0 %v1140
    %v1208 = vpop.f32.mrf.mxu0
    %v1209 = vadd.f32 %v682, %v1208
    %v1210 = vpop.f32.mrf.mxu0
    %1211 = vdwg.mxu0
    %s1212 = scalar_lea.vmem [#allocation17], 8
    %1213 = vst [vmem:[%s1212] sm:$0xff] %v1209
    %v1214 = vsel %vm278, %v1209, -inf
    %1215 = vmax.xlane.f32.xlu0 %v1214
    %v1216 = vpop.xlane.xlu0 %1215
    %vm1217 = vcmp.eq.f32.partialorder %v1214, %v1216
    %v1218 = vsel %vm1217, %v276, 128
    %v1219 = vand.u32 %v1218, 65535
    %v1220 = vshra.s32 %v1218, 16
    %v1221 = vcvt.s32.f32 %v1219
    %v1222 = vcvt.s32.f32 %v1220
    %1223 = vmin.xlane.f32.xlu0 %v1222
    %v1224 = vpop.xlane.xlu0 %1223
    %vm1225 = vcmp.eq.f32.partialorder %v1222, %v1224
    %v1226 = vsel %vm1225, %v1221, inf
    %1227 = vmin.xlane.f32.xlu0 %v1226
    %v1228 = vpop.xlane.xlu0 %1227
    %v1229 = vcvt.f32.s32 %v1228
    %v1230 = vcvt.f32.s32 %v1224
    %v1231 = vshll.u32 %v1230, 16
    %v1232 = vadd.s32 %v1231, %v1229
    %v1233 = vsel %vm277, %v1209, 0.0
    %1234 = vadd.xlane.f32.xlu0 %v1233
    %v1235 = vpop.xlane.xlu0 %1234
    %v1236 = vmul.f32 %v1235, 0.5
    %v1237 = vtanh.pop %v1236
    %v1238 = vmul.f32 %v1237, 0.5
    %v1239 = vadd.f32 %v1238, 0.5
    %vm1240 = vcmp.eq.s32.totalorder %v276, %v1232
    %v1241 = vsel %vm1240, 1, 0
    %v1242 = vcvt.s32.f32 %v1241
    %v1243 = vsel %vm277, %v1239, %v1242
    %v1244 = vsel %vm289, %v958, 0
    %1246 = vmatprep.subr.mxu0 0.0
    %1247 = vmatpush1.msra.mxu0 0.0
    %1248 = vmatprep.subr.mxu0 0.0
    %1249 = vmatpush1.msra.mxu0 0.0
    %1250 = vmatprep.subr.mxu0 0.0
    %1251 = vmatpush1.msra.mxu0 0.0
    %1252 = vmatprep.subr.mxu0 0.0
    %1253 = vmatpush1.msra.mxu0 0.0
    %1254 = vmatprep.subr.mxu0 0.0
    %1255 = vmatpush1.msra.mxu0 0.0
    %1256 = vmatprep.subr.mxu0 0.0
    %1257 = vmatpush1.msra.mxu0 0.0
    %1258 = vmatprep.subr.mxu0 0.0
    %1259 = vmatpush1.msra.mxu0 0.0
    %1260 = vmatprep.subr.mxu0 0.0
    %1261 = vmatpush1.msra.mxu0 0.0
    %1262 = vmatprep.subr.mxu0 0.0
    %1263 = vmatpush1.msra.mxu0 0.0
    %1264 = vmatprep.subr.mxu0 0.0
    %1265 = vmatpush1.msra.mxu0 0.0
    %1266 = vmatprep.subr.mxu0 0.0
    %1267 = vmatpush1.msra.mxu0 0.0
    %1268 = vmatprep.subr.mxu0 0.0
    %1269 = vmatpush1.msra.mxu0 0.0
    %1270 = vmatprep.subr.mxu0 0.0
    %1271 = vmatpush1.msra.mxu0 %v165
    %1272 = vmatprep.subr.mxu0 0.0
    %1273 = vmatpush1.msra.mxu0 %v164
    %1274 = vmatprep.subr.mxu0 0.0
    %1275 = vmatpush1.msra.mxu0 %v163
    %1276 = vmatprep.subr.mxu0 0.0
    %1277 = vmatpush1.msra.mxu0 %v162
    %1278 = vmatprep.subr.mxu0 0.0
    %1279 = vmatpush2.msra.mxu0 0.0
    %1280 = vmatprep.subr.mxu0 0.0
    %1281 = vmatpush2.msra.mxu0 0.0
    %1282 = vmatprep.subr.mxu0 0.0
    %1283 = vmatpush2.msra.mxu0 0.0
    %1284 = vmatprep.subr.mxu0 0.0
    %1285 = vmatpush2.msra.mxu0 0.0
    %1286 = vmatprep.subr.mxu0 0.0
    %1287 = vmatpush2.msra.mxu0 0.0
    %1288 = vmatprep.subr.mxu0 0.0
    %1289 = vmatpush2.msra.mxu0 0.0
    %1290 = vmatprep.subr.mxu0 0.0
    %1291 = vmatpush2.msra.mxu0 0.0
    %1292 = vmatprep.subr.mxu0 0.0
    %1293 = vmatpush2.msra.mxu0 0.0
    %1294 = vmatprep.subr.mxu0 0.0
    %1295 = vmatpush2.msra.mxu0 0.0
    %1296 = vmatprep.subr.mxu0 0.0
    %1297 = vmatpush2.msra.mxu0 0.0
    %1298 = vmatprep.subr.mxu0 0.0
    %1299 = vmatpush2.msra.mxu0 0.0
    %1300 = vmatprep.subr.mxu0 0.0
    %1301 = vmatpush2.msra.mxu0 0.0
    %1302 = vmatprep.subr.mxu0 0.0
    %1303 = vmatpush2.msra.mxu0 0.0
    %1304 = vmatprep.subr.mxu0 0.0
    %1305 = vmatpush2.msra.mxu0 0.0
    %1306 = vmatprep.subr.mxu0 0.0
    %1307 = vmatpush2.msra.mxu0 0.0
    %1308 = vmatprep.subr.mxu0 0.0
    %1309 = vmatpush2.msra.mxu0 0.0
    %1310 = vmatprep.mubr.f32.mxu0 0.0
    %1311 = vmatmul.mubr.f32.gmra.mxu0 %v1244
    %v1312 = vpop.f32.mrf.mxu0
    %v1313 = vadd.f32 0.0, %v1312
    %v1314 = vpop.f32.mrf.mxu0
    %1315 = vdwg.mxu0
    %v1317 = vsel %vm363, %v1243, 0
    %1319 = vmatprep.subr.mxu0 0.0
    %1320 = vmatpush1.msra.mxu0 0.0
    %1321 = vmatprep.subr.mxu0 0.0
    %1322 = vmatpush1.msra.mxu0 0.0
    %1323 = vmatprep.subr.mxu0 0.0
    %1324 = vmatpush1.msra.mxu0 0.0
    %1325 = vmatprep.subr.mxu0 0.0
    %1326 = vmatpush1.msra.mxu0 0.0
    %1327 = vmatprep.subr.mxu0 0.0
    %1328 = vmatpush1.msra.mxu0 0.0
    %1329 = vmatprep.subr.mxu0 0.0
    %1330 = vmatpush1.msra.mxu0 0.0
    %1331 = vmatprep.subr.mxu0 0.0
    %1332 = vmatpush1.msra.mxu0 0.0
    %1333 = vmatprep.subr.mxu0 0.0
    %1334 = vmatpush1.msra.mxu0 0.0
    %1335 = vmatprep.subr.mxu0 0.0
    %1336 = vmatpush1.msra.mxu0 0.0
    %1337 = vmatprep.subr.mxu0 0.0
    %1338 = vmatpush1.msra.mxu0 0.0
    %1339 = vmatprep.subr.mxu0 0.0
    %1340 = vmatpush1.msra.mxu0 0.0
    %1341 = vmatprep.subr.mxu0 0.0
    %1342 = vmatpush1.msra.mxu0 0.0
    %1343 = vmatprep.subr.mxu0 0.0
    %1344 = vmatpush1.msra.mxu0 0.0
    %1345 = vmatprep.subr.mxu0 0.0
    %1346 = vmatpush1.msra.mxu0 0.0
    %1347 = vmatprep.subr.mxu0 0.0
    %1348 = vmatpush1.msra.mxu0 0.0
    %1349 = vmatprep.subr.mxu0 0.0
    %1350 = vmatpush1.msra.mxu0 %v369
    %1351 = vmatprep.subr.mxu0 0.0
    %1352 = vmatpush2.msra.mxu0 0.0
    %1353 = vmatprep.subr.mxu0 0.0
    %1354 = vmatpush2.msra.mxu0 0.0
    %1355 = vmatprep.subr.mxu0 0.0
    %1356 = vmatpush2.msra.mxu0 0.0
    %1357 = vmatprep.subr.mxu0 0.0
    %1358 = vmatpush2.msra.mxu0 0.0
    %1359 = vmatprep.subr.mxu0 0.0
    %1360 = vmatpush2.msra.mxu0 0.0
    %1361 = vmatprep.subr.mxu0 0.0
    %1362 = vmatpush2.msra.mxu0 0.0
    %1363 = vmatprep.subr.mxu0 0.0
    %1364 = vmatpush2.msra.mxu0 0.0
    %1365 = vmatprep.subr.mxu0 0.0
    %1366 = vmatpush2.msra.mxu0 0.0
    %1367 = vmatprep.subr.mxu0 0.0
    %1368 = vmatpush2.msra.mxu0 0.0
    %1369 = vmatprep.subr.mxu0 0.0
    %1370 = vmatpush2.msra.mxu0 0.0
    %1371 = vmatprep.subr.mxu0 0.0
    %1372 = vmatpush2.msra.mxu0 0.0
    %1373 = vmatprep.subr.mxu0 0.0
    %1374 = vmatpush2.msra.mxu0 0.0
    %1375 = vmatprep.subr.mxu0 0.0
    %1376 = vmatpush2.msra.mxu0 0.0
    %1377 = vmatprep.subr.mxu0 0.0
    %1378 = vmatpush2.msra.mxu0 0.0
    %1379 = vmatprep.subr.mxu0 0.0
    %1380 = vmatpush2.msra.mxu0 0.0
    %1381 = vmatprep.subr.mxu0 0.0
    %1382 = vmatpush2.msra.mxu0 0.0
    %1383 = vmatprep.mubr.f32.mxu0 0.0
    %1384 = vmatmul.mubr.f32.gmra.mxu0 %v1317
    %v1385 = vpop.f32.mrf.mxu0
    %v1386 = vadd.f32 %v1313, %v1385
    %v1387 = vpop.f32.mrf.mxu0
    %1388 = vdwg.mxu0
    %v1389 = vadd.f32 %v1386, %v445
    %v1390 = vmul.f32 %v1389, 0.5
    %v1391 = vtanh.pop %v1390
    %v1392 = vmul.f32 %v1391, 0.5
    %v1393 = vadd.f32 %v1392, 0.5
    %v1394 = vtanh.pop %v1389
    %v1395 = vmul.f32 %v1393, %v949
    %1397 = vrot.lane.b32.xlu0 %v1394, 64
    %v1398 = vpop.permute.xlu0 %1397
    %v1400 = vmul.f32 %v1393, %v1398
    %1402 = vrot.lane.b32.xlu0 %v1400, 32
    %v1403 = vpop.permute.xlu0 %1402
    %v1405 = vadd.f32 %v1395, %v1403
    %v1406 = vtanh.pop %v1405
    %1408 = vrot.lane.b32.xlu0 %v1406, 64
    %v1409 = vpop.permute.xlu0 %1408
    %v1411 = vmul.f32 %v1393, %v1409
    %1413 = vrot.lane.b32.xlu0 %v1411, 32
    %v1414 = vpop.permute.xlu0 %1413
    %1417 = vrot.lane.b32.xlu0 %v1059, 64
    %v1418 = vpop.permute.xlu0 %1417
    %v1420 = vsel %vm289, %v1414, %v1418
    %v1422 = vsel %vm489, %v1420, 0
    %1424 = vmatprep.subr.mxu0 0.0
    %1425 = vmatpush1.msra.mxu0 0.0
    %1426 = vmatprep.subr.mxu0 0.0
    %1427 = vmatpush1.msra.mxu0 0.0
    %1428 = vmatprep.subr.mxu0 0.0
    %1429 = vmatpush1.msra.mxu0 0.0
    %1430 = vmatprep.subr.mxu0 0.0
    %1431 = vmatpush1.msra.mxu0 0.0
    %1432 = vmatprep.subr.mxu0 0.0
    %1433 = vmatpush1.msra.mxu0 0.0
    %1434 = vmatprep.subr.mxu0 0.0
    %1435 = vmatpush1.msra.mxu0 0.0
    %1436 = vmatprep.subr.mxu0 0.0
    %1437 = vmatpush1.msra.mxu0 0.0
    %1438 = vmatprep.subr.mxu0 0.0
    %1439 = vmatpush1.msra.mxu0 0.0
    %1440 = vmatprep.subr.mxu0 0.0
    %1441 = vmatpush1.msra.mxu0 %v174
    %1442 = vmatprep.subr.mxu0 0.0
    %1443 = vmatpush1.msra.mxu0 %v173
    %1444 = vmatprep.subr.mxu0 0.0
    %1445 = vmatpush1.msra.mxu0 %v172
    %1446 = vmatprep.subr.mxu0 0.0
    %1447 = vmatpush1.msra.mxu0 %v171
    %1448 = vmatprep.subr.mxu0 0.0
    %1449 = vmatpush1.msra.mxu0 %v170
    %1450 = vmatprep.subr.mxu0 0.0
    %1451 = vmatpush1.msra.mxu0 %v169
    %1452 = vmatprep.subr.mxu0 0.0
    %1453 = vmatpush1.msra.mxu0 %v168
    %1454 = vmatprep.subr.mxu0 0.0
    %1455 = vmatpush1.msra.mxu0 %v167
    %1456 = vmatprep.subr.mxu0 0.0
    %1457 = vmatpush2.msra.mxu0 0.0
    %1458 = vmatprep.subr.mxu0 0.0
    %1459 = vmatpush2.msra.mxu0 0.0
    %1460 = vmatprep.subr.mxu0 0.0
    %1461 = vmatpush2.msra.mxu0 0.0
    %1462 = vmatprep.subr.mxu0 0.0
    %1463 = vmatpush2.msra.mxu0 0.0
    %1464 = vmatprep.subr.mxu0 0.0
    %1465 = vmatpush2.msra.mxu0 0.0
    %1466 = vmatprep.subr.mxu0 0.0
    %1467 = vmatpush2.msra.mxu0 0.0
    %1468 = vmatprep.subr.mxu0 0.0
    %1469 = vmatpush2.msra.mxu0 0.0
    %1470 = vmatprep.subr.mxu0 0.0
    %1471 = vmatpush2.msra.mxu0 0.0
    %1472 = vmatprep.subr.mxu0 0.0
    %1473 = vmatpush2.msra.mxu0 0.0
    %1474 = vmatprep.subr.mxu0 0.0
    %1475 = vmatpush2.msra.mxu0 0.0
    %1476 = vmatprep.subr.mxu0 0.0
    %1477 = vmatpush2.msra.mxu0 0.0
    %1478 = vmatprep.subr.mxu0 0.0
    %1479 = vmatpush2.msra.mxu0 0.0
    %1480 = vmatprep.subr.mxu0 0.0
    %1481 = vmatpush2.msra.mxu0 0.0
    %1482 = vmatprep.subr.mxu0 0.0
    %1483 = vmatpush2.msra.mxu0 0.0
    %1484 = vmatprep.subr.mxu0 0.0
    %1485 = vmatpush2.msra.mxu0 0.0
    %1486 = vmatprep.subr.mxu0 0.0
    %1487 = vmatpush2.msra.mxu0 0.0
    %1488 = vmatprep.mubr.f32.mxu0 0.0
    %1489 = vmatmul.mubr.f32.gmra.mxu0 %v1422
    %v1490 = vpop.f32.mrf.mxu0
    %v1491 = vadd.f32 %v487, %v1490
    %v1492 = vpop.f32.mrf.mxu0
    %1493 = vdwg.mxu0
    %v1494 = vmul.f32 %v1491, 0.5
    %v1495 = vtanh.pop %v1494
    %v1496 = vmul.f32 %v1495, 0.5
    %v1497 = vadd.f32 %v1496, 0.5
    %v1498 = vtanh.pop %v1491
    %v1499 = vmul.f32 %v1497, %v1053
    %1501 = vrot.lane.b32.xlu0 %v1498, 64
    %v1502 = vpop.permute.xlu0 %1501
    %v1504 = vmul.f32 %v1497, %v1502
    %1506 = vrot.lane.b32.xlu0 %v1504, 32
    %v1507 = vpop.permute.xlu0 %1506
    %v1509 = vadd.f32 %v1499, %v1507
    %v1510 = vtanh.pop %v1509
    %1512 = vrot.lane.b32.xlu0 %v1510, 64
    %v1513 = vpop.permute.xlu0 %1512
    %v1515 = vmul.f32 %v1497, %v1513
    %v1516 = vadd.f32 %v1515, %v591
    %1518 = vrot.lane.b32.xlu0 %v1516, 32
    %v1519 = vpop.permute.xlu0 %1518
    %v1520 = vsel %vm289, %v1519, 0
    %1522 = vmatprep.subr.mxu0 0.0
    %1523 = vmatpush1.msra.mxu0 0.0
    %1524 = vmatprep.subr.mxu0 0.0
    %1525 = vmatpush1.msra.mxu0 0.0
    %1526 = vmatprep.subr.mxu0 0.0
    %1527 = vmatpush1.msra.mxu0 0.0
    %1528 = vmatprep.subr.mxu0 0.0
    %1529 = vmatpush1.msra.mxu0 0.0
    %1530 = vmatprep.subr.mxu0 0.0
    %1531 = vmatpush1.msra.mxu0 0.0
    %1532 = vmatprep.subr.mxu0 0.0
    %1533 = vmatpush1.msra.mxu0 0.0
    %1534 = vmatprep.subr.mxu0 0.0
    %1535 = vmatpush1.msra.mxu0 0.0
    %1536 = vmatprep.subr.mxu0 0.0
    %1537 = vmatpush1.msra.mxu0 0.0
    %1538 = vmatprep.subr.mxu0 0.0
    %1539 = vmatpush1.msra.mxu0 0.0
    %1540 = vmatprep.subr.mxu0 0.0
    %1541 = vmatpush1.msra.mxu0 0.0
    %1542 = vmatprep.subr.mxu0 0.0
    %1543 = vmatpush1.msra.mxu0 0.0
    %1544 = vmatprep.subr.mxu0 0.0
    %1545 = vmatpush1.msra.mxu0 0.0
    %1546 = vmatprep.subr.mxu0 0.0
    %1547 = vmatpush1.msra.mxu0 %v181
    %1548 = vmatprep.subr.mxu0 0.0
    %1549 = vmatpush1.msra.mxu0 %v180
    %1550 = vmatprep.subr.mxu0 0.0
    %1551 = vmatpush1.msra.mxu0 %v179
    %1552 = vmatprep.subr.mxu0 0.0
    %1553 = vmatpush1.msra.mxu0 %v178
    %1554 = vmatprep.subr.mxu0 0.0
    %1555 = vmatpush2.msra.mxu0 0.0
    %1556 = vmatprep.subr.mxu0 0.0
    %1557 = vmatpush2.msra.mxu0 0.0
    %1558 = vmatprep.subr.mxu0 0.0
    %1559 = vmatpush2.msra.mxu0 0.0
    %1560 = vmatprep.subr.mxu0 0.0
    %1561 = vmatpush2.msra.mxu0 0.0
    %1562 = vmatprep.subr.mxu0 0.0
    %1563 = vmatpush2.msra.mxu0 0.0
    %1564 = vmatprep.subr.mxu0 0.0
    %1565 = vmatpush2.msra.mxu0 0.0
    %1566 = vmatprep.subr.mxu0 0.0
    %1567 = vmatpush2.msra.mxu0 0.0
    %1568 = vmatprep.subr.mxu0 0.0
    %1569 = vmatpush2.msra.mxu0 0.0
    %1570 = vmatprep.subr.mxu0 0.0
    %1571 = vmatpush2.msra.mxu0 0.0
    %1572 = vmatprep.subr.mxu0 0.0
    %1573 = vmatpush2.msra.mxu0 0.0
    %1574 = vmatprep.subr.mxu0 0.0
    %1575 = vmatpush2.msra.mxu0 0.0
    %1576 = vmatprep.subr.mxu0 0.0
    %1577 = vmatpush2.msra.mxu0 0.0
    %1578 = vmatprep.subr.mxu0 0.0
    %1579 = vmatpush2.msra.mxu0 0.0
    %1580 = vmatprep.subr.mxu0 0.0
    %1581 = vmatpush2.msra.mxu0 0.0
    %1582 = vmatprep.subr.mxu0 0.0
    %1583 = vmatpush2.msra.mxu0 0.0
    %1584 = vmatprep.subr.mxu0 0.0
    %1585 = vmatpush2.msra.mxu0 0.0
    %1586 = vmatprep.mubr.f32.mxu0 0.0
    %1587 = vmatmul.mubr.f32.gmra.mxu0 %v1520
    %v1588 = vpop.f32.mrf.mxu0
    %v1589 = vadd.f32 %v598, %v1588
    %v1590 = vpop.f32.mrf.mxu0
    %1591 = vdwg.mxu0
    %vm1592 = vcmp.gt.f32.partialorder %v1589, 0.0
    %v1593 = vmul.f32 %v1589, 0.01
    %v1594 = vsel %vm1592, %v1589, %v1593
    %v1596 = vsel %vm289, %v1594, 0
    %1598 = vmatprep.subr.mxu0 0.0
    %1599 = vmatpush1.msra.mxu0 0.0
    %1600 = vmatprep.subr.mxu0 0.0
    %1601 = vmatpush1.msra.mxu0 0.0
    %1602 = vmatprep.subr.mxu0 0.0
    %1603 = vmatpush1.msra.mxu0 0.0
    %1604 = vmatprep.subr.mxu0 0.0
    %1605 = vmatpush1.msra.mxu0 0.0
    %1606 = vmatprep.subr.mxu0 0.0
    %1607 = vmatpush1.msra.mxu0 0.0
    %1608 = vmatprep.subr.mxu0 0.0
    %1609 = vmatpush1.msra.mxu0 0.0
    %1610 = vmatprep.subr.mxu0 0.0
    %1611 = vmatpush1.msra.mxu0 0.0
    %1612 = vmatprep.subr.mxu0 0.0
    %1613 = vmatpush1.msra.mxu0 0.0
    %1614 = vmatprep.subr.mxu0 0.0
    %1615 = vmatpush1.msra.mxu0 0.0
    %1616 = vmatprep.subr.mxu0 0.0
    %1617 = vmatpush1.msra.mxu0 0.0
    %1618 = vmatprep.subr.mxu0 0.0
    %1619 = vmatpush1.msra.mxu0 0.0
    %1620 = vmatprep.subr.mxu0 0.0
    %1621 = vmatpush1.msra.mxu0 0.0
    %1622 = vmatprep.subr.mxu0 0.0
    %1623 = vmatpush1.msra.mxu0 %v186
    %1624 = vmatprep.subr.mxu0 0.0
    %1625 = vmatpush1.msra.mxu0 %v185
    %1626 = vmatprep.subr.mxu0 0.0
    %1627 = vmatpush1.msra.mxu0 %v184
    %1628 = vmatprep.subr.mxu0 0.0
    %1629 = vmatpush1.msra.mxu0 %v183
    %1630 = vmatprep.subr.mxu0 0.0
    %1631 = vmatpush2.msra.mxu0 0.0
    %1632 = vmatprep.subr.mxu0 0.0
    %1633 = vmatpush2.msra.mxu0 0.0
    %1634 = vmatprep.subr.mxu0 0.0
    %1635 = vmatpush2.msra.mxu0 0.0
    %1636 = vmatprep.subr.mxu0 0.0
    %1637 = vmatpush2.msra.mxu0 0.0
    %1638 = vmatprep.subr.mxu0 0.0
    %1639 = vmatpush2.msra.mxu0 0.0
    %1640 = vmatprep.subr.mxu0 0.0
    %1641 = vmatpush2.msra.mxu0 0.0
    %1642 = vmatprep.subr.mxu0 0.0
    %1643 = vmatpush2.msra.mxu0 0.0
    %1644 = vmatprep.subr.mxu0 0.0
    %1645 = vmatpush2.msra.mxu0 0.0
    %1646 = vmatprep.subr.mxu0 0.0
    %1647 = vmatpush2.msra.mxu0 0.0
    %1648 = vmatprep.subr.mxu0 0.0
    %1649 = vmatpush2.msra.mxu0 0.0
    %1650 = vmatprep.subr.mxu0 0.0
    %1651 = vmatpush2.msra.mxu0 0.0
    %1652 = vmatprep.subr.mxu0 0.0
    %1653 = vmatpush2.msra.mxu0 0.0
    %1654 = vmatprep.subr.mxu0 0.0
    %1655 = vmatpush2.msra.mxu0 0.0
    %1656 = vmatprep.subr.mxu0 0.0
    %1657 = vmatpush2.msra.mxu0 0.0
    %1658 = vmatprep.subr.mxu0 0.0
    %1659 = vmatpush2.msra.mxu0 0.0
    %1660 = vmatprep.subr.mxu0 0.0
    %1661 = vmatpush2.msra.mxu0 0.0
    %1662 = vmatprep.mubr.f32.mxu0 0.0
    %1663 = vmatmul.mubr.f32.gmra.mxu0 %v1596
    %v1664 = vpop.f32.mrf.mxu0
    %v1665 = vadd.f32 %v682, %v1664
    %v1666 = vpop.f32.mrf.mxu0
    %1667 = vdwg.mxu0
    %s1668 = scalar_lea.vmem [#allocation17], 16
    %1669 = vst [vmem:[%s1668] sm:$0xff] %v1665
    %v1670 = vsel %vm278, %v1665, -inf
    %1671 = vmax.xlane.f32.xlu0 %v1670
    %v1672 = vpop.xlane.xlu0 %1671
    %vm1673 = vcmp.eq.f32.partialorder %v1670, %v1672
    %v1674 = vsel %vm1673, %v276, 128
    %v1675 = vand.u32 %v1674, 65535
    %v1676 = vshra.s32 %v1674, 16
    %v1677 = vcvt.s32.f32 %v1675
    %v1678 = vcvt.s32.f32 %v1676
    %1679 = vmin.xlane.f32.xlu0 %v1678
    %v1680 = vpop.xlane.xlu0 %1679
    %vm1681 = vcmp.eq.f32.partialorder %v1678, %v1680
    %v1682 = vsel %vm1681, %v1677, inf
    %1683 = vmin.xlane.f32.xlu0 %v1682
    %v1684 = vpop.xlane.xlu0 %1683
    %v1685 = vcvt.f32.s32 %v1684
    %v1686 = vcvt.f32.s32 %v1680
    %v1687 = vshll.u32 %v1686, 16
    %v1688 = vadd.s32 %v1687, %v1685
    %v1689 = vsel %vm277, %v1665, 0.0
    %1690 = vadd.xlane.f32.xlu0 %v1689
    %v1691 = vpop.xlane.xlu0 %1690
    %v1692 = vmul.f32 %v1691, 0.5
    %v1693 = vtanh.pop %v1692
    %v1694 = vmul.f32 %v1693, 0.5
    %v1695 = vadd.f32 %v1694, 0.5
    %vm1696 = vcmp.eq.s32.totalorder %v276, %v1688
    %v1697 = vsel %vm1696, 1, 0
    %v1698 = vcvt.s32.f32 %v1697
    %v1699 = vsel %vm277, %v1695, %v1698
    %v1700 = vsel %vm289, %v1414, 0
    %1702 = vmatprep.subr.mxu0 0.0
    %1703 = vmatpush1.msra.mxu0 0.0
    %1704 = vmatprep.subr.mxu0 0.0
    %1705 = vmatpush1.msra.mxu0 0.0
    %1706 = vmatprep.subr.mxu0 0.0
    %1707 = vmatpush1.msra.mxu0 0.0
    %1708 = vmatprep.subr.mxu0 0.0
    %1709 = vmatpush1.msra.mxu0 0.0
    %1710 = vmatprep.subr.mxu0 0.0
    %1711 = vmatpush1.msra.mxu0 0.0
    %1712 = vmatprep.subr.mxu0 0.0
    %1713 = vmatpush1.msra.mxu0 0.0
    %1714 = vmatprep.subr.mxu0 0.0
    %1715 = vmatpush1.msra.mxu0 0.0
    %1716 = vmatprep.subr.mxu0 0.0
    %1717 = vmatpush1.msra.mxu0 0.0
    %1718 = vmatprep.subr.mxu0 0.0
    %1719 = vmatpush1.msra.mxu0 0.0
    %1720 = vmatprep.subr.mxu0 0.0
    %1721 = vmatpush1.msra.mxu0 0.0
    %1722 = vmatprep.subr.mxu0 0.0
    %1723 = vmatpush1.msra.mxu0 0.0
    %1724 = vmatprep.subr.mxu0 0.0
    %1725 = vmatpush1.msra.mxu0 0.0
    %1726 = vmatprep.subr.mxu0 0.0
    %1727 = vmatpush1.msra.mxu0 %v165
    %1728 = vmatprep.subr.mxu0 0.0
    %1729 = vmatpush1.msra.mxu0 %v164
    %1730 = vmatprep.subr.mxu0 0.0
    %1731 = vmatpush1.msra.mxu0 %v163
    %1732 = vmatprep.subr.mxu0 0.0
    %1733 = vmatpush1.msra.mxu0 %v162
    %1734 = vmatprep.subr.mxu0 0.0
    %1735 = vmatpush2.msra.mxu0 0.0
    %1736 = vmatprep.subr.mxu0 0.0
    %1737 = vmatpush2.msra.mxu0 0.0
    %1738 = vmatprep.subr.mxu0 0.0
    %1739 = vmatpush2.msra.mxu0 0.0
    %1740 = vmatprep.subr.mxu0 0.0
    %1741 = vmatpush2.msra.mxu0 0.0
    %1742 = vmatprep.subr.mxu0 0.0
    %1743 = vmatpush2.msra.mxu0 0.0
    %1744 = vmatprep.subr.mxu0 0.0
    %1745 = vmatpush2.msra.mxu0 0.0
    %1746 = vmatprep.subr.mxu0 0.0
    %1747 = vmatpush2.msra.mxu0 0.0
    %1748 = vmatprep.subr.mxu0 0.0
    %1749 = vmatpush2.msra.mxu0 0.0
    %1750 = vmatprep.subr.mxu0 0.0
    %1751 = vmatpush2.msra.mxu0 0.0
    %1752 = vmatprep.subr.mxu0 0.0
    %1753 = vmatpush2.msra.mxu0 0.0
    %1754 = vmatprep.subr.mxu0 0.0
    %1755 = vmatpush2.msra.mxu0 0.0
    %1756 = vmatprep.subr.mxu0 0.0
    %1757 = vmatpush2.msra.mxu0 0.0
    %1758 = vmatprep.subr.mxu0 0.0
    %1759 = vmatpush2.msra.mxu0 0.0
    %1760 = vmatprep.subr.mxu0 0.0
    %1761 = vmatpush2.msra.mxu0 0.0
    %1762 = vmatprep.subr.mxu0 0.0
    %1763 = vmatpush2.msra.mxu0 0.0
    %1764 = vmatprep.subr.mxu0 0.0
    %1765 = vmatpush2.msra.mxu0 0.0
    %1766 = vmatprep.mubr.f32.mxu0 0.0
    %1767 = vmatmul.mubr.f32.gmra.mxu0 %v1700
    %v1768 = vpop.f32.mrf.mxu0
    %v1769 = vadd.f32 0.0, %v1768
    %v1770 = vpop.f32.mrf.mxu0
    %1771 = vdwg.mxu0
    %v1773 = vsel %vm363, %v1699, 0
    %1775 = vmatprep.subr.mxu0 0.0
    %1776 = vmatpush1.msra.mxu0 0.0
    %1777 = vmatprep.subr.mxu0 0.0
    %1778 = vmatpush1.msra.mxu0 0.0
    %1779 = vmatprep.subr.mxu0 0.0
    %1780 = vmatpush1.msra.mxu0 0.0
    %1781 = vmatprep.subr.mxu0 0.0
    %1782 = vmatpush1.msra.mxu0 0.0
    %1783 = vmatprep.subr.mxu0 0.0
    %1784 = vmatpush1.msra.mxu0 0.0
    %1785 = vmatprep.subr.mxu0 0.0
    %1786 = vmatpush1.msra.mxu0 0.0
    %1787 = vmatprep.subr.mxu0 0.0
    %1788 = vmatpush1.msra.mxu0 0.0
    %1789 = vmatprep.subr.mxu0 0.0
    %1790 = vmatpush1.msra.mxu0 0.0
    %1791 = vmatprep.subr.mxu0 0.0
    %1792 = vmatpush1.msra.mxu0 0.0
    %1793 = vmatprep.subr.mxu0 0.0
    %1794 = vmatpush1.msra.mxu0 0.0
    %1795 = vmatprep.subr.mxu0 0.0
    %1796 = vmatpush1.msra.mxu0 0.0
    %1797 = vmatprep.subr.mxu0 0.0
    %1798 = vmatpush1.msra.mxu0 0.0
    %1799 = vmatprep.subr.mxu0 0.0
    %1800 = vmatpush1.msra.mxu0 0.0
    %1801 = vmatprep.subr.mxu0 0.0
    %1802 = vmatpush1.msra.mxu0 0.0
    %1803 = vmatprep.subr.mxu0 0.0
    %1804 = vmatpush1.msra.mxu0 0.0
    %1805 = vmatprep.subr.mxu0 0.0
    %1806 = vmatpush1.msra.mxu0 %v369
    %1807 = vmatprep.subr.mxu0 0.0
    %1808 = vmatpush2.msra.mxu0 0.0
    %1809 = vmatprep.subr.mxu0 0.0
    %1810 = vmatpush2.msra.mxu0 0.0
    %1811 = vmatprep.subr.mxu0 0.0
    %1812 = vmatpush2.msra.mxu0 0.0
    %1813 = vmatprep.subr.mxu0 0.0
    %1814 = vmatpush2.msra.mxu0 0.0
    %1815 = vmatprep.subr.mxu0 0.0
    %1816 = vmatpush2.msra.mxu0 0.0
    %1817 = vmatprep.subr.mxu0 0.0
    %1818 = vmatpush2.msra.mxu0 0.0
    %1819 = vmatprep.subr.mxu0 0.0
    %1820 = vmatpush2.msra.mxu0 0.0
    %1821 = vmatprep.subr.mxu0 0.0
    %1822 = vmatpush2.msra.mxu0 0.0
    %1823 = vmatprep.subr.mxu0 0.0
    %1824 = vmatpush2.msra.mxu0 0.0
    %1825 = vmatprep.subr.mxu0 0.0
    %1826 = vmatpush2.msra.mxu0 0.0
    %1827 = vmatprep.subr.mxu0 0.0
    %1828 = vmatpush2.msra.mxu0 0.0
    %1829 = vmatprep.subr.mxu0 0.0
    %1830 = vmatpush2.msra.mxu0 0.0
    %1831 = vmatprep.subr.mxu0 0.0
    %1832 = vmatpush2.msra.mxu0 0.0
    %1833 = vmatprep.subr.mxu0 0.0
    %1834 = vmatpush2.msra.mxu0 0.0
    %1835 = vmatprep.subr.mxu0 0.0
    %1836 = vmatpush2.msra.mxu0 0.0
    %1837 = vmatprep.subr.mxu0 0.0
    %1838 = vmatpush2.msra.mxu0 0.0
    %1839 = vmatprep.mubr.f32.mxu0 0.0
    %1840 = vmatmul.mubr.f32.gmra.mxu0 %v1773
    %v1841 = vpop.f32.mrf.mxu0
    %v1842 = vadd.f32 %v1769, %v1841
    %v1843 = vpop.f32.mrf.mxu0
    %1844 = vdwg.mxu0
    %v1845 = vadd.f32 %v1842, %v445
    %v1846 = vmul.f32 %v1845, 0.5
    %v1847 = vtanh.pop %v1846
    %v1848 = vmul.f32 %v1847, 0.5
    %v1849 = vadd.f32 %v1848, 0.5
    %v1850 = vtanh.pop %v1845
    %v1851 = vmul.f32 %v1849, %v1405
    %1853 = vrot.lane.b32.xlu0 %v1850, 64
    %v1854 = vpop.permute.xlu0 %1853
    %v1856 = vmul.f32 %v1849, %v1854
    %1858 = vrot.lane.b32.xlu0 %v1856, 32
    %v1859 = vpop.permute.xlu0 %1858
    %v1861 = vadd.f32 %v1851, %v1859
    %v1862 = vtanh.pop %v1861
    %1864 = vrot.lane.b32.xlu0 %v1862, 64
    %v1865 = vpop.permute.xlu0 %1864
    %v1867 = vmul.f32 %v1849, %v1865
    %1869 = vrot.lane.b32.xlu0 %v1867, 32
    %v1870 = vpop.permute.xlu0 %1869
    %1873 = vrot.lane.b32.xlu0 %v1515, 64
    %v1874 = vpop.permute.xlu0 %1873
    %v1876 = vsel %vm289, %v1870, %v1874
    %v1878 = vsel %vm489, %v1876, 0
    %1880 = vmatprep.subr.mxu0 0.0
    %1881 = vmatpush1.msra.mxu0 0.0
    %1882 = vmatprep.subr.mxu0 0.0
    %1883 = vmatpush1.msra.mxu0 0.0
    %1884 = vmatprep.subr.mxu0 0.0
    %1885 = vmatpush1.msra.mxu0 0.0
    %1886 = vmatprep.subr.mxu0 0.0
    %1887 = vmatpush1.msra.mxu0 0.0
    %1888 = vmatprep.subr.mxu0 0.0
    %1889 = vmatpush1.msra.mxu0 0.0
    %1890 = vmatprep.subr.mxu0 0.0
    %1891 = vmatpush1.msra.mxu0 0.0
    %1892 = vmatprep.subr.mxu0 0.0
    %1893 = vmatpush1.msra.mxu0 0.0
    %1894 = vmatprep.subr.mxu0 0.0
    %1895 = vmatpush1.msra.mxu0 0.0
    %1896 = vmatprep.subr.mxu0 0.0
    %1897 = vmatpush1.msra.mxu0 %v174
    %1898 = vmatprep.subr.mxu0 0.0
    %1899 = vmatpush1.msra.mxu0 %v173
    %1900 = vmatprep.subr.mxu0 0.0
    %1901 = vmatpush1.msra.mxu0 %v172
    %1902 = vmatprep.subr.mxu0 0.0
    %1903 = vmatpush1.msra.mxu0 %v171
    %1904 = vmatprep.subr.mxu0 0.0
    %1905 = vmatpush1.msra.mxu0 %v170
    %1906 = vmatprep.subr.mxu0 0.0
    %1907 = vmatpush1.msra.mxu0 %v169
    %1908 = vmatprep.subr.mxu0 0.0
    %1909 = vmatpush1.msra.mxu0 %v168
    %1910 = vmatprep.subr.mxu0 0.0
    %1911 = vmatpush1.msra.mxu0 %v167
    %1912 = vmatprep.subr.mxu0 0.0
    %1913 = vmatpush2.msra.mxu0 0.0
    %1914 = vmatprep.subr.mxu0 0.0
    %1915 = vmatpush2.msra.mxu0 0.0
    %1916 = vmatprep.subr.mxu0 0.0
    %1917 = vmatpush2.msra.mxu0 0.0
    %1918 = vmatprep.subr.mxu0 0.0
    %1919 = vmatpush2.msra.mxu0 0.0
    %1920 = vmatprep.subr.mxu0 0.0
    %1921 = vmatpush2.msra.mxu0 0.0
    %1922 = vmatprep.subr.mxu0 0.0
    %1923 = vmatpush2.msra.mxu0 0.0
    %1924 = vmatprep.subr.mxu0 0.0
    %1925 = vmatpush2.msra.mxu0 0.0
    %1926 = vmatprep.subr.mxu0 0.0
    %1927 = vmatpush2.msra.mxu0 0.0
    %1928 = vmatprep.subr.mxu0 0.0
    %1929 = vmatpush2.msra.mxu0 0.0
    %1930 = vmatprep.subr.mxu0 0.0
    %1931 = vmatpush2.msra.mxu0 0.0
    %1932 = vmatprep.subr.mxu0 0.0
    %1933 = vmatpush2.msra.mxu0 0.0
    %1934 = vmatprep.subr.mxu0 0.0
    %1935 = vmatpush2.msra.mxu0 0.0
    %1936 = vmatprep.subr.mxu0 0.0
    %1937 = vmatpush2.msra.mxu0 0.0
    %1938 = vmatprep.subr.mxu0 0.0
    %1939 = vmatpush2.msra.mxu0 0.0
    %1940 = vmatprep.subr.mxu0 0.0
    %1941 = vmatpush2.msra.mxu0 0.0
    %1942 = vmatprep.subr.mxu0 0.0
    %1943 = vmatpush2.msra.mxu0 0.0
    %1944 = vmatprep.mubr.f32.mxu0 0.0
    %1945 = vmatmul.mubr.f32.gmra.mxu0 %v1878
    %v1946 = vpop.f32.mrf.mxu0
    %v1947 = vadd.f32 %v487, %v1946
    %v1948 = vpop.f32.mrf.mxu0
    %1949 = vdwg.mxu0
    %v1950 = vmul.f32 %v1947, 0.5
    %v1951 = vtanh.pop %v1950
    %v1952 = vmul.f32 %v1951, 0.5
    %v1953 = vadd.f32 %v1952, 0.5
    %v1954 = vtanh.pop %v1947
    %v1955 = vmul.f32 %v1953, %v1509
    %1957 = vrot.lane.b32.xlu0 %v1954, 64
    %v1958 = vpop.permute.xlu0 %1957
    %v1960 = vmul.f32 %v1953, %v1958
    %1962 = vrot.lane.b32.xlu0 %v1960, 32
    %v1963 = vpop.permute.xlu0 %1962
    %v1965 = vadd.f32 %v1955, %v1963
    %v1966 = vtanh.pop %v1965
    %1968 = vrot.lane.b32.xlu0 %v1966, 64
    %v1969 = vpop.permute.xlu0 %1968
    %v1971 = vmul.f32 %v1953, %v1969
    %v1972 = vadd.f32 %v1971, %v591
    %1974 = vrot.lane.b32.xlu0 %v1972, 32
    %v1975 = vpop.permute.xlu0 %1974
    %v1976 = vsel %vm289, %v1975, 0
    %1978 = vmatprep.subr.mxu0 0.0
    %1979 = vmatpush1.msra.mxu0 0.0
    %1980 = vmatprep.subr.mxu0 0.0
    %1981 = vmatpush1.msra.mxu0 0.0
    %1982 = vmatprep.subr.mxu0 0.0
    %1983 = vmatpush1.msra.mxu0 0.0
    %1984 = vmatprep.subr.mxu0 0.0
    %1985 = vmatpush1.msra.mxu0 0.0
    %1986 = vmatprep.subr.mxu0 0.0
    %1987 = vmatpush1.msra.mxu0 0.0
    %1988 = vmatprep.subr.mxu0 0.0
    %1989 = vmatpush1.msra.mxu0 0.0
    %1990 = vmatprep.subr.mxu0 0.0
    %1991 = vmatpush1.msra.mxu0 0.0
    %1992 = vmatprep.subr.mxu0 0.0
    %1993 = vmatpush1.msra.mxu0 0.0
    %1994 = vmatprep.subr.mxu0 0.0
    %1995 = vmatpush1.msra.mxu0 0.0
    %1996 = vmatprep.subr.mxu0 0.0
    %1997 = vmatpush1.msra.mxu0 0.0
    %1998 = vmatprep.subr.mxu0 0.0
    %1999 = vmatpush1.msra.mxu0 0.0
    %2000 = vmatprep.subr.mxu0 0.0
    %2001 = vmatpush1.msra.mxu0 0.0
    %2002 = vmatprep.subr.mxu0 0.0
    %2003 = vmatpush1.msra.mxu0 %v181
    %2004 = vmatprep.subr.mxu0 0.0
    %2005 = vmatpush1.msra.mxu0 %v180
    %2006 = vmatprep.subr.mxu0 0.0
    %2007 = vmatpush1.msra.mxu0 %v179
    %2008 = vmatprep.subr.mxu0 0.0
    %2009 = vmatpush1.msra.mxu0 %v178
    %2010 = vmatprep.subr.mxu0 0.0
    %2011 = vmatpush2.msra.mxu0 0.0
    %2012 = vmatprep.subr.mxu0 0.0
    %2013 = vmatpush2.msra.mxu0 0.0
    %2014 = vmatprep.subr.mxu0 0.0
    %2015 = vmatpush2.msra.mxu0 0.0
    %2016 = vmatprep.subr.mxu0 0.0
    %2017 = vmatpush2.msra.mxu0 0.0
    %2018 = vmatprep.subr.mxu0 0.0
    %2019 = vmatpush2.msra.mxu0 0.0
    %2020 = vmatprep.subr.mxu0 0.0
    %2021 = vmatpush2.msra.mxu0 0.0
    %2022 = vmatprep.subr.mxu0 0.0
    %2023 = vmatpush2.msra.mxu0 0.0
    %2024 = vmatprep.subr.mxu0 0.0
    %2025 = vmatpush2.msra.mxu0 0.0
    %2026 = vmatprep.subr.mxu0 0.0
    %2027 = vmatpush2.msra.mxu0 0.0
    %2028 = vmatprep.subr.mxu0 0.0
    %2029 = vmatpush2.msra.mxu0 0.0
    %2030 = vmatprep.subr.mxu0 0.0
    %2031 = vmatpush2.msra.mxu0 0.0
    %2032 = vmatprep.subr.mxu0 0.0
    %2033 = vmatpush2.msra.mxu0 0.0
    %2034 = vmatprep.subr.mxu0 0.0
    %2035 = vmatpush2.msra.mxu0 0.0
    %2036 = vmatprep.subr.mxu0 0.0
    %2037 = vmatpush2.msra.mxu0 0.0
    %2038 = vmatprep.subr.mxu0 0.0
    %2039 = vmatpush2.msra.mxu0 0.0
    %2040 = vmatprep.subr.mxu0 0.0
    %2041 = vmatpush2.msra.mxu0 0.0
    %2042 = vmatprep.mubr.f32.mxu0 0.0
    %2043 = vmatmul.mubr.f32.gmra.mxu0 %v1976
    %v2044 = vpop.f32.mrf.mxu0
    %v2045 = vadd.f32 %v598, %v2044
    %v2046 = vpop.f32.mrf.mxu0
    %2047 = vdwg.mxu0
    %vm2048 = vcmp.gt.f32.partialorder %v2045, 0.0
    %v2049 = vmul.f32 %v2045, 0.01
    %v2050 = vsel %vm2048, %v2045, %v2049
    %v2052 = vsel %vm289, %v2050, 0
    %2054 = vmatprep.subr.mxu0 0.0
    %2055 = vmatpush1.msra.mxu0 0.0
    %2056 = vmatprep.subr.mxu0 0.0
    %2057 = vmatpush1.msra.mxu0 0.0
    %2058 = vmatprep.subr.mxu0 0.0
    %2059 = vmatpush1.msra.mxu0 0.0
    %2060 = vmatprep.subr.mxu0 0.0
    %2061 = vmatpush1.msra.mxu0 0.0
    %2062 = vmatprep.subr.mxu0 0.0
    %2063 = vmatpush1.msra.mxu0 0.0
    %2064 = vmatprep.subr.mxu0 0.0
    %2065 = vmatpush1.msra.mxu0 0.0
    %2066 = vmatprep.subr.mxu0 0.0
    %2067 = vmatpush1.msra.mxu0 0.0
    %2068 = vmatprep.subr.mxu0 0.0
    %2069 = vmatpush1.msra.mxu0 0.0
    %2070 = vmatprep.subr.mxu0 0.0
    %2071 = vmatpush1.msra.mxu0 0.0
    %2072 = vmatprep.subr.mxu0 0.0
    %2073 = vmatpush1.msra.mxu0 0.0
    %2074 = vmatprep.subr.mxu0 0.0
    %2075 = vmatpush1.msra.mxu0 0.0
    %2076 = vmatprep.subr.mxu0 0.0
    %2077 = vmatpush1.msra.mxu0 0.0
    %2078 = vmatprep.subr.mxu0 0.0
    %2079 = vmatpush1.msra.mxu0 %v186
    %2080 = vmatprep.subr.mxu0 0.0
    %2081 = vmatpush1.msra.mxu0 %v185
    %2082 = vmatprep.subr.mxu0 0.0
    %2083 = vmatpush1.msra.mxu0 %v184
    %2084 = vmatprep.subr.mxu0 0.0
    %2085 = vmatpush1.msra.mxu0 %v183
    %2086 = vmatprep.subr.mxu0 0.0
    %2087 = vmatpush2.msra.mxu0 0.0
    %2088 = vmatprep.subr.mxu0 0.0
    %2089 = vmatpush2.msra.mxu0 0.0
    %2090 = vmatprep.subr.mxu0 0.0
    %2091 = vmatpush2.msra.mxu0 0.0
    %2092 = vmatprep.subr.mxu0 0.0
    %2093 = vmatpush2.msra.mxu0 0.0
    %2094 = vmatprep.subr.mxu0 0.0
    %2095 = vmatpush2.msra.mxu0 0.0
    %2096 = vmatprep.subr.mxu0 0.0
    %2097 = vmatpush2.msra.mxu0 0.0
    %2098 = vmatprep.subr.mxu0 0.0
    %2099 = vmatpush2.msra.mxu0 0.0
    %2100 = vmatprep.subr.mxu0 0.0
    %2101 = vmatpush2.msra.mxu0 0.0
    %2102 = vmatprep.subr.mxu0 0.0
    %2103 = vmatpush2.msra.mxu0 0.0
    %2104 = vmatprep.subr.mxu0 0.0
    %2105 = vmatpush2.msra.mxu0 0.0
    %2106 = vmatprep.subr.mxu0 0.0
    %2107 = vmatpush2.msra.mxu0 0.0
    %2108 = vmatprep.subr.mxu0 0.0
    %2109 = vmatpush2.msra.mxu0 0.0
    %2110 = vmatprep.subr.mxu0 0.0
    %2111 = vmatpush2.msra.mxu0 0.0
    %2112 = vmatprep.subr.mxu0 0.0
    %2113 = vmatpush2.msra.mxu0 0.0
    %2114 = vmatprep.subr.mxu0 0.0
    %2115 = vmatpush2.msra.mxu0 0.0
    %2116 = vmatprep.subr.mxu0 0.0
    %2117 = vmatpush2.msra.mxu0 0.0
    %2118 = vmatprep.mubr.f32.mxu0 0.0
    %2119 = vmatmul.mubr.f32.gmra.mxu0 %v2052
    %v2120 = vpop.f32.mrf.mxu0
    %v2121 = vadd.f32 %v682, %v2120
    %v2122 = vpop.f32.mrf.mxu0
    %2123 = vdwg.mxu0
    %s2124 = scalar_lea.vmem [#allocation17], 24
    %2125 = vst [vmem:[%s2124] sm:$0xff] %v2121
    %v2126 = vsel %vm278, %v2121, -inf
    %2127 = vmax.xlane.f32.xlu0 %v2126
    %v2128 = vpop.xlane.xlu0 %2127
    %vm2129 = vcmp.eq.f32.partialorder %v2126, %v2128
    %v2130 = vsel %vm2129, %v276, 128
    %v2131 = vand.u32 %v2130, 65535
    %v2132 = vshra.s32 %v2130, 16
    %v2133 = vcvt.s32.f32 %v2131
    %v2134 = vcvt.s32.f32 %v2132
    %2135 = vmin.xlane.f32.xlu0 %v2134
    %v2136 = vpop.xlane.xlu0 %2135
    %vm2137 = vcmp.eq.f32.partialorder %v2134, %v2136
    %v2138 = vsel %vm2137, %v2133, inf
    %2139 = vmin.xlane.f32.xlu0 %v2138
    %v2140 = vpop.xlane.xlu0 %2139
    %v2141 = vcvt.f32.s32 %v2140
    %v2142 = vcvt.f32.s32 %v2136
    %v2143 = vshll.u32 %v2142, 16
    %v2144 = vadd.s32 %v2143, %v2141
    %v2145 = vsel %vm277, %v2121, 0.0
    %2146 = vadd.xlane.f32.xlu0 %v2145
    %v2147 = vpop.xlane.xlu0 %2146
    %v2148 = vmul.f32 %v2147, 0.5
    %v2149 = vtanh.pop %v2148
    %v2150 = vmul.f32 %v2149, 0.5
    %v2151 = vadd.f32 %v2150, 0.5
    %vm2152 = vcmp.eq.s32.totalorder %v276, %v2144
    %v2153 = vsel %vm2152, 1, 0
    %v2154 = vcvt.s32.f32 %v2153
    %v2155 = vsel %vm277, %v2151, %v2154
    %v2156 = vsel %vm289, %v1870, 0
    %2158 = vmatprep.subr.mxu0 0.0
    %2159 = vmatpush1.msra.mxu0 0.0
    %2160 = vmatprep.subr.mxu0 0.0
    %2161 = vmatpush1.msra.mxu0 0.0
    %2162 = vmatprep.subr.mxu0 0.0
    %2163 = vmatpush1.msra.mxu0 0.0
    %2164 = vmatprep.subr.mxu0 0.0
    %2165 = vmatpush1.msra.mxu0 0.0
    %2166 = vmatprep.subr.mxu0 0.0
    %2167 = vmatpush1.msra.mxu0 0.0
    %2168 = vmatprep.subr.mxu0 0.0
    %2169 = vmatpush1.msra.mxu0 0.0
    %2170 = vmatprep.subr.mxu0 0.0
    %2171 = vmatpush1.msra.mxu0 0.0
    %2172 = vmatprep.subr.mxu0 0.0
    %2173 = vmatpush1.msra.mxu0 0.0
    %2174 = vmatprep.subr.mxu0 0.0
    %2175 = vmatpush1.msra.mxu0 0.0
    %2176 = vmatprep.subr.mxu0 0.0
    %2177 = vmatpush1.msra.mxu0 0.0
    %2178 = vmatprep.subr.mxu0 0.0
    %2179 = vmatpush1.msra.mxu0 0.0
    %2180 = vmatprep.subr.mxu0 0.0
    %2181 = vmatpush1.msra.mxu0 0.0
    %2182 = vmatprep.subr.mxu0 0.0
    %2183 = vmatpush1.msra.mxu0 %v165
    %2184 = vmatprep.subr.mxu0 0.0
    %2185 = vmatpush1.msra.mxu0 %v164
    %2186 = vmatprep.subr.mxu0 0.0
    %2187 = vmatpush1.msra.mxu0 %v163
    %2188 = vmatprep.subr.mxu0 0.0
    %2189 = vmatpush1.msra.mxu0 %v162
    %2190 = vmatprep.subr.mxu0 0.0
    %2191 = vmatpush2.msra.mxu0 0.0
    %2192 = vmatprep.subr.mxu0 0.0
    %2193 = vmatpush2.msra.mxu0 0.0
    %2194 = vmatprep.subr.mxu0 0.0
    %2195 = vmatpush2.msra.mxu0 0.0
    %2196 = vmatprep.subr.mxu0 0.0
    %2197 = vmatpush2.msra.mxu0 0.0
    %2198 = vmatprep.subr.mxu0 0.0
    %2199 = vmatpush2.msra.mxu0 0.0
    %2200 = vmatprep.subr.mxu0 0.0
    %2201 = vmatpush2.msra.mxu0 0.0
    %2202 = vmatprep.subr.mxu0 0.0
    %2203 = vmatpush2.msra.mxu0 0.0
    %2204 = vmatprep.subr.mxu0 0.0
    %2205 = vmatpush2.msra.mxu0 0.0
    %2206 = vmatprep.subr.mxu0 0.0
    %2207 = vmatpush2.msra.mxu0 0.0
    %2208 = vmatprep.subr.mxu0 0.0
    %2209 = vmatpush2.msra.mxu0 0.0
    %2210 = vmatprep.subr.mxu0 0.0
    %2211 = vmatpush2.msra.mxu0 0.0
    %2212 = vmatprep.subr.mxu0 0.0
    %2213 = vmatpush2.msra.mxu0 0.0
    %2214 = vmatprep.subr.mxu0 0.0
    %2215 = vmatpush2.msra.mxu0 0.0
    %2216 = vmatprep.subr.mxu0 0.0
    %2217 = vmatpush2.msra.mxu0 0.0
    %2218 = vmatprep.subr.mxu0 0.0
    %2219 = vmatpush2.msra.mxu0 0.0
    %2220 = vmatprep.subr.mxu0 0.0
    %2221 = vmatpush2.msra.mxu0 0.0
    %2222 = vmatprep.mubr.f32.mxu0 0.0
    %2223 = vmatmul.mubr.f32.gmra.mxu0 %v2156
    %v2224 = vpop.f32.mrf.mxu0
    %v2225 = vadd.f32 0.0, %v2224
    %v2226 = vpop.f32.mrf.mxu0
    %2227 = vdwg.mxu0
    %v2229 = vsel %vm363, %v2155, 0
    %2231 = vmatprep.subr.mxu0 0.0
    %2232 = vmatpush1.msra.mxu0 0.0
    %2233 = vmatprep.subr.mxu0 0.0
    %2234 = vmatpush1.msra.mxu0 0.0
    %2235 = vmatprep.subr.mxu0 0.0
    %2236 = vmatpush1.msra.mxu0 0.0
    %2237 = vmatprep.subr.mxu0 0.0
    %2238 = vmatpush1.msra.mxu0 0.0
    %2239 = vmatprep.subr.mxu0 0.0
    %2240 = vmatpush1.msra.mxu0 0.0
    %2241 = vmatprep.subr.mxu0 0.0
    %2242 = vmatpush1.msra.mxu0 0.0
    %2243 = vmatprep.subr.mxu0 0.0
    %2244 = vmatpush1.msra.mxu0 0.0
    %2245 = vmatprep.subr.mxu0 0.0
    %2246 = vmatpush1.msra.mxu0 0.0
    %2247 = vmatprep.subr.mxu0 0.0
    %2248 = vmatpush1.msra.mxu0 0.0
    %2249 = vmatprep.subr.mxu0 0.0
    %2250 = vmatpush1.msra.mxu0 0.0
    %2251 = vmatprep.subr.mxu0 0.0
    %2252 = vmatpush1.msra.mxu0 0.0
    %2253 = vmatprep.subr.mxu0 0.0
    %2254 = vmatpush1.msra.mxu0 0.0
    %2255 = vmatprep.subr.mxu0 0.0
    %2256 = vmatpush1.msra.mxu0 0.0
    %2257 = vmatprep.subr.mxu0 0.0
    %2258 = vmatpush1.msra.mxu0 0.0
    %2259 = vmatprep.subr.mxu0 0.0
    %2260 = vmatpush1.msra.mxu0 0.0
    %2261 = vmatprep.subr.mxu0 0.0
    %2262 = vmatpush1.msra.mxu0 %v369
    %2263 = vmatprep.subr.mxu0 0.0
    %2264 = vmatpush2.msra.mxu0 0.0
    %2265 = vmatprep.subr.mxu0 0.0
    %2266 = vmatpush2.msra.mxu0 0.0
    %2267 = vmatprep.subr.mxu0 0.0
    %2268 = vmatpush2.msra.mxu0 0.0
    %2269 = vmatprep.subr.mxu0 0.0
    %2270 = vmatpush2.msra.mxu0 0.0
    %2271 = vmatprep.subr.mxu0 0.0
    %2272 = vmatpush2.msra.mxu0 0.0
    %2273 = vmatprep.subr.mxu0 0.0
    %2274 = vmatpush2.msra.mxu0 0.0
    %2275 = vmatprep.subr.mxu0 0.0
    %2276 = vmatpush2.msra.mxu0 0.0
    %2277 = vmatprep.subr.mxu0 0.0
    %2278 = vmatpush2.msra.mxu0 0.0
    %2279 = vmatprep.subr.mxu0 0.0
    %2280 = vmatpush2.msra.mxu0 0.0
    %2281 = vmatprep.subr.mxu0 0.0
    %2282 = vmatpush2.msra.mxu0 0.0
    %2283 = vmatprep.subr.mxu0 0.0
    %2284 = vmatpush2.msra.mxu0 0.0
    %2285 = vmatprep.subr.mxu0 0.0
    %2286 = vmatpush2.msra.mxu0 0.0
    %2287 = vmatprep.subr.mxu0 0.0
    %2288 = vmatpush2.msra.mxu0 0.0
    %2289 = vmatprep.subr.mxu0 0.0
    %2290 = vmatpush2.msra.mxu0 0.0
    %2291 = vmatprep.subr.mxu0 0.0
    %2292 = vmatpush2.msra.mxu0 0.0
    %2293 = vmatprep.subr.mxu0 0.0
    %2294 = vmatpush2.msra.mxu0 0.0
    %2295 = vmatprep.mubr.f32.mxu0 0.0
    %2296 = vmatmul.mubr.f32.gmra.mxu0 %v2229
    %v2297 = vpop.f32.mrf.mxu0
    %v2298 = vadd.f32 %v2225, %v2297
    %v2299 = vpop.f32.mrf.mxu0
    %2300 = vdwg.mxu0
    %v2301 = vadd.f32 %v2298, %v445
    %v2302 = vmul.f32 %v2301, 0.5
    %v2303 = vtanh.pop %v2302
    %v2304 = vmul.f32 %v2303, 0.5
    %v2305 = vadd.f32 %v2304, 0.5
    %v2306 = vtanh.pop %v2301
    %v2307 = vmul.f32 %v2305, %v1861
    %2309 = vrot.lane.b32.xlu0 %v2306, 64
    %v2310 = vpop.permute.xlu0 %2309
    %v2312 = vmul.f32 %v2305, %v2310
    %2314 = vrot.lane.b32.xlu0 %v2312, 32
    %v2315 = vpop.permute.xlu0 %2314
    %v2317 = vadd.f32 %v2307, %v2315
    %v2318 = vtanh.pop %v2317
    %2320 = vrot.lane.b32.xlu0 %v2318, 64
    %v2321 = vpop.permute.xlu0 %2320
    %v2323 = vmul.f32 %v2305, %v2321
    %2325 = vrot.lane.b32.xlu0 %v2323, 32
    %v2326 = vpop.permute.xlu0 %2325
    %2329 = vrot.lane.b32.xlu0 %v1971, 64
    %v2330 = vpop.permute.xlu0 %2329
    %v2332 = vsel %vm289, %v2326, %v2330
    %v2334 = vsel %vm489, %v2332, 0
    %2336 = vmatprep.subr.mxu0 0.0
    %2337 = vmatpush1.msra.mxu0 0.0
    %2338 = vmatprep.subr.mxu0 0.0
    %2339 = vmatpush1.msra.mxu0 0.0
    %2340 = vmatprep.subr.mxu0 0.0
    %2341 = vmatpush1.msra.mxu0 0.0
    %2342 = vmatprep.subr.mxu0 0.0
    %2343 = vmatpush1.msra.mxu0 0.0
    %2344 = vmatprep.subr.mxu0 0.0
    %2345 = vmatpush1.msra.mxu0 0.0
    %2346 = vmatprep.subr.mxu0 0.0
    %2347 = vmatpush1.msra.mxu0 0.0
    %2348 = vmatprep.subr.mxu0 0.0
    %2349 = vmatpush1.msra.mxu0 0.0
    %2350 = vmatprep.subr.mxu0 0.0
    %2351 = vmatpush1.msra.mxu0 0.0
    %2352 = vmatprep.subr.mxu0 0.0
    %2353 = vmatpush1.msra.mxu0 %v174
    %2354 = vmatprep.subr.mxu0 0.0
    %2355 = vmatpush1.msra.mxu0 %v173
    %2356 = vmatprep.subr.mxu0 0.0
    %2357 = vmatpush1.msra.mxu0 %v172
    %2358 = vmatprep.subr.mxu0 0.0
    %2359 = vmatpush1.msra.mxu0 %v171
    %2360 = vmatprep.subr.mxu0 0.0
    %2361 = vmatpush1.msra.mxu0 %v170
    %2362 = vmatprep.subr.mxu0 0.0
    %2363 = vmatpush1.msra.mxu0 %v169
    %2364 = vmatprep.subr.mxu0 0.0
    %2365 = vmatpush1.msra.mxu0 %v168
    %2366 = vmatprep.subr.mxu0 0.0
    %2367 = vmatpush1.msra.mxu0 %v167
    %2368 = vmatprep.subr.mxu0 0.0
    %2369 = vmatpush2.msra.mxu0 0.0
    %2370 = vmatprep.subr.mxu0 0.0
    %2371 = vmatpush2.msra.mxu0 0.0
    %2372 = vmatprep.subr.mxu0 0.0
    %2373 = vmatpush2.msra.mxu0 0.0
    %2374 = vmatprep.subr.mxu0 0.0
    %2375 = vmatpush2.msra.mxu0 0.0
    %2376 = vmatprep.subr.mxu0 0.0
    %2377 = vmatpush2.msra.mxu0 0.0
    %2378 = vmatprep.subr.mxu0 0.0
    %2379 = vmatpush2.msra.mxu0 0.0
    %2380 = vmatprep.subr.mxu0 0.0
    %2381 = vmatpush2.msra.mxu0 0.0
    %2382 = vmatprep.subr.mxu0 0.0
    %2383 = vmatpush2.msra.mxu0 0.0
    %2384 = vmatprep.subr.mxu0 0.0
    %2385 = vmatpush2.msra.mxu0 0.0
    %2386 = vmatprep.subr.mxu0 0.0
    %2387 = vmatpush2.msra.mxu0 0.0
    %2388 = vmatprep.subr.mxu0 0.0
    %2389 = vmatpush2.msra.mxu0 0.0
    %2390 = vmatprep.subr.mxu0 0.0
    %2391 = vmatpush2.msra.mxu0 0.0
    %2392 = vmatprep.subr.mxu0 0.0
    %2393 = vmatpush2.msra.mxu0 0.0
    %2394 = vmatprep.subr.mxu0 0.0
    %2395 = vmatpush2.msra.mxu0 0.0
    %2396 = vmatprep.subr.mxu0 0.0
    %2397 = vmatpush2.msra.mxu0 0.0
    %2398 = vmatprep.subr.mxu0 0.0
    %2399 = vmatpush2.msra.mxu0 0.0
    %2400 = vmatprep.mubr.f32.mxu0 0.0
    %2401 = vmatmul.mubr.f32.gmra.mxu0 %v2334
    %v2402 = vpop.f32.mrf.mxu0
    %v2403 = vadd.f32 %v487, %v2402
    %v2404 = vpop.f32.mrf.mxu0
    %2405 = vdwg.mxu0
    %v2406 = vmul.f32 %v2403, 0.5
    %v2407 = vtanh.pop %v2406
    %v2408 = vmul.f32 %v2407, 0.5
    %v2409 = vadd.f32 %v2408, 0.5
    %v2410 = vtanh.pop %v2403
    %v2411 = vmul.f32 %v2409, %v1965
    %2413 = vrot.lane.b32.xlu0 %v2410, 64
    %v2414 = vpop.permute.xlu0 %2413
    %v2416 = vmul.f32 %v2409, %v2414
    %2418 = vrot.lane.b32.xlu0 %v2416, 32
    %v2419 = vpop.permute.xlu0 %2418
    %v2421 = vadd.f32 %v2411, %v2419
    %v2422 = vtanh.pop %v2421
    %2424 = vrot.lane.b32.xlu0 %v2422, 64
    %v2425 = vpop.permute.xlu0 %2424
    %v2427 = vmul.f32 %v2409, %v2425
    %v2428 = vadd.f32 %v2427, %v591
    %2430 = vrot.lane.b32.xlu0 %v2428, 32
    %v2431 = vpop.permute.xlu0 %2430
    %v2432 = vsel %vm289, %v2431, 0
    %2434 = vmatprep.subr.mxu0 0.0
    %2435 = vmatpush1.msra.mxu0 0.0
    %2436 = vmatprep.subr.mxu0 0.0
    %2437 = vmatpush1.msra.mxu0 0.0
    %2438 = vmatprep.subr.mxu0 0.0
    %2439 = vmatpush1.msra.mxu0 0.0
    %2440 = vmatprep.subr.mxu0 0.0
    %2441 = vmatpush1.msra.mxu0 0.0
    %2442 = vmatprep.subr.mxu0 0.0
    %2443 = vmatpush1.msra.mxu0 0.0
    %2444 = vmatprep.subr.mxu0 0.0
    %2445 = vmatpush1.msra.mxu0 0.0
    %2446 = vmatprep.subr.mxu0 0.0
    %2447 = vmatpush1.msra.mxu0 0.0
    %2448 = vmatprep.subr.mxu0 0.0
    %2449 = vmatpush1.msra.mxu0 0.0
    %2450 = vmatprep.subr.mxu0 0.0
    %2451 = vmatpush1.msra.mxu0 0.0
    %2452 = vmatprep.subr.mxu0 0.0
    %2453 = vmatpush1.msra.mxu0 0.0
    %2454 = vmatprep.subr.mxu0 0.0
    %2455 = vmatpush1.msra.mxu0 0.0
    %2456 = vmatprep.subr.mxu0 0.0
    %2457 = vmatpush1.msra.mxu0 0.0
    %2458 = vmatprep.subr.mxu0 0.0
    %2459 = vmatpush1.msra.mxu0 %v181
    %2460 = vmatprep.subr.mxu0 0.0
    %2461 = vmatpush1.msra.mxu0 %v180
    %2462 = vmatprep.subr.mxu0 0.0
    %2463 = vmatpush1.msra.mxu0 %v179
    %2464 = vmatprep.subr.mxu0 0.0
    %2465 = vmatpush1.msra.mxu0 %v178
    %2466 = vmatprep.subr.mxu0 0.0
    %2467 = vmatpush2.msra.mxu0 0.0
    %2468 = vmatprep.subr.mxu0 0.0
    %2469 = vmatpush2.msra.mxu0 0.0
    %2470 = vmatprep.subr.mxu0 0.0
    %2471 = vmatpush2.msra.mxu0 0.0
    %2472 = vmatprep.subr.mxu0 0.0
    %2473 = vmatpush2.msra.mxu0 0.0
    %2474 = vmatprep.subr.mxu0 0.0
    %2475 = vmatpush2.msra.mxu0 0.0
    %2476 = vmatprep.subr.mxu0 0.0
    %2477 = vmatpush2.msra.mxu0 0.0
    %2478 = vmatprep.subr.mxu0 0.0
    %2479 = vmatpush2.msra.mxu0 0.0
    %2480 = vmatprep.subr.mxu0 0.0
    %2481 = vmatpush2.msra.mxu0 0.0
    %2482 = vmatprep.subr.mxu0 0.0
    %2483 = vmatpush2.msra.mxu0 0.0
    %2484 = vmatprep.subr.mxu0 0.0
    %2485 = vmatpush2.msra.mxu0 0.0
    %2486 = vmatprep.subr.mxu0 0.0
    %2487 = vmatpush2.msra.mxu0 0.0
    %2488 = vmatprep.subr.mxu0 0.0
    %2489 = vmatpush2.msra.mxu0 0.0
    %2490 = vmatprep.subr.mxu0 0.0
    %2491 = vmatpush2.msra.mxu0 0.0
    %2492 = vmatprep.subr.mxu0 0.0
    %2493 = vmatpush2.msra.mxu0 0.0
    %2494 = vmatprep.subr.mxu0 0.0
    %2495 = vmatpush2.msra.mxu0 0.0
    %2496 = vmatprep.subr.mxu0 0.0
    %2497 = vmatpush2.msra.mxu0 0.0
    %2498 = vmatprep.mubr.f32.mxu0 0.0
    %2499 = vmatmul.mubr.f32.gmra.mxu0 %v2432
    %v2500 = vpop.f32.mrf.mxu0
    %v2501 = vadd.f32 %v598, %v2500
    %v2502 = vpop.f32.mrf.mxu0
    %2503 = vdwg.mxu0
    %vm2504 = vcmp.gt.f32.partialorder %v2501, 0.0
    %v2505 = vmul.f32 %v2501, 0.01
    %v2506 = vsel %vm2504, %v2501, %v2505
    %v2508 = vsel %vm289, %v2506, 0
    %2510 = vmatprep.subr.mxu0 0.0
    %2511 = vmatpush1.msra.mxu0 0.0
    %2512 = vmatprep.subr.mxu0 0.0
    %2513 = vmatpush1.msra.mxu0 0.0
    %2514 = vmatprep.subr.mxu0 0.0
    %2515 = vmatpush1.msra.mxu0 0.0
    %2516 = vmatprep.subr.mxu0 0.0
    %2517 = vmatpush1.msra.mxu0 0.0
    %2518 = vmatprep.subr.mxu0 0.0
    %2519 = vmatpush1.msra.mxu0 0.0
    %2520 = vmatprep.subr.mxu0 0.0
    %2521 = vmatpush1.msra.mxu0 0.0
    %2522 = vmatprep.subr.mxu0 0.0
    %2523 = vmatpush1.msra.mxu0 0.0
    %2524 = vmatprep.subr.mxu0 0.0
    %2525 = vmatpush1.msra.mxu0 0.0
    %2526 = vmatprep.subr.mxu0 0.0
    %2527 = vmatpush1.msra.mxu0 0.0
    %2528 = vmatprep.subr.mxu0 0.0
    %2529 = vmatpush1.msra.mxu0 0.0
    %2530 = vmatprep.subr.mxu0 0.0
    %2531 = vmatpush1.msra.mxu0 0.0
    %2532 = vmatprep.subr.mxu0 0.0
    %2533 = vmatpush1.msra.mxu0 0.0
    %2534 = vmatprep.subr.mxu0 0.0
    %2535 = vmatpush1.msra.mxu0 %v186
    %2536 = vmatprep.subr.mxu0 0.0
    %2537 = vmatpush1.msra.mxu0 %v185
    %2538 = vmatprep.subr.mxu0 0.0
    %2539 = vmatpush1.msra.mxu0 %v184
    %2540 = vmatprep.subr.mxu0 0.0
    %2541 = vmatpush1.msra.mxu0 %v183
    %2542 = vmatprep.subr.mxu0 0.0
    %2543 = vmatpush2.msra.mxu0 0.0
    %2544 = vmatprep.subr.mxu0 0.0
    %2545 = vmatpush2.msra.mxu0 0.0
    %2546 = vmatprep.subr.mxu0 0.0
    %2547 = vmatpush2.msra.mxu0 0.0
    %2548 = vmatprep.subr.mxu0 0.0
    %2549 = vmatpush2.msra.mxu0 0.0
    %2550 = vmatprep.subr.mxu0 0.0
    %2551 = vmatpush2.msra.mxu0 0.0
    %2552 = vmatprep.subr.mxu0 0.0
    %2553 = vmatpush2.msra.mxu0 0.0
    %2554 = vmatprep.subr.mxu0 0.0
    %2555 = vmatpush2.msra.mxu0 0.0
    %2556 = vmatprep.subr.mxu0 0.0
    %2557 = vmatpush2.msra.mxu0 0.0
    %2558 = vmatprep.subr.mxu0 0.0
    %2559 = vmatpush2.msra.mxu0 0.0
    %2560 = vmatprep.subr.mxu0 0.0
    %2561 = vmatpush2.msra.mxu0 0.0
    %2562 = vmatprep.subr.mxu0 0.0
    %2563 = vmatpush2.msra.mxu0 0.0
    %2564 = vmatprep.subr.mxu0 0.0
    %2565 = vmatpush2.msra.mxu0 0.0
    %2566 = vmatprep.subr.mxu0 0.0
    %2567 = vmatpush2.msra.mxu0 0.0
    %2568 = vmatprep.subr.mxu0 0.0
    %2569 = vmatpush2.msra.mxu0 0.0
    %2570 = vmatprep.subr.mxu0 0.0
    %2571 = vmatpush2.msra.mxu0 0.0
    %2572 = vmatprep.subr.mxu0 0.0
    %2573 = vmatpush2.msra.mxu0 0.0
    %2574 = vmatprep.mubr.f32.mxu0 0.0
    %2575 = vmatmul.mubr.f32.gmra.mxu0 %v2508
    %v2576 = vpop.f32.mrf.mxu0
    %v2577 = vadd.f32 %v682, %v2576
    %v2578 = vpop.f32.mrf.mxu0
    %2579 = vdwg.mxu0
    %s2580 = scalar_lea.vmem [#allocation17], 32
    %2581 = vst [vmem:[%s2580] sm:$0xff] %v2577
    %v2582 = vsel %vm278, %v2577, -inf
    %2583 = vmax.xlane.f32.xlu0 %v2582
    %v2584 = vpop.xlane.xlu0 %2583
    %vm2585 = vcmp.eq.f32.partialorder %v2582, %v2584
    %v2586 = vsel %vm2585, %v276, 128
    %v2587 = vand.u32 %v2586, 65535
    %v2588 = vshra.s32 %v2586, 16
    %v2589 = vcvt.s32.f32 %v2587
    %v2590 = vcvt.s32.f32 %v2588
    %2591 = vmin.xlane.f32.xlu0 %v2590
    %v2592 = vpop.xlane.xlu0 %2591
    %vm2593 = vcmp.eq.f32.partialorder %v2590, %v2592
    %v2594 = vsel %vm2593, %v2589, inf
    %2595 = vmin.xlane.f32.xlu0 %v2594
    %v2596 = vpop.xlane.xlu0 %2595
    %v2597 = vcvt.f32.s32 %v2596
    %v2598 = vcvt.f32.s32 %v2592
    %v2599 = vshll.u32 %v2598, 16
    %v2600 = vadd.s32 %v2599, %v2597
    %v2601 = vsel %vm277, %v2577, 0.0
    %2602 = vadd.xlane.f32.xlu0 %v2601
    %v2603 = vpop.xlane.xlu0 %2602
    %v2604 = vmul.f32 %v2603, 0.5
    %v2605 = vtanh.pop %v2604
    %v2606 = vmul.f32 %v2605, 0.5
    %v2607 = vadd.f32 %v2606, 0.5
    %vm2608 = vcmp.eq.s32.totalorder %v276, %v2600
    %v2609 = vsel %vm2608, 1, 0
    %v2610 = vcvt.s32.f32 %v2609
    %v2611 = vsel %vm277, %v2607, %v2610
    %v2612 = vsel %vm289, %v2326, 0
    %2614 = vmatprep.subr.mxu0 0.0
    %2615 = vmatpush1.msra.mxu0 0.0
    %2616 = vmatprep.subr.mxu0 0.0
    %2617 = vmatpush1.msra.mxu0 0.0
    %2618 = vmatprep.subr.mxu0 0.0
    %2619 = vmatpush1.msra.mxu0 0.0
    %2620 = vmatprep.subr.mxu0 0.0
    %2621 = vmatpush1.msra.mxu0 0.0
    %2622 = vmatprep.subr.mxu0 0.0
    %2623 = vmatpush1.msra.mxu0 0.0
    %2624 = vmatprep.subr.mxu0 0.0
    %2625 = vmatpush1.msra.mxu0 0.0
    %2626 = vmatprep.subr.mxu0 0.0
    %2627 = vmatpush1.msra.mxu0 0.0
    %2628 = vmatprep.subr.mxu0 0.0
    %2629 = vmatpush1.msra.mxu0 0.0
    %2630 = vmatprep.subr.mxu0 0.0
    %2631 = vmatpush1.msra.mxu0 0.0
    %2632 = vmatprep.subr.mxu0 0.0
    %2633 = vmatpush1.msra.mxu0 0.0
    %2634 = vmatprep.subr.mxu0 0.0
    %2635 = vmatpush1.msra.mxu0 0.0
    %2636 = vmatprep.subr.mxu0 0.0
    %2637 = vmatpush1.msra.mxu0 0.0
    %2638 = vmatprep.subr.mxu0 0.0
    %2639 = vmatpush1.msra.mxu0 %v165
    %2640 = vmatprep.subr.mxu0 0.0
    %2641 = vmatpush1.msra.mxu0 %v164
    %2642 = vmatprep.subr.mxu0 0.0
    %2643 = vmatpush1.msra.mxu0 %v163
    %2644 = vmatprep.subr.mxu0 0.0
    %2645 = vmatpush1.msra.mxu0 %v162
    %2646 = vmatprep.subr.mxu0 0.0
    %2647 = vmatpush2.msra.mxu0 0.0
    %2648 = vmatprep.subr.mxu0 0.0
    %2649 = vmatpush2.msra.mxu0 0.0
    %2650 = vmatprep.subr.mxu0 0.0
    %2651 = vmatpush2.msra.mxu0 0.0
    %2652 = vmatprep.subr.mxu0 0.0
    %2653 = vmatpush2.msra.mxu0 0.0
    %2654 = vmatprep.subr.mxu0 0.0
    %2655 = vmatpush2.msra.mxu0 0.0
    %2656 = vmatprep.subr.mxu0 0.0
    %2657 = vmatpush2.msra.mxu0 0.0
    %2658 = vmatprep.subr.mxu0 0.0
    %2659 = vmatpush2.msra.mxu0 0.0
    %2660 = vmatprep.subr.mxu0 0.0
    %2661 = vmatpush2.msra.mxu0 0.0
    %2662 = vmatprep.subr.mxu0 0.0
    %2663 = vmatpush2.msra.mxu0 0.0
    %2664 = vmatprep.subr.mxu0 0.0
    %2665 = vmatpush2.msra.mxu0 0.0
    %2666 = vmatprep.subr.mxu0 0.0
    %2667 = vmatpush2.msra.mxu0 0.0
    %2668 = vmatprep.subr.mxu0 0.0
    %2669 = vmatpush2.msra.mxu0 0.0
    %2670 = vmatprep.subr.mxu0 0.0
    %2671 = vmatpush2.msra.mxu0 0.0
    %2672 = vmatprep.subr.mxu0 0.0
    %2673 = vmatpush2.msra.mxu0 0.0
    %2674 = vmatprep.subr.mxu0 0.0
    %2675 = vmatpush2.msra.mxu0 0.0
    %2676 = vmatprep.subr.mxu0 0.0
    %2677 = vmatpush2.msra.mxu0 0.0
    %2678 = vmatprep.mubr.f32.mxu0 0.0
    %2679 = vmatmul.mubr.f32.gmra.mxu0 %v2612
    %v2680 = vpop.f32.mrf.mxu0
    %v2681 = vadd.f32 0.0, %v2680
    %v2682 = vpop.f32.mrf.mxu0
    %2683 = vdwg.mxu0
    %v2685 = vsel %vm363, %v2611, 0
    %2687 = vmatprep.subr.mxu0 0.0
    %2688 = vmatpush1.msra.mxu0 0.0
    %2689 = vmatprep.subr.mxu0 0.0
    %2690 = vmatpush1.msra.mxu0 0.0
    %2691 = vmatprep.subr.mxu0 0.0
    %2692 = vmatpush1.msra.mxu0 0.0
    %2693 = vmatprep.subr.mxu0 0.0
    %2694 = vmatpush1.msra.mxu0 0.0
    %2695 = vmatprep.subr.mxu0 0.0
    %2696 = vmatpush1.msra.mxu0 0.0
    %2697 = vmatprep.subr.mxu0 0.0
    %2698 = vmatpush1.msra.mxu0 0.0
    %2699 = vmatprep.subr.mxu0 0.0
    %2700 = vmatpush1.msra.mxu0 0.0
    %2701 = vmatprep.subr.mxu0 0.0
    %2702 = vmatpush1.msra.mxu0 0.0
    %2703 = vmatprep.subr.mxu0 0.0
    %2704 = vmatpush1.msra.mxu0 0.0
    %2705 = vmatprep.subr.mxu0 0.0
    %2706 = vmatpush1.msra.mxu0 0.0
    %2707 = vmatprep.subr.mxu0 0.0
    %2708 = vmatpush1.msra.mxu0 0.0
    %2709 = vmatprep.subr.mxu0 0.0
    %2710 = vmatpush1.msra.mxu0 0.0
    %2711 = vmatprep.subr.mxu0 0.0
    %2712 = vmatpush1.msra.mxu0 0.0
    %2713 = vmatprep.subr.mxu0 0.0
    %2714 = vmatpush1.msra.mxu0 0.0
    %2715 = vmatprep.subr.mxu0 0.0
    %2716 = vmatpush1.msra.mxu0 0.0
    %2717 = vmatprep.subr.mxu0 0.0
    %2718 = vmatpush1.msra.mxu0 %v369
    %2719 = vmatprep.subr.mxu0 0.0
    %2720 = vmatpush2.msra.mxu0 0.0
    %2721 = vmatprep.subr.mxu0 0.0
    %2722 = vmatpush2.msra.mxu0 0.0
    %2723 = vmatprep.subr.mxu0 0.0
    %2724 = vmatpush2.msra.mxu0 0.0
    %2725 = vmatprep.subr.mxu0 0.0
    %2726 = vmatpush2.msra.mxu0 0.0
    %2727 = vmatprep.subr.mxu0 0.0
    %2728 = vmatpush2.msra.mxu0 0.0
    %2729 = vmatprep.subr.mxu0 0.0
    %2730 = vmatpush2.msra.mxu0 0.0
    %2731 = vmatprep.subr.mxu0 0.0
    %2732 = vmatpush2.msra.mxu0 0.0
    %2733 = vmatprep.subr.mxu0 0.0
    %2734 = vmatpush2.msra.mxu0 0.0
    %2735 = vmatprep.subr.mxu0 0.0
    %2736 = vmatpush2.msra.mxu0 0.0
    %2737 = vmatprep.subr.mxu0 0.0
    %2738 = vmatpush2.msra.mxu0 0.0
    %2739 = vmatprep.subr.mxu0 0.0
    %2740 = vmatpush2.msra.mxu0 0.0
    %2741 = vmatprep.subr.mxu0 0.0
    %2742 = vmatpush2.msra.mxu0 0.0
    %2743 = vmatprep.subr.mxu0 0.0
    %2744 = vmatpush2.msra.mxu0 0.0
    %2745 = vmatprep.subr.mxu0 0.0
    %2746 = vmatpush2.msra.mxu0 0.0
    %2747 = vmatprep.subr.mxu0 0.0
    %2748 = vmatpush2.msra.mxu0 0.0
    %2749 = vmatprep.subr.mxu0 0.0
    %2750 = vmatpush2.msra.mxu0 0.0
    %2751 = vmatprep.mubr.f32.mxu0 0.0
    %2752 = vmatmul.mubr.f32.gmra.mxu0 %v2685
    %v2753 = vpop.f32.mrf.mxu0
    %v2754 = vadd.f32 %v2681, %v2753
    %v2755 = vpop.f32.mrf.mxu0
    %2756 = vdwg.mxu0
    %v2757 = vadd.f32 %v2754, %v445
    %v2758 = vmul.f32 %v2757, 0.5
    %v2759 = vtanh.pop %v2758
    %v2760 = vmul.f32 %v2759, 0.5
    %v2761 = vadd.f32 %v2760, 0.5
    %v2762 = vtanh.pop %v2757
    %v2763 = vmul.f32 %v2761, %v2317
    %2765 = vrot.lane.b32.xlu0 %v2762, 64
    %v2766 = vpop.permute.xlu0 %2765
    %v2768 = vmul.f32 %v2761, %v2766
    %2770 = vrot.lane.b32.xlu0 %v2768, 32
    %v2771 = vpop.permute.xlu0 %2770
    %v2773 = vadd.f32 %v2763, %v2771
    %v2774 = vtanh.pop %v2773
    %2776 = vrot.lane.b32.xlu0 %v2774, 64
    %v2777 = vpop.permute.xlu0 %2776
    %v2779 = vmul.f32 %v2761, %v2777
    %2781 = vrot.lane.b32.xlu0 %v2779, 32
    %v2782 = vpop.permute.xlu0 %2781
    %2785 = vrot.lane.b32.xlu0 %v2427, 64
    %v2786 = vpop.permute.xlu0 %2785
    %v2788 = vsel %vm289, %v2782, %v2786
    %v2790 = vsel %vm489, %v2788, 0
    %2792 = vmatprep.subr.mxu0 0.0
    %2793 = vmatpush1.msra.mxu0 0.0
    %2794 = vmatprep.subr.mxu0 0.0
    %2795 = vmatpush1.msra.mxu0 0.0
    %2796 = vmatprep.subr.mxu0 0.0
    %2797 = vmatpush1.msra.mxu0 0.0
    %2798 = vmatprep.subr.mxu0 0.0
    %2799 = vmatpush1.msra.mxu0 0.0
    %2800 = vmatprep.subr.mxu0 0.0
    %2801 = vmatpush1.msra.mxu0 0.0
    %2802 = vmatprep.subr.mxu0 0.0
    %2803 = vmatpush1.msra.mxu0 0.0
    %2804 = vmatprep.subr.mxu0 0.0
    %2805 = vmatpush1.msra.mxu0 0.0
    %2806 = vmatprep.subr.mxu0 0.0
    %2807 = vmatpush1.msra.mxu0 0.0
    %2808 = vmatprep.subr.mxu0 0.0
    %2809 = vmatpush1.msra.mxu0 %v174
    %2810 = vmatprep.subr.mxu0 0.0
    %2811 = vmatpush1.msra.mxu0 %v173
    %2812 = vmatprep.subr.mxu0 0.0
    %2813 = vmatpush1.msra.mxu0 %v172
    %2814 = vmatprep.subr.mxu0 0.0
    %2815 = vmatpush1.msra.mxu0 %v171
    %2816 = vmatprep.subr.mxu0 0.0
    %2817 = vmatpush1.msra.mxu0 %v170
    %2818 = vmatprep.subr.mxu0 0.0
    %2819 = vmatpush1.msra.mxu0 %v169
    %2820 = vmatprep.subr.mxu0 0.0
    %2821 = vmatpush1.msra.mxu0 %v168
    %2822 = vmatprep.subr.mxu0 0.0
    %2823 = vmatpush1.msra.mxu0 %v167
    %2824 = vmatprep.subr.mxu0 0.0
    %2825 = vmatpush2.msra.mxu0 0.0
    %2826 = vmatprep.subr.mxu0 0.0
    %2827 = vmatpush2.msra.mxu0 0.0
    %2828 = vmatprep.subr.mxu0 0.0
    %2829 = vmatpush2.msra.mxu0 0.0
    %2830 = vmatprep.subr.mxu0 0.0
    %2831 = vmatpush2.msra.mxu0 0.0
    %2832 = vmatprep.subr.mxu0 0.0
    %2833 = vmatpush2.msra.mxu0 0.0
    %2834 = vmatprep.subr.mxu0 0.0
    %2835 = vmatpush2.msra.mxu0 0.0
    %2836 = vmatprep.subr.mxu0 0.0
    %2837 = vmatpush2.msra.mxu0 0.0
    %2838 = vmatprep.subr.mxu0 0.0
    %2839 = vmatpush2.msra.mxu0 0.0
    %2840 = vmatprep.subr.mxu0 0.0
    %2841 = vmatpush2.msra.mxu0 0.0
    %2842 = vmatprep.subr.mxu0 0.0
    %2843 = vmatpush2.msra.mxu0 0.0
    %2844 = vmatprep.subr.mxu0 0.0
    %2845 = vmatpush2.msra.mxu0 0.0
    %2846 = vmatprep.subr.mxu0 0.0
    %2847 = vmatpush2.msra.mxu0 0.0
    %2848 = vmatprep.subr.mxu0 0.0
    %2849 = vmatpush2.msra.mxu0 0.0
    %2850 = vmatprep.subr.mxu0 0.0
    %2851 = vmatpush2.msra.mxu0 0.0
    %2852 = vmatprep.subr.mxu0 0.0
    %2853 = vmatpush2.msra.mxu0 0.0
    %2854 = vmatprep.subr.mxu0 0.0
    %2855 = vmatpush2.msra.mxu0 0.0
    %2856 = vmatprep.mubr.f32.mxu0 0.0
    %2857 = vmatmul.mubr.f32.gmra.mxu0 %v2790
    %v2858 = vpop.f32.mrf.mxu0
    %v2859 = vadd.f32 %v487, %v2858
    %v2860 = vpop.f32.mrf.mxu0
    %2861 = vdwg.mxu0
    %v2862 = vmul.f32 %v2859, 0.5
    %v2863 = vtanh.pop %v2862
    %v2864 = vmul.f32 %v2863, 0.5
    %v2865 = vadd.f32 %v2864, 0.5
    %v2866 = vtanh.pop %v2859
    %v2867 = vmul.f32 %v2865, %v2421
    %2869 = vrot.lane.b32.xlu0 %v2866, 64
    %v2870 = vpop.permute.xlu0 %2869
    %v2872 = vmul.f32 %v2865, %v2870
    %2874 = vrot.lane.b32.xlu0 %v2872, 32
    %v2875 = vpop.permute.xlu0 %2874
    %v2877 = vadd.f32 %v2867, %v2875
    %v2878 = vtanh.pop %v2877
    %2880 = vrot.lane.b32.xlu0 %v2878, 64
    %v2881 = vpop.permute.xlu0 %2880
    %v2883 = vmul.f32 %v2865, %v2881
    %v2884 = vadd.f32 %v2883, %v591
    %2886 = vrot.lane.b32.xlu0 %v2884, 32
    %v2887 = vpop.permute.xlu0 %2886
    %v2888 = vsel %vm289, %v2887, 0
    %2890 = vmatprep.subr.mxu0 0.0
    %2891 = vmatpush1.msra.mxu0 0.0
    %2892 = vmatprep.subr.mxu0 0.0
    %2893 = vmatpush1.msra.mxu0 0.0
    %2894 = vmatprep.subr.mxu0 0.0
    %2895 = vmatpush1.msra.mxu0 0.0
    %2896 = vmatprep.subr.mxu0 0.0
    %2897 = vmatpush1.msra.mxu0 0.0
    %2898 = vmatprep.subr.mxu0 0.0
    %2899 = vmatpush1.msra.mxu0 0.0
    %2900 = vmatprep.subr.mxu0 0.0
    %2901 = vmatpush1.msra.mxu0 0.0
    %2902 = vmatprep.subr.mxu0 0.0
    %2903 = vmatpush1.msra.mxu0 0.0
    %2904 = vmatprep.subr.mxu0 0.0
    %2905 = vmatpush1.msra.mxu0 0.0
    %2906 = vmatprep.subr.mxu0 0.0
    %2907 = vmatpush1.msra.mxu0 0.0
    %2908 = vmatprep.subr.mxu0 0.0
    %2909 = vmatpush1.msra.mxu0 0.0
    %2910 = vmatprep.subr.mxu0 0.0
    %2911 = vmatpush1.msra.mxu0 0.0
    %2912 = vmatprep.subr.mxu0 0.0
    %2913 = vmatpush1.msra.mxu0 0.0
    %2914 = vmatprep.subr.mxu0 0.0
    %2915 = vmatpush1.msra.mxu0 %v181
    %2916 = vmatprep.subr.mxu0 0.0
    %2917 = vmatpush1.msra.mxu0 %v180
    %2918 = vmatprep.subr.mxu0 0.0
    %2919 = vmatpush1.msra.mxu0 %v179
    %2920 = vmatprep.subr.mxu0 0.0
    %2921 = vmatpush1.msra.mxu0 %v178
    %2922 = vmatprep.subr.mxu0 0.0
    %2923 = vmatpush2.msra.mxu0 0.0
    %2924 = vmatprep.subr.mxu0 0.0
    %2925 = vmatpush2.msra.mxu0 0.0
    %2926 = vmatprep.subr.mxu0 0.0
    %2927 = vmatpush2.msra.mxu0 0.0
    %2928 = vmatprep.subr.mxu0 0.0
    %2929 = vmatpush2.msra.mxu0 0.0
    %2930 = vmatprep.subr.mxu0 0.0
    %2931 = vmatpush2.msra.mxu0 0.0
    %2932 = vmatprep.subr.mxu0 0.0
    %2933 = vmatpush2.msra.mxu0 0.0
    %2934 = vmatprep.subr.mxu0 0.0
    %2935 = vmatpush2.msra.mxu0 0.0
    %2936 = vmatprep.subr.mxu0 0.0
    %2937 = vmatpush2.msra.mxu0 0.0
    %2938 = vmatprep.subr.mxu0 0.0
    %2939 = vmatpush2.msra.mxu0 0.0
    %2940 = vmatprep.subr.mxu0 0.0
    %2941 = vmatpush2.msra.mxu0 0.0
    %2942 = vmatprep.subr.mxu0 0.0
    %2943 = vmatpush2.msra.mxu0 0.0
    %2944 = vmatprep.subr.mxu0 0.0
    %2945 = vmatpush2.msra.mxu0 0.0
    %2946 = vmatprep.subr.mxu0 0.0
    %2947 = vmatpush2.msra.mxu0 0.0
    %2948 = vmatprep.subr.mxu0 0.0
    %2949 = vmatpush2.msra.mxu0 0.0
    %2950 = vmatprep.subr.mxu0 0.0
    %2951 = vmatpush2.msra.mxu0 0.0
    %2952 = vmatprep.subr.mxu0 0.0
    %2953 = vmatpush2.msra.mxu0 0.0
    %2954 = vmatprep.mubr.f32.mxu0 0.0
    %2955 = vmatmul.mubr.f32.gmra.mxu0 %v2888
    %v2956 = vpop.f32.mrf.mxu0
    %v2957 = vadd.f32 %v598, %v2956
    %v2958 = vpop.f32.mrf.mxu0
    %2959 = vdwg.mxu0
    %vm2960 = vcmp.gt.f32.partialorder %v2957, 0.0
    %v2961 = vmul.f32 %v2957, 0.01
    %v2962 = vsel %vm2960, %v2957, %v2961
    %v2964 = vsel %vm289, %v2962, 0
    %2966 = vmatprep.subr.mxu0 0.0
    %2967 = vmatpush1.msra.mxu0 0.0
    %2968 = vmatprep.subr.mxu0 0.0
    %2969 = vmatpush1.msra.mxu0 0.0
    %2970 = vmatprep.subr.mxu0 0.0
    %2971 = vmatpush1.msra.mxu0 0.0
    %2972 = vmatprep.subr.mxu0 0.0
    %2973 = vmatpush1.msra.mxu0 0.0
    %2974 = vmatprep.subr.mxu0 0.0
    %2975 = vmatpush1.msra.mxu0 0.0
    %2976 = vmatprep.subr.mxu0 0.0
    %2977 = vmatpush1.msra.mxu0 0.0
    %2978 = vmatprep.subr.mxu0 0.0
    %2979 = vmatpush1.msra.mxu0 0.0
    %2980 = vmatprep.subr.mxu0 0.0
    %2981 = vmatpush1.msra.mxu0 0.0
    %2982 = vmatprep.subr.mxu0 0.0
    %2983 = vmatpush1.msra.mxu0 0.0
    %2984 = vmatprep.subr.mxu0 0.0
    %2985 = vmatpush1.msra.mxu0 0.0
    %2986 = vmatprep.subr.mxu0 0.0
    %2987 = vmatpush1.msra.mxu0 0.0
    %2988 = vmatprep.subr.mxu0 0.0
    %2989 = vmatpush1.msra.mxu0 0.0
    %2990 = vmatprep.subr.mxu0 0.0
    %2991 = vmatpush1.msra.mxu0 %v186
    %2992 = vmatprep.subr.mxu0 0.0
    %2993 = vmatpush1.msra.mxu0 %v185
    %2994 = vmatprep.subr.mxu0 0.0
    %2995 = vmatpush1.msra.mxu0 %v184
    %2996 = vmatprep.subr.mxu0 0.0
    %2997 = vmatpush1.msra.mxu0 %v183
    %2998 = vmatprep.subr.mxu0 0.0
    %2999 = vmatpush2.msra.mxu0 0.0
    %3000 = vmatprep.subr.mxu0 0.0
    %3001 = vmatpush2.msra.mxu0 0.0
    %3002 = vmatprep.subr.mxu0 0.0
    %3003 = vmatpush2.msra.mxu0 0.0
    %3004 = vmatprep.subr.mxu0 0.0
    %3005 = vmatpush2.msra.mxu0 0.0
    %3006 = vmatprep.subr.mxu0 0.0
    %3007 = vmatpush2.msra.mxu0 0.0
    %3008 = vmatprep.subr.mxu0 0.0
    %3009 = vmatpush2.msra.mxu0 0.0
    %3010 = vmatprep.subr.mxu0 0.0
    %3011 = vmatpush2.msra.mxu0 0.0
    %3012 = vmatprep.subr.mxu0 0.0
    %3013 = vmatpush2.msra.mxu0 0.0
    %3014 = vmatprep.subr.mxu0 0.0
    %3015 = vmatpush2.msra.mxu0 0.0
    %3016 = vmatprep.subr.mxu0 0.0
    %3017 = vmatpush2.msra.mxu0 0.0
    %3018 = vmatprep.subr.mxu0 0.0
    %3019 = vmatpush2.msra.mxu0 0.0
    %3020 = vmatprep.subr.mxu0 0.0
    %3021 = vmatpush2.msra.mxu0 0.0
    %3022 = vmatprep.subr.mxu0 0.0
    %3023 = vmatpush2.msra.mxu0 0.0
    %3024 = vmatprep.subr.mxu0 0.0
    %3025 = vmatpush2.msra.mxu0 0.0
    %3026 = vmatprep.subr.mxu0 0.0
    %3027 = vmatpush2.msra.mxu0 0.0
    %3028 = vmatprep.subr.mxu0 0.0
    %3029 = vmatpush2.msra.mxu0 0.0
    %3030 = vmatprep.mubr.f32.mxu0 0.0
    %3031 = vmatmul.mubr.f32.gmra.mxu0 %v2964
    %v3032 = vpop.f32.mrf.mxu0
    %v3033 = vadd.f32 %v682, %v3032
    %v3034 = vpop.f32.mrf.mxu0
    %3035 = vdwg.mxu0
    %s3036 = scalar_lea.vmem [#allocation17], 40
    %3037 = vst [vmem:[%s3036] sm:$0xff] %v3033
    %v3038 = vsel %vm278, %v3033, -inf
    %3039 = vmax.xlane.f32.xlu0 %v3038
    %v3040 = vpop.xlane.xlu0 %3039
    %vm3041 = vcmp.eq.f32.partialorder %v3038, %v3040
    %v3042 = vsel %vm3041, %v276, 128
    %v3043 = vand.u32 %v3042, 65535
    %v3044 = vshra.s32 %v3042, 16
    %v3045 = vcvt.s32.f32 %v3043
    %v3046 = vcvt.s32.f32 %v3044
    %3047 = vmin.xlane.f32.xlu0 %v3046
    %v3048 = vpop.xlane.xlu0 %3047
    %vm3049 = vcmp.eq.f32.partialorder %v3046, %v3048
    %v3050 = vsel %vm3049, %v3045, inf
    %3051 = vmin.xlane.f32.xlu0 %v3050
    %v3052 = vpop.xlane.xlu0 %3051
    %v3053 = vcvt.f32.s32 %v3052
    %v3054 = vcvt.f32.s32 %v3048
    %v3055 = vshll.u32 %v3054, 16
    %v3056 = vadd.s32 %v3055, %v3053
    %v3057 = vsel %vm277, %v3033, 0.0
    %3058 = vadd.xlane.f32.xlu0 %v3057
    %v3059 = vpop.xlane.xlu0 %3058
    %v3060 = vmul.f32 %v3059, 0.5
    %v3061 = vtanh.pop %v3060
    %v3062 = vmul.f32 %v3061, 0.5
    %v3063 = vadd.f32 %v3062, 0.5
    %vm3064 = vcmp.eq.s32.totalorder %v276, %v3056
    %v3065 = vsel %vm3064, 1, 0
    %v3066 = vcvt.s32.f32 %v3065
    %v3067 = vsel %vm277, %v3063, %v3066
    %v3068 = vsel %vm289, %v2782, 0
    %3070 = vmatprep.subr.mxu0 0.0
    %3071 = vmatpush1.msra.mxu0 0.0
    %3072 = vmatprep.subr.mxu0 0.0
    %3073 = vmatpush1.msra.mxu0 0.0
    %3074 = vmatprep.subr.mxu0 0.0
    %3075 = vmatpush1.msra.mxu0 0.0
    %3076 = vmatprep.subr.mxu0 0.0
    %3077 = vmatpush1.msra.mxu0 0.0
    %3078 = vmatprep.subr.mxu0 0.0
    %3079 = vmatpush1.msra.mxu0 0.0
    %3080 = vmatprep.subr.mxu0 0.0
    %3081 = vmatpush1.msra.mxu0 0.0
    %3082 = vmatprep.subr.mxu0 0.0
    %3083 = vmatpush1.msra.mxu0 0.0
    %3084 = vmatprep.subr.mxu0 0.0
    %3085 = vmatpush1.msra.mxu0 0.0
    %3086 = vmatprep.subr.mxu0 0.0
    %3087 = vmatpush1.msra.mxu0 0.0
    %3088 = vmatprep.subr.mxu0 0.0
    %3089 = vmatpush1.msra.mxu0 0.0
    %3090 = vmatprep.subr.mxu0 0.0
    %3091 = vmatpush1.msra.mxu0 0.0
    %3092 = vmatprep.subr.mxu0 0.0
    %3093 = vmatpush1.msra.mxu0 0.0
    %3094 = vmatprep.subr.mxu0 0.0
    %3095 = vmatpush1.msra.mxu0 %v165
    %3096 = vmatprep.subr.mxu0 0.0
    %3097 = vmatpush1.msra.mxu0 %v164
    %3098 = vmatprep.subr.mxu0 0.0
    %3099 = vmatpush1.msra.mxu0 %v163
    %3100 = vmatprep.subr.mxu0 0.0
    %3101 = vmatpush1.msra.mxu0 %v162
    %3102 = vmatprep.subr.mxu0 0.0
    %3103 = vmatpush2.msra.mxu0 0.0
    %3104 = vmatprep.subr.mxu0 0.0
    %3105 = vmatpush2.msra.mxu0 0.0
    %3106 = vmatprep.subr.mxu0 0.0
    %3107 = vmatpush2.msra.mxu0 0.0
    %3108 = vmatprep.subr.mxu0 0.0
    %3109 = vmatpush2.msra.mxu0 0.0
    %3110 = vmatprep.subr.mxu0 0.0
    %3111 = vmatpush2.msra.mxu0 0.0
    %3112 = vmatprep.subr.mxu0 0.0
    %3113 = vmatpush2.msra.mxu0 0.0
    %3114 = vmatprep.subr.mxu0 0.0
    %3115 = vmatpush2.msra.mxu0 0.0
    %3116 = vmatprep.subr.mxu0 0.0
    %3117 = vmatpush2.msra.mxu0 0.0
    %3118 = vmatprep.subr.mxu0 0.0
    %3119 = vmatpush2.msra.mxu0 0.0
    %3120 = vmatprep.subr.mxu0 0.0
    %3121 = vmatpush2.msra.mxu0 0.0
    %3122 = vmatprep.subr.mxu0 0.0
    %3123 = vmatpush2.msra.mxu0 0.0
    %3124 = vmatprep.subr.mxu0 0.0
    %3125 = vmatpush2.msra.mxu0 0.0
    %3126 = vmatprep.subr.mxu0 0.0
    %3127 = vmatpush2.msra.mxu0 0.0
    %3128 = vmatprep.subr.mxu0 0.0
    %3129 = vmatpush2.msra.mxu0 0.0
    %3130 = vmatprep.subr.mxu0 0.0
    %3131 = vmatpush2.msra.mxu0 0.0
    %3132 = vmatprep.subr.mxu0 0.0
    %3133 = vmatpush2.msra.mxu0 0.0
    %3134 = vmatprep.mubr.f32.mxu0 0.0
    %3135 = vmatmul.mubr.f32.gmra.mxu0 %v3068
    %v3136 = vpop.f32.mrf.mxu0
    %v3137 = vadd.f32 0.0, %v3136
    %v3138 = vpop.f32.mrf.mxu0
    %3139 = vdwg.mxu0
    %v3141 = vsel %vm363, %v3067, 0
    %3143 = vmatprep.subr.mxu0 0.0
    %3144 = vmatpush1.msra.mxu0 0.0
    %3145 = vmatprep.subr.mxu0 0.0
    %3146 = vmatpush1.msra.mxu0 0.0
    %3147 = vmatprep.subr.mxu0 0.0
    %3148 = vmatpush1.msra.mxu0 0.0
    %3149 = vmatprep.subr.mxu0 0.0
    %3150 = vmatpush1.msra.mxu0 0.0
    %3151 = vmatprep.subr.mxu0 0.0
    %3152 = vmatpush1.msra.mxu0 0.0
    %3153 = vmatprep.subr.mxu0 0.0
    %3154 = vmatpush1.msra.mxu0 0.0
    %3155 = vmatprep.subr.mxu0 0.0
    %3156 = vmatpush1.msra.mxu0 0.0
    %3157 = vmatprep.subr.mxu0 0.0
    %3158 = vmatpush1.msra.mxu0 0.0
    %3159 = vmatprep.subr.mxu0 0.0
    %3160 = vmatpush1.msra.mxu0 0.0
    %3161 = vmatprep.subr.mxu0 0.0
    %3162 = vmatpush1.msra.mxu0 0.0
    %3163 = vmatprep.subr.mxu0 0.0
    %3164 = vmatpush1.msra.mxu0 0.0
    %3165 = vmatprep.subr.mxu0 0.0
    %3166 = vmatpush1.msra.mxu0 0.0
    %3167 = vmatprep.subr.mxu0 0.0
    %3168 = vmatpush1.msra.mxu0 0.0
    %3169 = vmatprep.subr.mxu0 0.0
    %3170 = vmatpush1.msra.mxu0 0.0
    %3171 = vmatprep.subr.mxu0 0.0
    %3172 = vmatpush1.msra.mxu0 0.0
    %3173 = vmatprep.subr.mxu0 0.0
    %3174 = vmatpush1.msra.mxu0 %v369
    %3175 = vmatprep.subr.mxu0 0.0
    %3176 = vmatpush2.msra.mxu0 0.0
    %3177 = vmatprep.subr.mxu0 0.0
    %3178 = vmatpush2.msra.mxu0 0.0
    %3179 = vmatprep.subr.mxu0 0.0
    %3180 = vmatpush2.msra.mxu0 0.0
    %3181 = vmatprep.subr.mxu0 0.0
    %3182 = vmatpush2.msra.mxu0 0.0
    %3183 = vmatprep.subr.mxu0 0.0
    %3184 = vmatpush2.msra.mxu0 0.0
    %3185 = vmatprep.subr.mxu0 0.0
    %3186 = vmatpush2.msra.mxu0 0.0
    %3187 = vmatprep.subr.mxu0 0.0
    %3188 = vmatpush2.msra.mxu0 0.0
    %3189 = vmatprep.subr.mxu0 0.0
    %3190 = vmatpush2.msra.mxu0 0.0
    %3191 = vmatprep.subr.mxu0 0.0
    %3192 = vmatpush2.msra.mxu0 0.0
    %3193 = vmatprep.subr.mxu0 0.0
    %3194 = vmatpush2.msra.mxu0 0.0
    %3195 = vmatprep.subr.mxu0 0.0
    %3196 = vmatpush2.msra.mxu0 0.0
    %3197 = vmatprep.subr.mxu0 0.0
    %3198 = vmatpush2.msra.mxu0 0.0
    %3199 = vmatprep.subr.mxu0 0.0
    %3200 = vmatpush2.msra.mxu0 0.0
    %3201 = vmatprep.subr.mxu0 0.0
    %3202 = vmatpush2.msra.mxu0 0.0
    %3203 = vmatprep.subr.mxu0 0.0
    %3204 = vmatpush2.msra.mxu0 0.0
    %3205 = vmatprep.subr.mxu0 0.0
    %3206 = vmatpush2.msra.mxu0 0.0
    %3207 = vmatprep.mubr.f32.mxu0 0.0
    %3208 = vmatmul.mubr.f32.gmra.mxu0 %v3141
    %v3209 = vpop.f32.mrf.mxu0
    %v3210 = vadd.f32 %v3137, %v3209
    %v3211 = vpop.f32.mrf.mxu0
    %3212 = vdwg.mxu0
    %v3213 = vadd.f32 %v3210, %v445
    %v3214 = vmul.f32 %v3213, 0.5
    %v3215 = vtanh.pop %v3214
    %v3216 = vmul.f32 %v3215, 0.5
    %v3217 = vadd.f32 %v3216, 0.5
    %v3218 = vtanh.pop %v3213
    %v3219 = vmul.f32 %v3217, %v2773
    %3221 = vrot.lane.b32.xlu0 %v3218, 64
    %v3222 = vpop.permute.xlu0 %3221
    %v3224 = vmul.f32 %v3217, %v3222
    %3226 = vrot.lane.b32.xlu0 %v3224, 32
    %v3227 = vpop.permute.xlu0 %3226
    %v3229 = vadd.f32 %v3219, %v3227
    %v3230 = vtanh.pop %v3229
    %3232 = vrot.lane.b32.xlu0 %v3230, 64
    %v3233 = vpop.permute.xlu0 %3232
    %v3235 = vmul.f32 %v3217, %v3233
    %3237 = vrot.lane.b32.xlu0 %v3235, 32
    %v3238 = vpop.permute.xlu0 %3237
    %3241 = vrot.lane.b32.xlu0 %v2883, 64
    %v3242 = vpop.permute.xlu0 %3241
    %v3244 = vsel %vm289, %v3238, %v3242
    %v3246 = vsel %vm489, %v3244, 0
    %3248 = vmatprep.subr.mxu0 0.0
    %3249 = vmatpush1.msra.mxu0 0.0
    %3250 = vmatprep.subr.mxu0 0.0
    %3251 = vmatpush1.msra.mxu0 0.0
    %3252 = vmatprep.subr.mxu0 0.0
    %3253 = vmatpush1.msra.mxu0 0.0
    %3254 = vmatprep.subr.mxu0 0.0
    %3255 = vmatpush1.msra.mxu0 0.0
    %3256 = vmatprep.subr.mxu0 0.0
    %3257 = vmatpush1.msra.mxu0 0.0
    %3258 = vmatprep.subr.mxu0 0.0
    %3259 = vmatpush1.msra.mxu0 0.0
    %3260 = vmatprep.subr.mxu0 0.0
    %3261 = vmatpush1.msra.mxu0 0.0
    %3262 = vmatprep.subr.mxu0 0.0
    %3263 = vmatpush1.msra.mxu0 0.0
    %3264 = vmatprep.subr.mxu0 0.0
    %3265 = vmatpush1.msra.mxu0 %v174
    %3266 = vmatprep.subr.mxu0 0.0
    %3267 = vmatpush1.msra.mxu0 %v173
    %3268 = vmatprep.subr.mxu0 0.0
    %3269 = vmatpush1.msra.mxu0 %v172
    %3270 = vmatprep.subr.mxu0 0.0
    %3271 = vmatpush1.msra.mxu0 %v171
    %3272 = vmatprep.subr.mxu0 0.0
    %3273 = vmatpush1.msra.mxu0 %v170
    %3274 = vmatprep.subr.mxu0 0.0
    %3275 = vmatpush1.msra.mxu0 %v169
    %3276 = vmatprep.subr.mxu0 0.0
    %3277 = vmatpush1.msra.mxu0 %v168
    %3278 = vmatprep.subr.mxu0 0.0
    %3279 = vmatpush1.msra.mxu0 %v167
    %3280 = vmatprep.subr.mxu0 0.0
    %3281 = vmatpush2.msra.mxu0 0.0
    %3282 = vmatprep.subr.mxu0 0.0
    %3283 = vmatpush2.msra.mxu0 0.0
    %3284 = vmatprep.subr.mxu0 0.0
    %3285 = vmatpush2.msra.mxu0 0.0
    %3286 = vmatprep.subr.mxu0 0.0
    %3287 = vmatpush2.msra.mxu0 0.0
    %3288 = vmatprep.subr.mxu0 0.0
    %3289 = vmatpush2.msra.mxu0 0.0
    %3290 = vmatprep.subr.mxu0 0.0
    %3291 = vmatpush2.msra.mxu0 0.0
    %3292 = vmatprep.subr.mxu0 0.0
    %3293 = vmatpush2.msra.mxu0 0.0
    %3294 = vmatprep.subr.mxu0 0.0
    %3295 = vmatpush2.msra.mxu0 0.0
    %3296 = vmatprep.subr.mxu0 0.0
    %3297 = vmatpush2.msra.mxu0 0.0
    %3298 = vmatprep.subr.mxu0 0.0
    %3299 = vmatpush2.msra.mxu0 0.0
    %3300 = vmatprep.subr.mxu0 0.0
    %3301 = vmatpush2.msra.mxu0 0.0
    %3302 = vmatprep.subr.mxu0 0.0
    %3303 = vmatpush2.msra.mxu0 0.0
    %3304 = vmatprep.subr.mxu0 0.0
    %3305 = vmatpush2.msra.mxu0 0.0
    %3306 = vmatprep.subr.mxu0 0.0
    %3307 = vmatpush2.msra.mxu0 0.0
    %3308 = vmatprep.subr.mxu0 0.0
    %3309 = vmatpush2.msra.mxu0 0.0
    %3310 = vmatprep.subr.mxu0 0.0
    %3311 = vmatpush2.msra.mxu0 0.0
    %3312 = vmatprep.mubr.f32.mxu0 0.0
    %3313 = vmatmul.mubr.f32.gmra.mxu0 %v3246
    %v3314 = vpop.f32.mrf.mxu0
    %v3315 = vadd.f32 %v487, %v3314
    %v3316 = vpop.f32.mrf.mxu0
    %3317 = vdwg.mxu0
    %v3318 = vmul.f32 %v3315, 0.5
    %v3319 = vtanh.pop %v3318
    %v3320 = vmul.f32 %v3319, 0.5
    %v3321 = vadd.f32 %v3320, 0.5
    %v3322 = vtanh.pop %v3315
    %v3323 = vmul.f32 %v3321, %v2877
    %3325 = vrot.lane.b32.xlu0 %v3322, 64
    %v3326 = vpop.permute.xlu0 %3325
    %v3328 = vmul.f32 %v3321, %v3326
    %3330 = vrot.lane.b32.xlu0 %v3328, 32
    %v3331 = vpop.permute.xlu0 %3330
    %v3333 = vadd.f32 %v3323, %v3331
    %v3334 = vtanh.pop %v3333
    %3336 = vrot.lane.b32.xlu0 %v3334, 64
    %v3337 = vpop.permute.xlu0 %3336
    %v3339 = vmul.f32 %v3321, %v3337
    %v3340 = vadd.f32 %v3339, %v591
    %3342 = vrot.lane.b32.xlu0 %v3340, 32
    %v3343 = vpop.permute.xlu0 %3342
    %v3344 = vsel %vm289, %v3343, 0
    %3346 = vmatprep.subr.mxu0 0.0
    %3347 = vmatpush1.msra.mxu0 0.0
    %3348 = vmatprep.subr.mxu0 0.0
    %3349 = vmatpush1.msra.mxu0 0.0
    %3350 = vmatprep.subr.mxu0 0.0
    %3351 = vmatpush1.msra.mxu0 0.0
    %3352 = vmatprep.subr.mxu0 0.0
    %3353 = vmatpush1.msra.mxu0 0.0
    %3354 = vmatprep.subr.mxu0 0.0
    %3355 = vmatpush1.msra.mxu0 0.0
    %3356 = vmatprep.subr.mxu0 0.0
    %3357 = vmatpush1.msra.mxu0 0.0
    %3358 = vmatprep.subr.mxu0 0.0
    %3359 = vmatpush1.msra.mxu0 0.0
    %3360 = vmatprep.subr.mxu0 0.0
    %3361 = vmatpush1.msra.mxu0 0.0
    %3362 = vmatprep.subr.mxu0 0.0
    %3363 = vmatpush1.msra.mxu0 0.0
    %3364 = vmatprep.subr.mxu0 0.0
    %3365 = vmatpush1.msra.mxu0 0.0
    %3366 = vmatprep.subr.mxu0 0.0
    %3367 = vmatpush1.msra.mxu0 0.0
    %3368 = vmatprep.subr.mxu0 0.0
    %3369 = vmatpush1.msra.mxu0 0.0
    %3370 = vmatprep.subr.mxu0 0.0
    %3371 = vmatpush1.msra.mxu0 %v181
    %3372 = vmatprep.subr.mxu0 0.0
    %3373 = vmatpush1.msra.mxu0 %v180
    %3374 = vmatprep.subr.mxu0 0.0
    %3375 = vmatpush1.msra.mxu0 %v179
    %3376 = vmatprep.subr.mxu0 0.0
    %3377 = vmatpush1.msra.mxu0 %v178
    %3378 = vmatprep.subr.mxu0 0.0
    %3379 = vmatpush2.msra.mxu0 0.0
    %3380 = vmatprep.subr.mxu0 0.0
    %3381 = vmatpush2.msra.mxu0 0.0
    %3382 = vmatprep.subr.mxu0 0.0
    %3383 = vmatpush2.msra.mxu0 0.0
    %3384 = vmatprep.subr.mxu0 0.0
    %3385 = vmatpush2.msra.mxu0 0.0
    %3386 = vmatprep.subr.mxu0 0.0
    %3387 = vmatpush2.msra.mxu0 0.0
    %3388 = vmatprep.subr.mxu0 0.0
    %3389 = vmatpush2.msra.mxu0 0.0
    %3390 = vmatprep.subr.mxu0 0.0
    %3391 = vmatpush2.msra.mxu0 0.0
    %3392 = vmatprep.subr.mxu0 0.0
    %3393 = vmatpush2.msra.mxu0 0.0
    %3394 = vmatprep.subr.mxu0 0.0
    %3395 = vmatpush2.msra.mxu0 0.0
    %3396 = vmatprep.subr.mxu0 0.0
    %3397 = vmatpush2.msra.mxu0 0.0
    %3398 = vmatprep.subr.mxu0 0.0
    %3399 = vmatpush2.msra.mxu0 0.0
    %3400 = vmatprep.subr.mxu0 0.0
    %3401 = vmatpush2.msra.mxu0 0.0
    %3402 = vmatprep.subr.mxu0 0.0
    %3403 = vmatpush2.msra.mxu0 0.0
    %3404 = vmatprep.subr.mxu0 0.0
    %3405 = vmatpush2.msra.mxu0 0.0
    %3406 = vmatprep.subr.mxu0 0.0
    %3407 = vmatpush2.msra.mxu0 0.0
    %3408 = vmatprep.subr.mxu0 0.0
    %3409 = vmatpush2.msra.mxu0 0.0
    %3410 = vmatprep.mubr.f32.mxu0 0.0
    %3411 = vmatmul.mubr.f32.gmra.mxu0 %v3344
    %v3412 = vpop.f32.mrf.mxu0
    %v3413 = vadd.f32 %v598, %v3412
    %v3414 = vpop.f32.mrf.mxu0
    %3415 = vdwg.mxu0
    %vm3416 = vcmp.gt.f32.partialorder %v3413, 0.0
    %v3417 = vmul.f32 %v3413, 0.01
    %v3418 = vsel %vm3416, %v3413, %v3417
    %v3420 = vsel %vm289, %v3418, 0
    %3422 = vmatprep.subr.mxu0 0.0
    %3423 = vmatpush1.msra.mxu0 0.0
    %3424 = vmatprep.subr.mxu0 0.0
    %3425 = vmatpush1.msra.mxu0 0.0
    %3426 = vmatprep.subr.mxu0 0.0
    %3427 = vmatpush1.msra.mxu0 0.0
    %3428 = vmatprep.subr.mxu0 0.0
    %3429 = vmatpush1.msra.mxu0 0.0
    %3430 = vmatprep.subr.mxu0 0.0
    %3431 = vmatpush1.msra.mxu0 0.0
    %3432 = vmatprep.subr.mxu0 0.0
    %3433 = vmatpush1.msra.mxu0 0.0
    %3434 = vmatprep.subr.mxu0 0.0
    %3435 = vmatpush1.msra.mxu0 0.0
    %3436 = vmatprep.subr.mxu0 0.0
    %3437 = vmatpush1.msra.mxu0 0.0
    %3438 = vmatprep.subr.mxu0 0.0
    %3439 = vmatpush1.msra.mxu0 0.0
    %3440 = vmatprep.subr.mxu0 0.0
    %3441 = vmatpush1.msra.mxu0 0.0
    %3442 = vmatprep.subr.mxu0 0.0
    %3443 = vmatpush1.msra.mxu0 0.0
    %3444 = vmatprep.subr.mxu0 0.0
    %3445 = vmatpush1.msra.mxu0 0.0
    %3446 = vmatprep.subr.mxu0 0.0
    %3447 = vmatpush1.msra.mxu0 %v186
    %3448 = vmatprep.subr.mxu0 0.0
    %3449 = vmatpush1.msra.mxu0 %v185
    %3450 = vmatprep.subr.mxu0 0.0
    %3451 = vmatpush1.msra.mxu0 %v184
    %3452 = vmatprep.subr.mxu0 0.0
    %3453 = vmatpush1.msra.mxu0 %v183
    %3454 = vmatprep.subr.mxu0 0.0
    %3455 = vmatpush2.msra.mxu0 0.0
    %3456 = vmatprep.subr.mxu0 0.0
    %3457 = vmatpush2.msra.mxu0 0.0
    %3458 = vmatprep.subr.mxu0 0.0
    %3459 = vmatpush2.msra.mxu0 0.0
    %3460 = vmatprep.subr.mxu0 0.0
    %3461 = vmatpush2.msra.mxu0 0.0
    %3462 = vmatprep.subr.mxu0 0.0
    %3463 = vmatpush2.msra.mxu0 0.0
    %3464 = vmatprep.subr.mxu0 0.0
    %3465 = vmatpush2.msra.mxu0 0.0
    %3466 = vmatprep.subr.mxu0 0.0
    %3467 = vmatpush2.msra.mxu0 0.0
    %3468 = vmatprep.subr.mxu0 0.0
    %3469 = vmatpush2.msra.mxu0 0.0
    %3470 = vmatprep.subr.mxu0 0.0
    %3471 = vmatpush2.msra.mxu0 0.0
    %3472 = vmatprep.subr.mxu0 0.0
    %3473 = vmatpush2.msra.mxu0 0.0
    %3474 = vmatprep.subr.mxu0 0.0
    %3475 = vmatpush2.msra.mxu0 0.0
    %3476 = vmatprep.subr.mxu0 0.0
    %3477 = vmatpush2.msra.mxu0 0.0
    %3478 = vmatprep.subr.mxu0 0.0
    %3479 = vmatpush2.msra.mxu0 0.0
    %3480 = vmatprep.subr.mxu0 0.0
    %3481 = vmatpush2.msra.mxu0 0.0
    %3482 = vmatprep.subr.mxu0 0.0
    %3483 = vmatpush2.msra.mxu0 0.0
    %3484 = vmatprep.subr.mxu0 0.0
    %3485 = vmatpush2.msra.mxu0 0.0
    %3486 = vmatprep.mubr.f32.mxu0 0.0
    %3487 = vmatmul.mubr.f32.gmra.mxu0 %v3420
    %v3488 = vpop.f32.mrf.mxu0
    %v3489 = vadd.f32 %v682, %v3488
    %v3490 = vpop.f32.mrf.mxu0
    %3491 = vdwg.mxu0
    %s3492 = scalar_lea.vmem [#allocation17], 48
    %3493 = vst [vmem:[%s3492] sm:$0xff] %v3489
    %v3494 = vsel %vm278, %v3489, -inf
    %3495 = vmax.xlane.f32.xlu0 %v3494
    %v3496 = vpop.xlane.xlu0 %3495
    %vm3497 = vcmp.eq.f32.partialorder %v3494, %v3496
    %v3498 = vsel %vm3497, %v276, 128
    %v3499 = vand.u32 %v3498, 65535
    %v3500 = vshra.s32 %v3498, 16
    %v3501 = vcvt.s32.f32 %v3499
    %v3502 = vcvt.s32.f32 %v3500
    %3503 = vmin.xlane.f32.xlu0 %v3502
    %v3504 = vpop.xlane.xlu0 %3503
    %vm3505 = vcmp.eq.f32.partialorder %v3502, %v3504
    %v3506 = vsel %vm3505, %v3501, inf
    %3507 = vmin.xlane.f32.xlu0 %v3506
    %v3508 = vpop.xlane.xlu0 %3507
    %v3509 = vcvt.f32.s32 %v3508
    %v3510 = vcvt.f32.s32 %v3504
    %v3511 = vshll.u32 %v3510, 16
    %v3512 = vadd.s32 %v3511, %v3509
    %v3513 = vsel %vm277, %v3489, 0.0
    %3514 = vadd.xlane.f32.xlu0 %v3513
    %v3515 = vpop.xlane.xlu0 %3514
    %v3516 = vmul.f32 %v3515, 0.5
    %v3517 = vtanh.pop %v3516
    %v3518 = vmul.f32 %v3517, 0.5
    %v3519 = vadd.f32 %v3518, 0.5
    %vm3520 = vcmp.eq.s32.totalorder %v276, %v3512
    %v3521 = vsel %vm3520, 1, 0
    %v3522 = vcvt.s32.f32 %v3521
    %v3523 = vsel %vm277, %v3519, %v3522
    %v3524 = vsel %vm289, %v3238, 0
    %3526 = vmatprep.subr.mxu0 0.0
    %3527 = vmatpush1.msra.mxu0 0.0
    %3528 = vmatprep.subr.mxu0 0.0
    %3529 = vmatpush1.msra.mxu0 0.0
    %3530 = vmatprep.subr.mxu0 0.0
    %3531 = vmatpush1.msra.mxu0 0.0
    %3532 = vmatprep.subr.mxu0 0.0
    %3533 = vmatpush1.msra.mxu0 0.0
    %3534 = vmatprep.subr.mxu0 0.0
    %3535 = vmatpush1.msra.mxu0 0.0
    %3536 = vmatprep.subr.mxu0 0.0
    %3537 = vmatpush1.msra.mxu0 0.0
    %3538 = vmatprep.subr.mxu0 0.0
    %3539 = vmatpush1.msra.mxu0 0.0
    %3540 = vmatprep.subr.mxu0 0.0
    %3541 = vmatpush1.msra.mxu0 0.0
    %3542 = vmatprep.subr.mxu0 0.0
    %3543 = vmatpush1.msra.mxu0 0.0
    %3544 = vmatprep.subr.mxu0 0.0
    %3545 = vmatpush1.msra.mxu0 0.0
    %3546 = vmatprep.subr.mxu0 0.0
    %3547 = vmatpush1.msra.mxu0 0.0
    %3548 = vmatprep.subr.mxu0 0.0
    %3549 = vmatpush1.msra.mxu0 0.0
    %3550 = vmatprep.subr.mxu0 0.0
    %3551 = vmatpush1.msra.mxu0 %v165
    %3552 = vmatprep.subr.mxu0 0.0
    %3553 = vmatpush1.msra.mxu0 %v164
    %3554 = vmatprep.subr.mxu0 0.0
    %3555 = vmatpush1.msra.mxu0 %v163
    %3556 = vmatprep.subr.mxu0 0.0
    %3557 = vmatpush1.msra.mxu0 %v162
    %3558 = vmatprep.subr.mxu0 0.0
    %3559 = vmatpush2.msra.mxu0 0.0
    %3560 = vmatprep.subr.mxu0 0.0
    %3561 = vmatpush2.msra.mxu0 0.0
    %3562 = vmatprep.subr.mxu0 0.0
    %3563 = vmatpush2.msra.mxu0 0.0
    %3564 = vmatprep.subr.mxu0 0.0
    %3565 = vmatpush2.msra.mxu0 0.0
    %3566 = vmatprep.subr.mxu0 0.0
    %3567 = vmatpush2.msra.mxu0 0.0
    %3568 = vmatprep.subr.mxu0 0.0
    %3569 = vmatpush2.msra.mxu0 0.0
    %3570 = vmatprep.subr.mxu0 0.0
    %3571 = vmatpush2.msra.mxu0 0.0
    %3572 = vmatprep.subr.mxu0 0.0
    %3573 = vmatpush2.msra.mxu0 0.0
    %3574 = vmatprep.subr.mxu0 0.0
    %3575 = vmatpush2.msra.mxu0 0.0
    %3576 = vmatprep.subr.mxu0 0.0
    %3577 = vmatpush2.msra.mxu0 0.0
    %3578 = vmatprep.subr.mxu0 0.0
    %3579 = vmatpush2.msra.mxu0 0.0
    %3580 = vmatprep.subr.mxu0 0.0
    %3581 = vmatpush2.msra.mxu0 0.0
    %3582 = vmatprep.subr.mxu0 0.0
    %3583 = vmatpush2.msra.mxu0 0.0
    %3584 = vmatprep.subr.mxu0 0.0
    %3585 = vmatpush2.msra.mxu0 0.0
    %3586 = vmatprep.subr.mxu0 0.0
    %3587 = vmatpush2.msra.mxu0 0.0
    %3588 = vmatprep.subr.mxu0 0.0
    %3589 = vmatpush2.msra.mxu0 0.0
    %3590 = vmatprep.mubr.f32.mxu0 0.0
    %3591 = vmatmul.mubr.f32.gmra.mxu0 %v3524
    %v3592 = vpop.f32.mrf.mxu0
    %v3593 = vadd.f32 0.0, %v3592
    %v3594 = vpop.f32.mrf.mxu0
    %3595 = vdwg.mxu0
    %v3597 = vsel %vm363, %v3523, 0
    %3599 = vmatprep.subr.mxu0 0.0
    %3600 = vmatpush1.msra.mxu0 0.0
    %3601 = vmatprep.subr.mxu0 0.0
    %3602 = vmatpush1.msra.mxu0 0.0
    %3603 = vmatprep.subr.mxu0 0.0
    %3604 = vmatpush1.msra.mxu0 0.0
    %3605 = vmatprep.subr.mxu0 0.0
    %3606 = vmatpush1.msra.mxu0 0.0
    %3607 = vmatprep.subr.mxu0 0.0
    %3608 = vmatpush1.msra.mxu0 0.0
    %3609 = vmatprep.subr.mxu0 0.0
    %3610 = vmatpush1.msra.mxu0 0.0
    %3611 = vmatprep.subr.mxu0 0.0
    %3612 = vmatpush1.msra.mxu0 0.0
    %3613 = vmatprep.subr.mxu0 0.0
    %3614 = vmatpush1.msra.mxu0 0.0
    %3615 = vmatprep.subr.mxu0 0.0
    %3616 = vmatpush1.msra.mxu0 0.0
    %3617 = vmatprep.subr.mxu0 0.0
    %3618 = vmatpush1.msra.mxu0 0.0
    %3619 = vmatprep.subr.mxu0 0.0
    %3620 = vmatpush1.msra.mxu0 0.0
    %3621 = vmatprep.subr.mxu0 0.0
    %3622 = vmatpush1.msra.mxu0 0.0
    %3623 = vmatprep.subr.mxu0 0.0
    %3624 = vmatpush1.msra.mxu0 0.0
    %3625 = vmatprep.subr.mxu0 0.0
    %3626 = vmatpush1.msra.mxu0 0.0
    %3627 = vmatprep.subr.mxu0 0.0
    %3628 = vmatpush1.msra.mxu0 0.0
    %3629 = vmatprep.subr.mxu0 0.0
    %3630 = vmatpush1.msra.mxu0 %v369
    %3631 = vmatprep.subr.mxu0 0.0
    %3632 = vmatpush2.msra.mxu0 0.0
    %3633 = vmatprep.subr.mxu0 0.0
    %3634 = vmatpush2.msra.mxu0 0.0
    %3635 = vmatprep.subr.mxu0 0.0
    %3636 = vmatpush2.msra.mxu0 0.0
    %3637 = vmatprep.subr.mxu0 0.0
    %3638 = vmatpush2.msra.mxu0 0.0
    %3639 = vmatprep.subr.mxu0 0.0
    %3640 = vmatpush2.msra.mxu0 0.0
    %3641 = vmatprep.subr.mxu0 0.0
    %3642 = vmatpush2.msra.mxu0 0.0
    %3643 = vmatprep.subr.mxu0 0.0
    %3644 = vmatpush2.msra.mxu0 0.0
    %3645 = vmatprep.subr.mxu0 0.0
    %3646 = vmatpush2.msra.mxu0 0.0
    %3647 = vmatprep.subr.mxu0 0.0
    %3648 = vmatpush2.msra.mxu0 0.0
    %3649 = vmatprep.subr.mxu0 0.0
    %3650 = vmatpush2.msra.mxu0 0.0
    %3651 = vmatprep.subr.mxu0 0.0
    %3652 = vmatpush2.msra.mxu0 0.0
    %3653 = vmatprep.subr.mxu0 0.0
    %3654 = vmatpush2.msra.mxu0 0.0
    %3655 = vmatprep.subr.mxu0 0.0
    %3656 = vmatpush2.msra.mxu0 0.0
    %3657 = vmatprep.subr.mxu0 0.0
    %3658 = vmatpush2.msra.mxu0 0.0
    %3659 = vmatprep.subr.mxu0 0.0
    %3660 = vmatpush2.msra.mxu0 0.0
    %3661 = vmatprep.subr.mxu0 0.0
    %3662 = vmatpush2.msra.mxu0 0.0
    %3663 = vmatprep.mubr.f32.mxu0 0.0
    %3664 = vmatmul.mubr.f32.gmra.mxu0 %v3597
    %v3665 = vpop.f32.mrf.mxu0
    %v3666 = vadd.f32 %v3593, %v3665
    %v3667 = vpop.f32.mrf.mxu0
    %3668 = vdwg.mxu0
    %v3669 = vadd.f32 %v3666, %v445
    %v3670 = vmul.f32 %v3669, 0.5
    %v3671 = vtanh.pop %v3670
    %v3672 = vmul.f32 %v3671, 0.5
    %v3673 = vadd.f32 %v3672, 0.5
    %v3674 = vtanh.pop %v3669
    %v3675 = vmul.f32 %v3673, %v3229
    %3677 = vrot.lane.b32.xlu0 %v3674, 64
    %v3678 = vpop.permute.xlu0 %3677
    %v3680 = vmul.f32 %v3673, %v3678
    %3682 = vrot.lane.b32.xlu0 %v3680, 32
    %v3683 = vpop.permute.xlu0 %3682
    %v3685 = vadd.f32 %v3675, %v3683
    %v3686 = vtanh.pop %v3685
    %3688 = vrot.lane.b32.xlu0 %v3686, 64
    %v3689 = vpop.permute.xlu0 %3688
    %v3691 = vmul.f32 %v3673, %v3689
    %3693 = vrot.lane.b32.xlu0 %v3691, 32
    %v3694 = vpop.permute.xlu0 %3693
    %3697 = vrot.lane.b32.xlu0 %v3339, 64
    %v3698 = vpop.permute.xlu0 %3697
    %v3700 = vsel %vm289, %v3694, %v3698
    %v3702 = vsel %vm489, %v3700, 0
    %3704 = vmatprep.subr.mxu0 0.0
    %3705 = vmatpush1.msra.mxu0 0.0
    %3706 = vmatprep.subr.mxu0 0.0
    %3707 = vmatpush1.msra.mxu0 0.0
    %3708 = vmatprep.subr.mxu0 0.0
    %3709 = vmatpush1.msra.mxu0 0.0
    %3710 = vmatprep.subr.mxu0 0.0
    %3711 = vmatpush1.msra.mxu0 0.0
    %3712 = vmatprep.subr.mxu0 0.0
    %3713 = vmatpush1.msra.mxu0 0.0
    %3714 = vmatprep.subr.mxu0 0.0
    %3715 = vmatpush1.msra.mxu0 0.0
    %3716 = vmatprep.subr.mxu0 0.0
    %3717 = vmatpush1.msra.mxu0 0.0
    %3718 = vmatprep.subr.mxu0 0.0
    %3719 = vmatpush1.msra.mxu0 0.0
    %3720 = vmatprep.subr.mxu0 0.0
    %3721 = vmatpush1.msra.mxu0 %v174
    %3722 = vmatprep.subr.mxu0 0.0
    %3723 = vmatpush1.msra.mxu0 %v173
    %3724 = vmatprep.subr.mxu0 0.0
    %3725 = vmatpush1.msra.mxu0 %v172
    %3726 = vmatprep.subr.mxu0 0.0
    %3727 = vmatpush1.msra.mxu0 %v171
    %3728 = vmatprep.subr.mxu0 0.0
    %3729 = vmatpush1.msra.mxu0 %v170
    %3730 = vmatprep.subr.mxu0 0.0
    %3731 = vmatpush1.msra.mxu0 %v169
    %3732 = vmatprep.subr.mxu0 0.0
    %3733 = vmatpush1.msra.mxu0 %v168
    %3734 = vmatprep.subr.mxu0 0.0
    %3735 = vmatpush1.msra.mxu0 %v167
    %3736 = vmatprep.subr.mxu0 0.0
    %3737 = vmatpush2.msra.mxu0 0.0
    %3738 = vmatprep.subr.mxu0 0.0
    %3739 = vmatpush2.msra.mxu0 0.0
    %3740 = vmatprep.subr.mxu0 0.0
    %3741 = vmatpush2.msra.mxu0 0.0
    %3742 = vmatprep.subr.mxu0 0.0
    %3743 = vmatpush2.msra.mxu0 0.0
    %3744 = vmatprep.subr.mxu0 0.0
    %3745 = vmatpush2.msra.mxu0 0.0
    %3746 = vmatprep.subr.mxu0 0.0
    %3747 = vmatpush2.msra.mxu0 0.0
    %3748 = vmatprep.subr.mxu0 0.0
    %3749 = vmatpush2.msra.mxu0 0.0
    %3750 = vmatprep.subr.mxu0 0.0
    %3751 = vmatpush2.msra.mxu0 0.0
    %3752 = vmatprep.subr.mxu0 0.0
    %3753 = vmatpush2.msra.mxu0 0.0
    %3754 = vmatprep.subr.mxu0 0.0
    %3755 = vmatpush2.msra.mxu0 0.0
    %3756 = vmatprep.subr.mxu0 0.0
    %3757 = vmatpush2.msra.mxu0 0.0
    %3758 = vmatprep.subr.mxu0 0.0
    %3759 = vmatpush2.msra.mxu0 0.0
    %3760 = vmatprep.subr.mxu0 0.0
    %3761 = vmatpush2.msra.mxu0 0.0
    %3762 = vmatprep.subr.mxu0 0.0
    %3763 = vmatpush2.msra.mxu0 0.0
    %3764 = vmatprep.subr.mxu0 0.0
    %3765 = vmatpush2.msra.mxu0 0.0
    %3766 = vmatprep.subr.mxu0 0.0
    %3767 = vmatpush2.msra.mxu0 0.0
    %3768 = vmatprep.mubr.f32.mxu0 0.0
    %3769 = vmatmul.mubr.f32.gmra.mxu0 %v3702
    %v3770 = vpop.f32.mrf.mxu0
    %v3771 = vadd.f32 %v487, %v3770
    %v3772 = vpop.f32.mrf.mxu0
    %3773 = vdwg.mxu0
    %v3774 = vmul.f32 %v3771, 0.5
    %v3775 = vtanh.pop %v3774
    %v3776 = vmul.f32 %v3775, 0.5
    %v3777 = vadd.f32 %v3776, 0.5
    %v3778 = vtanh.pop %v3771
    %v3779 = vmul.f32 %v3777, %v3333
    %3781 = vrot.lane.b32.xlu0 %v3778, 64
    %v3782 = vpop.permute.xlu0 %3781
    %v3784 = vmul.f32 %v3777, %v3782
    %3786 = vrot.lane.b32.xlu0 %v3784, 32
    %v3787 = vpop.permute.xlu0 %3786
    %v3789 = vadd.f32 %v3779, %v3787
    %v3790 = vtanh.pop %v3789
    %3792 = vrot.lane.b32.xlu0 %v3790, 64
    %v3793 = vpop.permute.xlu0 %3792
    %v3795 = vmul.f32 %v3777, %v3793
    %v3796 = vadd.f32 %v3795, %v591
    %3798 = vrot.lane.b32.xlu0 %v3796, 32
    %v3799 = vpop.permute.xlu0 %3798
    %v3800 = vsel %vm289, %v3799, 0
    %3802 = vmatprep.subr.mxu0 0.0
    %3803 = vmatpush1.msra.mxu0 0.0
    %3804 = vmatprep.subr.mxu0 0.0
    %3805 = vmatpush1.msra.mxu0 0.0
    %3806 = vmatprep.subr.mxu0 0.0
    %3807 = vmatpush1.msra.mxu0 0.0
    %3808 = vmatprep.subr.mxu0 0.0
    %3809 = vmatpush1.msra.mxu0 0.0
    %3810 = vmatprep.subr.mxu0 0.0
    %3811 = vmatpush1.msra.mxu0 0.0
    %3812 = vmatprep.subr.mxu0 0.0
    %3813 = vmatpush1.msra.mxu0 0.0
    %3814 = vmatprep.subr.mxu0 0.0
    %3815 = vmatpush1.msra.mxu0 0.0
    %3816 = vmatprep.subr.mxu0 0.0
    %3817 = vmatpush1.msra.mxu0 0.0
    %3818 = vmatprep.subr.mxu0 0.0
    %3819 = vmatpush1.msra.mxu0 0.0
    %3820 = vmatprep.subr.mxu0 0.0
    %3821 = vmatpush1.msra.mxu0 0.0
    %3822 = vmatprep.subr.mxu0 0.0
    %3823 = vmatpush1.msra.mxu0 0.0
    %3824 = vmatprep.subr.mxu0 0.0
    %3825 = vmatpush1.msra.mxu0 0.0
    %3826 = vmatprep.subr.mxu0 0.0
    %3827 = vmatpush1.msra.mxu0 %v181
    %3828 = vmatprep.subr.mxu0 0.0
    %3829 = vmatpush1.msra.mxu0 %v180
    %3830 = vmatprep.subr.mxu0 0.0
    %3831 = vmatpush1.msra.mxu0 %v179
    %3832 = vmatprep.subr.mxu0 0.0
    %3833 = vmatpush1.msra.mxu0 %v178
    %3834 = vmatprep.subr.mxu0 0.0
    %3835 = vmatpush2.msra.mxu0 0.0
    %3836 = vmatprep.subr.mxu0 0.0
    %3837 = vmatpush2.msra.mxu0 0.0
    %3838 = vmatprep.subr.mxu0 0.0
    %3839 = vmatpush2.msra.mxu0 0.0
    %3840 = vmatprep.subr.mxu0 0.0
    %3841 = vmatpush2.msra.mxu0 0.0
    %3842 = vmatprep.subr.mxu0 0.0
    %3843 = vmatpush2.msra.mxu0 0.0
    %3844 = vmatprep.subr.mxu0 0.0
    %3845 = vmatpush2.msra.mxu0 0.0
    %3846 = vmatprep.subr.mxu0 0.0
    %3847 = vmatpush2.msra.mxu0 0.0
    %3848 = vmatprep.subr.mxu0 0.0
    %3849 = vmatpush2.msra.mxu0 0.0
    %3850 = vmatprep.subr.mxu0 0.0
    %3851 = vmatpush2.msra.mxu0 0.0
    %3852 = vmatprep.subr.mxu0 0.0
    %3853 = vmatpush2.msra.mxu0 0.0
    %3854 = vmatprep.subr.mxu0 0.0
    %3855 = vmatpush2.msra.mxu0 0.0
    %3856 = vmatprep.subr.mxu0 0.0
    %3857 = vmatpush2.msra.mxu0 0.0
    %3858 = vmatprep.subr.mxu0 0.0
    %3859 = vmatpush2.msra.mxu0 0.0
    %3860 = vmatprep.subr.mxu0 0.0
    %3861 = vmatpush2.msra.mxu0 0.0
    %3862 = vmatprep.subr.mxu0 0.0
    %3863 = vmatpush2.msra.mxu0 0.0
    %3864 = vmatprep.subr.mxu0 0.0
    %3865 = vmatpush2.msra.mxu0 0.0
    %3866 = vmatprep.mubr.f32.mxu0 0.0
    %3867 = vmatmul.mubr.f32.gmra.mxu0 %v3800
    %v3868 = vpop.f32.mrf.mxu0
    %v3869 = vadd.f32 %v598, %v3868
    %v3870 = vpop.f32.mrf.mxu0
    %3871 = vdwg.mxu0
    %vm3872 = vcmp.gt.f32.partialorder %v3869, 0.0
    %v3873 = vmul.f32 %v3869, 0.01
    %v3874 = vsel %vm3872, %v3869, %v3873
    %v3876 = vsel %vm289, %v3874, 0
    %3878 = vmatprep.subr.mxu0 0.0
    %3879 = vmatpush1.msra.mxu0 0.0
    %3880 = vmatprep.subr.mxu0 0.0
    %3881 = vmatpush1.msra.mxu0 0.0
    %3882 = vmatprep.subr.mxu0 0.0
    %3883 = vmatpush1.msra.mxu0 0.0
    %3884 = vmatprep.subr.mxu0 0.0
    %3885 = vmatpush1.msra.mxu0 0.0
    %3886 = vmatprep.subr.mxu0 0.0
    %3887 = vmatpush1.msra.mxu0 0.0
    %3888 = vmatprep.subr.mxu0 0.0
    %3889 = vmatpush1.msra.mxu0 0.0
    %3890 = vmatprep.subr.mxu0 0.0
    %3891 = vmatpush1.msra.mxu0 0.0
    %3892 = vmatprep.subr.mxu0 0.0
    %3893 = vmatpush1.msra.mxu0 0.0
    %3894 = vmatprep.subr.mxu0 0.0
    %3895 = vmatpush1.msra.mxu0 0.0
    %3896 = vmatprep.subr.mxu0 0.0
    %3897 = vmatpush1.msra.mxu0 0.0
    %3898 = vmatprep.subr.mxu0 0.0
    %3899 = vmatpush1.msra.mxu0 0.0
    %3900 = vmatprep.subr.mxu0 0.0
    %3901 = vmatpush1.msra.mxu0 0.0
    %3902 = vmatprep.subr.mxu0 0.0
    %3903 = vmatpush1.msra.mxu0 %v186
    %3904 = vmatprep.subr.mxu0 0.0
    %3905 = vmatpush1.msra.mxu0 %v185
    %3906 = vmatprep.subr.mxu0 0.0
    %3907 = vmatpush1.msra.mxu0 %v184
    %3908 = vmatprep.subr.mxu0 0.0
    %3909 = vmatpush1.msra.mxu0 %v183
    %3910 = vmatprep.subr.mxu0 0.0
    %3911 = vmatpush2.msra.mxu0 0.0
    %3912 = vmatprep.subr.mxu0 0.0
    %3913 = vmatpush2.msra.mxu0 0.0
    %3914 = vmatprep.subr.mxu0 0.0
    %3915 = vmatpush2.msra.mxu0 0.0
    %3916 = vmatprep.subr.mxu0 0.0
    %3917 = vmatpush2.msra.mxu0 0.0
    %3918 = vmatprep.subr.mxu0 0.0
    %3919 = vmatpush2.msra.mxu0 0.0
    %3920 = vmatprep.subr.mxu0 0.0
    %3921 = vmatpush2.msra.mxu0 0.0
    %3922 = vmatprep.subr.mxu0 0.0
    %3923 = vmatpush2.msra.mxu0 0.0
    %3924 = vmatprep.subr.mxu0 0.0
    %3925 = vmatpush2.msra.mxu0 0.0
    %3926 = vmatprep.subr.mxu0 0.0
    %3927 = vmatpush2.msra.mxu0 0.0
    %3928 = vmatprep.subr.mxu0 0.0
    %3929 = vmatpush2.msra.mxu0 0.0
    %3930 = vmatprep.subr.mxu0 0.0
    %3931 = vmatpush2.msra.mxu0 0.0
    %3932 = vmatprep.subr.mxu0 0.0
    %3933 = vmatpush2.msra.mxu0 0.0
    %3934 = vmatprep.subr.mxu0 0.0
    %3935 = vmatpush2.msra.mxu0 0.0
    %3936 = vmatprep.subr.mxu0 0.0
    %3937 = vmatpush2.msra.mxu0 0.0
    %3938 = vmatprep.subr.mxu0 0.0
    %3939 = vmatpush2.msra.mxu0 0.0
    %3940 = vmatprep.subr.mxu0 0.0
    %3941 = vmatpush2.msra.mxu0 0.0
    %3942 = vmatprep.mubr.f32.mxu0 0.0
    %3943 = vmatmul.mubr.f32.gmra.mxu0 %v3876
    %v3944 = vpop.f32.mrf.mxu0
    %v3945 = vadd.f32 %v682, %v3944
    %v3946 = vpop.f32.mrf.mxu0
    %3947 = vdwg.mxu0
    %s3948 = scalar_lea.vmem [#allocation17], 56
    %3949 = vst [vmem:[%s3948] sm:$0xff] %v3945
    %v3950 = vld [vmem:[#allocation17] sm:$0xff]
    %v3951 = vld [vmem:[#allocation17 + $0x8] sm:$0xff]
    %v3952 = vld [vmem:[#allocation17 + $0x10] sm:$0xff]
    %v3953 = vld [vmem:[#allocation17 + $0x18] sm:$0xff]
    %v3954 = vld [vmem:[#allocation17 + $0x20] sm:$0xff]
    %v3955 = vld [vmem:[#allocation17 + $0x28] sm:$0xff]
    %v3956 = vld [vmem:[#allocation17 + $0x30] sm:$0xff]
    %v3957 = vld [vmem:[#allocation17 + $0x38] sm:$0xff]
    %v3958 = vsel %vm278, 1, 0
    %vm3959 = vcmp.eq.s32.totalorder %v3958, 1
    %v3960 = vsel %vm3959, %v3950, -inf
    %v3961 = vsel %vm3959, %v3951, -inf
    %v3962 = vsel %vm3959, %v3952, -inf
    %v3963 = vsel %vm3959, %v3953, -inf
    %v3964 = vsel %vm3959, %v3954, -inf
    %v3965 = vsel %vm3959, %v3955, -inf
    %v3966 = vsel %vm3959, %v3956, -inf
    %v3967 = vsel %vm3959, %v3957, -inf
    %3968 = vmax.xlane.f32.xlu0 %v3960
    %v3969 = vpop.xlane.xlu0 %3968
    %3970 = vmax.xlane.f32.xlu0 %v3961
    %v3971 = vpop.xlane.xlu0 %3970
    %3972 = vmax.xlane.f32.xlu0 %v3962
    %v3973 = vpop.xlane.xlu0 %3972
    %3974 = vmax.xlane.f32.xlu0 %v3963
    %v3975 = vpop.xlane.xlu0 %3974
    %3976 = vmax.xlane.f32.xlu0 %v3964
    %v3977 = vpop.xlane.xlu0 %3976
    %3978 = vmax.xlane.f32.xlu0 %v3965
    %v3979 = vpop.xlane.xlu0 %3978
    %3980 = vmax.xlane.f32.xlu0 %v3966
    %v3981 = vpop.xlane.xlu0 %3980
    %3982 = vmax.xlane.f32.xlu0 %v3967
    %v3983 = vpop.xlane.xlu0 %3982
    %v3984 = vsub.f32 %v3960, %v3969
    %v3985 = vsub.f32 %v3961, %v3971
    %v3986 = vsub.f32 %v3962, %v3973
    %v3987 = vsub.f32 %v3963, %v3975
    %v3988 = vsub.f32 %v3964, %v3977
    %v3989 = vsub.f32 %v3965, %v3979
    %v3990 = vsub.f32 %v3966, %v3981
    %v3991 = vsub.f32 %v3967, %v3983
    %v3992 = vmul.f32 %v3984, 1.442695
    %v3993 = vpow.pop %v3992
    %v3994 = vmul.f32 %v3985, 1.442695
    %v3995 = vpow.pop %v3994
    %v3996 = vmul.f32 %v3986, 1.442695
    %v3997 = vpow.pop %v3996
    %v3998 = vmul.f32 %v3987, 1.442695
    %v3999 = vpow.pop %v3998
    %v4000 = vmul.f32 %v3988, 1.442695
    %v4001 = vpow.pop %v4000
    %v4002 = vmul.f32 %v3989, 1.442695
    %v4003 = vpow.pop %v4002
    %v4004 = vmul.f32 %v3990, 1.442695
    %v4005 = vpow.pop %v4004
    %v4006 = vmul.f32 %v3991, 1.442695
    %v4007 = vpow.pop %v4006
    %4008 = vadd.xlane.f32.xlu0 %v3993
    %v4009 = vpop.xlane.xlu0 %4008
    %4010 = vadd.xlane.f32.xlu0 %v3995
    %v4011 = vpop.xlane.xlu0 %4010
    %4012 = vadd.xlane.f32.xlu0 %v3997
    %v4013 = vpop.xlane.xlu0 %4012
    %4014 = vadd.xlane.f32.xlu0 %v3999
    %v4015 = vpop.xlane.xlu0 %4014
    %4016 = vadd.xlane.f32.xlu0 %v4001
    %v4017 = vpop.xlane.xlu0 %4016
    %4018 = vadd.xlane.f32.xlu0 %v4003
    %v4019 = vpop.xlane.xlu0 %4018
    %4020 = vadd.xlane.f32.xlu0 %v4005
    %v4021 = vpop.xlane.xlu0 %4020
    %4022 = vadd.xlane.f32.xlu0 %v4007
    %v4023 = vpop.xlane.xlu0 %4022
    %v4024 = vlog2.pop %v4009
    %v4025 = vmul.f32 %v4024, 0.6931472
    %v4026 = vlog2.pop %v4011
    %v4027 = vmul.f32 %v4026, 0.6931472
    %v4028 = vlog2.pop %v4013
    %v4029 = vmul.f32 %v4028, 0.6931472
    %v4030 = vlog2.pop %v4015
    %v4031 = vmul.f32 %v4030, 0.6931472
    %v4032 = vlog2.pop %v4017
    %v4033 = vmul.f32 %v4032, 0.6931472
    %v4034 = vlog2.pop %v4019
    %v4035 = vmul.f32 %v4034, 0.6931472
    %v4036 = vlog2.pop %v4021
    %v4037 = vmul.f32 %v4036, 0.6931472
    %v4038 = vlog2.pop %v4023
    %v4039 = vmul.f32 %v4038, 0.6931472
    %v4040 = vadd.f32 %v3969, %v4025
    %v4041 = vadd.f32 %v3971, %v4027
    %v4042 = vadd.f32 %v3973, %v4029
    %v4043 = vadd.f32 %v3975, %v4031
    %v4044 = vadd.f32 %v3977, %v4033
    %v4045 = vadd.f32 %v3979, %v4035
    %v4046 = vadd.f32 %v3981, %v4037
    %v4047 = vadd.f32 %v3983, %v4039
    %v4048 = vsub.f32 %v3950, %v4040
    %v4049 = vsub.f32 %v3951, %v4041
    %v4050 = vsub.f32 %v3952, %v4042
    %v4051 = vsub.f32 %v3953, %v4043
    %v4052 = vsub.f32 %v3954, %v4044
    %v4053 = vsub.f32 %v3955, %v4045
    %v4054 = vsub.f32 %v3956, %v4046
    %v4055 = vsub.f32 %v3957, %v4047
    %vm4056 = vcmp.ge.f32.partialorder %v3950, 0.0
    %vm4057 = vcmp.ge.f32.partialorder %v3951, 0.0
    %vm4058 = vcmp.ge.f32.partialorder %v3952, 0.0
    %vm4059 = vcmp.ge.f32.partialorder %v3953, 0.0
    %vm4060 = vcmp.ge.f32.partialorder %v3954, 0.0
    %vm4061 = vcmp.ge.f32.partialorder %v3955, 0.0
    %vm4062 = vcmp.ge.f32.partialorder %v3956, 0.0
    %vm4063 = vcmp.ge.f32.partialorder %v3957, 0.0
    %v4064 = vsub.f32 0.0, %v3950
    %v4065 = vsub.f32 0.0, %v3951
    %v4066 = vsub.f32 0.0, %v3952
    %v4067 = vsub.f32 0.0, %v3953
    %v4068 = vsub.f32 0.0, %v3954
    %v4069 = vsub.f32 0.0, %v3955
    %v4070 = vsub.f32 0.0, %v3956
    %v4071 = vsub.f32 0.0, %v3957
    %v4072 = vmul.f32 %v4064, 1.442695
    %v4073 = vpow.pop %v4072
    %v4074 = vmul.f32 %v4065, 1.442695
    %v4075 = vpow.pop %v4074
    %v4076 = vmul.f32 %v4066, 1.442695
    %v4077 = vpow.pop %v4076
    %v4078 = vmul.f32 %v4067, 1.442695
    %v4079 = vpow.pop %v4078
    %v4080 = vmul.f32 %v4068, 1.442695
    %v4081 = vpow.pop %v4080
    %v4082 = vmul.f32 %v4069, 1.442695
    %v4083 = vpow.pop %v4082
    %v4084 = vmul.f32 %v4070, 1.442695
    %v4085 = vpow.pop %v4084
    %v4086 = vmul.f32 %v4071, 1.442695
    %v4087 = vpow.pop %v4086
    %v4088 = vadd.f32 %v4073, 1.0
    %v4089 = vadd.f32 %v4075, 1.0
    %v4090 = vadd.f32 %v4077, 1.0
    %v4091 = vadd.f32 %v4079, 1.0
    %v4092 = vadd.f32 %v4081, 1.0
    %v4093 = vadd.f32 %v4083, 1.0
    %v4094 = vadd.f32 %v4085, 1.0
    %v4095 = vadd.f32 %v4087, 1.0
    %v4096 = vlog2.pop %v4088
    %v4097 = vmul.f32 %v4096, 0.6931472
    %v4098 = vlog2.pop %v4089
    %v4099 = vmul.f32 %v4098, 0.6931472
    %v4100 = vlog2.pop %v4090
    %v4101 = vmul.f32 %v4100, 0.6931472
    %v4102 = vlog2.pop %v4091
    %v4103 = vmul.f32 %v4102, 0.6931472
    %v4104 = vlog2.pop %v4092
    %v4105 = vmul.f32 %v4104, 0.6931472
    %v4106 = vlog2.pop %v4093
    %v4107 = vmul.f32 %v4106, 0.6931472
    %v4108 = vlog2.pop %v4094
    %v4109 = vmul.f32 %v4108, 0.6931472
    %v4110 = vlog2.pop %v4095
    %v4111 = vmul.f32 %v4110, 0.6931472
    %v4112 = vsub.f32 0.0, %v4097
    %v4113 = vsub.f32 0.0, %v4099
    %v4114 = vsub.f32 0.0, %v4101
    %v4115 = vsub.f32 0.0, %v4103
    %v4116 = vsub.f32 0.0, %v4105
    %v4117 = vsub.f32 0.0, %v4107
    %v4118 = vsub.f32 0.0, %v4109
    %v4119 = vsub.f32 0.0, %v4111
    %v4120 = vmul.f32 %v3950, 1.442695
    %v4121 = vpow.pop %v4120
    %v4122 = vmul.f32 %v3951, 1.442695
    %v4123 = vpow.pop %v4122
    %v4124 = vmul.f32 %v3952, 1.442695
    %v4125 = vpow.pop %v4124
    %v4126 = vmul.f32 %v3953, 1.442695
    %v4127 = vpow.pop %v4126
    %v4128 = vmul.f32 %v3954, 1.442695
    %v4129 = vpow.pop %v4128
    %v4130 = vmul.f32 %v3955, 1.442695
    %v4131 = vpow.pop %v4130
    %v4132 = vmul.f32 %v3956, 1.442695
    %v4133 = vpow.pop %v4132
    %v4134 = vmul.f32 %v3957, 1.442695
    %v4135 = vpow.pop %v4134
    %v4136 = vadd.f32 %v4121, 1.0
    %v4137 = vadd.f32 %v4123, 1.0
    %v4138 = vadd.f32 %v4125, 1.0
    %v4139 = vadd.f32 %v4127, 1.0
    %v4140 = vadd.f32 %v4129, 1.0
    %v4141 = vadd.f32 %v4131, 1.0
    %v4142 = vadd.f32 %v4133, 1.0
    %v4143 = vadd.f32 %v4135, 1.0
    %v4144 = vlog2.pop %v4136
    %v4145 = vmul.f32 %v4144, 0.6931472
    %v4146 = vlog2.pop %v4137
    %v4147 = vmul.f32 %v4146, 0.6931472
    %v4148 = vlog2.pop %v4138
    %v4149 = vmul.f32 %v4148, 0.6931472
    %v4150 = vlog2.pop %v4139
    %v4151 = vmul.f32 %v4150, 0.6931472
    %v4152 = vlog2.pop %v4140
    %v4153 = vmul.f32 %v4152, 0.6931472
    %v4154 = vlog2.pop %v4141
    %v4155 = vmul.f32 %v4154, 0.6931472
    %v4156 = vlog2.pop %v4142
    %v4157 = vmul.f32 %v4156, 0.6931472
    %v4158 = vlog2.pop %v4143
    %v4159 = vmul.f32 %v4158, 0.6931472
    %v4160 = vsub.f32 %v3950, %v4145
    %v4161 = vsub.f32 %v3951, %v4147
    %v4162 = vsub.f32 %v3952, %v4149
    %v4163 = vsub.f32 %v3953, %v4151
    %v4164 = vsub.f32 %v3954, %v4153
    %v4165 = vsub.f32 %v3955, %v4155
    %v4166 = vsub.f32 %v3956, %v4157
    %v4167 = vsub.f32 %v3957, %v4159
    %v4168 = vsel %vm4056, %v4112, %v4160
    %v4169 = vsel %vm4057, %v4113, %v4161
    %v4170 = vsel %vm4058, %v4114, %v4162
    %v4171 = vsel %vm4059, %v4115, %v4163
    %v4172 = vsel %vm4060, %v4116, %v4164
    %v4173 = vsel %vm4061, %v4117, %v4165
    %v4174 = vsel %vm4062, %v4118, %v4166
    %v4175 = vsel %vm4063, %v4119, %v4167
    %v4176 = vsel %vm3959, %v4048, %v4168
    %v4177 = vsel %vm3959, %v4049, %v4169
    %v4178 = vsel %vm3959, %v4050, %v4170
    %v4179 = vsel %vm3959, %v4051, %v4171
    %v4180 = vsel %vm3959, %v4052, %v4172
    %v4181 = vsel %vm3959, %v4053, %v4173
    %v4182 = vsel %vm3959, %v4054, %v4174
    %v4183 = vsel %vm3959, %v4055, %v4175
    %4184 = vst [vmem:[#allocation17] sm:$0xff] %v4176
    %4185 = vst [vmem:[#allocation17 + $0x8] sm:$0xff] %v4177
    %4186 = vst [vmem:[#allocation17 + $0x10] sm:$0xff] %v4178
    %4187 = vst [vmem:[#allocation17 + $0x18] sm:$0xff] %v4179
    %4188 = vst [vmem:[#allocation17 + $0x20] sm:$0xff] %v4180
    %4189 = vst [vmem:[#allocation17 + $0x28] sm:$0xff] %v4181
    %4190 = vst [vmem:[#allocation17 + $0x30] sm:$0xff] %v4182
    %4191 = vst [vmem:[#allocation17 + $0x38] sm:$0xff] %v4183
    // Predicated region
    $region90: #{tpu_custom_call.1} parent=1 // pred_check
      _
    $region91: #{tpu_custom_call.1} parent=1 // pred_check_branch
      %4193 = sbr.rel (0) target = $region93
    $region92: #{tpu_custom_call.1} parent=1 // pred_region
      %s4195 = ssub.s32 1024, 1024
      %4196 = vsyncadd [#allocation4], %s4195
      %s4197 = sshll.u32 [#allocation17], 4
      %s4198 = int_to_ptr.vmem [resolvable:$true] %s4197
      %4203 = dma.vmem_to_hbm [thread:$0]  %s4198, 1024, %s13, [#allocation4], 128, 128, 8
    $region93: #{tpu_custom_call.1} parent=1 // pred_fallthru
      _
    // Predicated region
    $region94: #{tpu_custom_call.1} parent=1 // pred_check
      _
    $region95: #{tpu_custom_call.1} parent=1 // pred_check_branch
      %4205 = sbr.rel (0) target = $region97
    $region96: #{tpu_custom_call.1} parent=1 // pred_region
      %4206 = dma.done [#allocation4], 1024
    $region97: #{tpu_custom_call.1} parent=1 // pred_fallthru
      _
    %4207 = vsyncpa [#allocation3], 1
    %4208 = vsyncpa [#allocation6], 1
    %4209 = vsyncpa [#allocation9], 1
    %4210 = vsyncpa [#allocation12], 1
    %4211 = vsyncpa [#allocation15], 1
    %4212 = vsyncpa [#allocation4], 1

</llo_original>
